<compile_context>
chip_gen: v5e
topology: v5e:2x2
jax: 0.10.0
libtpu: 0.0.40
codegen_flags: <defaults>
</compile_context>

<pallas_src>
import functools

import numpy as np
import jax
import jax.numpy as jnp
from jax import lax
from jax.experimental import pallas as pl
from jax.experimental.pallas import tpu as pltpu

EPS = 1e-5      # nn.GroupNorm default eps
SLOPE = 0.2     # LeakyReLU negative slope


# ---------------------------------------------------------------------------
# Pallas kernels
# ---------------------------------------------------------------------------
def _transpose_nchw(acc, C):
    """(P, C) f32 -> (C, P).  The channel (lane) dim is zero-padded to a
    multiple of 128 first so the Mosaic 2-D transpose only ever sees a natively
    tiled shape; the pad is sliced off afterwards (static slice)."""
    P = acc.shape[0]
    Cp = -(-C // 128) * 128
    if Cp != C:
        acc = jnp.concatenate([acc, jnp.zeros((P, Cp - C), acc.dtype)], axis=1)
    accT = acc.T                                            # (Cp, P)
    if Cp != C:
        accT = accT[:C, :]
    return accT                                             # (C, P)


def _conv_stats_kernel(x_ref, w_ref, b_ref, y_ref, st_ref, *, Th, Wu, C):
    """Pass 1 (one row tile): 3x3 conv + bias as nine accumulated MXU dots over
    shifted windows (bf16 inputs, f32 accumulation).  Emits
      * the biased conv output transposed to NCHW-flat (C, Th*Wu)  [lane-dense]
      * per-tile GroupNorm partial sums (sum, sum of squares) per channel."""
    acc = jnp.zeros((Th * Wu, C), jnp.float32)
    for k in range(9):
        dy, dx = divmod(k, 3)
        win = x_ref[0, 0, dy:dy + Th, dx:dx + Wu, :].reshape(Th * Wu, C)  # bf16
        acc = acc + jnp.dot(win, w_ref[k], preferred_element_type=jnp.float32)
    acc = acc + b_ref[...]                                  # (Th*Wu, C) f32

    s1 = jnp.sum(acc, axis=0, keepdims=True)                # (1, C)
    s2 = jnp.sum(acc * acc, axis=0, keepdims=True)          # (1, C)
    st_ref[0, 0] = jnp.concatenate([s1, s2], axis=0)        # (2, C)

    # XLU transpose while the MXU is busy -> output already in NCHW layout.
    y_ref[0] = _transpose_nchw(acc, C)                      # (C, Th*Wu)


def _norm_kernel(y_ref, mr_ref, o_ref):
    """Pass 2 (pointwise, HBM-bandwidth bound): (x - mean) * rstd followed by
    LeakyReLU(0.2).  Per-sample mean/rstd are scalars in a flat SMEM array; the
    input buffer is aliased onto the output (in-place normalize)."""
    n = pl.program_id(0)
    mean = mr_ref[2 * n]
    rstd = mr_ref[2 * n + 1]
    z = (y_ref[0] - mean) * rstd
    o_ref[0] = jnp.where(z >= 0.0, z, SLOPE * z)


# ---------------------------------------------------------------------------
# Tiling / VMEM budgeting helpers (all static, trace-time)
# ---------------------------------------------------------------------------
def _vmem_caps():
    """(per-call residency budget, requested scoped-VMEM limit) per chip gen."""
    try:
        cap = int(pltpu.get_tpu_info().vmem_capacity_bytes)
    except Exception:                      # conservative fallback (v7x-sized)
        cap = 64 << 20
    budget = min(int(cap * 0.40), 40 << 20)      # ~25 MiB on v7x, 40 MiB on v5e/v6e
    limit = min(int(cap * 0.75), 100 << 20)      # explicit scoped-VMEM request
    return budget, limit


def _row_tiles(Hu, Wu):
    """Row tiles Th (descending) that keep every BlockSpec block dim either
    8/128-aligned or equal to the full array dim."""
    out = []
    for th in range(Hu, 0, -1):
        if Hu % th:
            continue
        if th != Hu and (th % 8 != 0 or (th * Wu) % 128 != 0):
            continue
        out.append(th)
    return out


def _choose_row_tile(N, Hu, Wu, C, budget_bytes, *, pointwise=False):
    """Largest row tile whose total per-step VMEM residency (double-buffered
    blocks + bf16 weights + accumulator / transpose temporaries) fits the
    budget, preferring a grid of >= 8 steps (pipeline depth, v7x megacore)."""
    def residency(th):
        tile = th * Wu * C * 4                              # one f32 tile
        if pointwise:
            return 2 * tile + 2 * tile + tile               # in + out + temps
        slab = 2 * (th + 2) * (Wu + 2) * C * 2              # bf16 slab, double-buf
        wgt = 2 * 9 * C * C * 2                             # bf16 weights (x2 safety)
        return slab + wgt + 2 * tile + 3 * tile             # out blocks + acc/transpose

    cands = _row_tiles(Hu, Wu)
    fitting = [th for th in cands if residency(th) <= budget_bytes]
    if not fitting:
        return cands[-1]            # smallest legal tile; rely on the vmem limit
    for min_steps in (8, 2, 1):
        ok = [th for th in fitting if N * (Hu // th) >= min_steps]
        if ok:
            return max(ok)
    return max(fitting)


# ---------------------------------------------------------------------------
# Wrapper
# ---------------------------------------------------------------------------
def upsampling_block(x_nchw, w_hwio, b, *, row_tile=None):
    """UpSamplingBlock.forward.
    x: (N, 4*planes, H, W) f32, w: (3, 3, planes, planes) HWIO, b: (planes,).
    Returns (N, planes, 2H, 2W) f32."""
    N, C4, H, W = x_nchw.shape
    assert C4 % 4 == 0
    C = C4 // 4
    assert w_hwio.shape == (3, 3, C, C) and b.shape == (C,)
    Hu, Wu = 2 * H, 2 * W

    budget, vmem_limit = _vmem_caps()
    Th = row_tile if row_tile is not None else _choose_row_tile(N, Hu, Wu, C, budget)
    assert Hu % Th == 0
    n_tiles = Hu // Th

    # --- 1. pixel rearrangement (== torch.index_select with ups_index):
    #        static 2x2 depth-to-space as reshape/transpose, NCHW -> NHWC,
    #        cast to bf16 (native MXU input dtype, half the HBM traffic).
    #        out[n, 2z+i, 2c+j, p] = x[n, 4p + 2i + j, z, c]
    xu = (x_nchw.reshape(N, C, 2, 2, H, W)
          .transpose(0, 4, 2, 5, 3, 1)
          .reshape(N, Hu, Wu, C)).astype(jnp.bfloat16)

    # --- 2. disjoint row-tile slabs with a 1-row/1-col zero halo (XLA fuses the
    #        shuffle + pad + slab copy into one producer).  Read exactly once
    #        (pass 1 only), stored in bf16, duplication factor (1 + 2/Th).
    # TODO(synk): replace the stacked halo slabs by in-kernel overlapping-window
    # DMA (memory_space=pl.ANY + pltpu.make_async_copy) to drop the duplicated
    # bf16 write entirely.
    xp = jnp.pad(xu, ((0, 0), (1, 1), (1, 1), (0, 0)))
    slabs = jnp.stack([xp[:, t * Th:t * Th + Th + 2] for t in range(n_tiles)],
                      axis=1)                    # (N, n_tiles, Th+2, Wu+2, C) bf16

    w9 = w_hwio.reshape(9, C, C).astype(jnp.bfloat16)       # [dy*3+dx, Cin, Cout]
    b2d = b.reshape(1, C).astype(jnp.float32)

    slab_spec = pl.BlockSpec((1, 1, Th + 2, Wu + 2, C),
                             lambda n, t: (n, t, 0, 0, 0))
    w_spec = pl.BlockSpec((9, C, C), lambda n, t: (0, 0, 0))
    b_spec = pl.BlockSpec((1, C), lambda n, t: (0, 0))
    y_spec = pl.BlockSpec((1, C, Th * Wu), lambda n, t: (n, 0, t))
    st_spec = pl.BlockSpec((1, 1, 2, C), lambda n, t: (n, t, 0, 0))
    cparams = pltpu.CompilerParams(
        dimension_semantics=("parallel", "parallel"),
        vmem_limit_bytes=vmem_limit)

    # --- 3. pass 1: conv + bias (single evaluation), NCHW-flat f32 output plus
    #        per-tile GroupNorm partial statistics.
    y1, stats = pl.pallas_call(
        functools.partial(_conv_stats_kernel, Th=Th, Wu=Wu, C=C),
        out_shape=(jax.ShapeDtypeStruct((N, C, Hu * Wu), jnp.float32),
                   jax.ShapeDtypeStruct((N, n_tiles, 2, C), jnp.float32)),
        grid=(N, n_tiles),
        in_specs=[slab_spec, w_spec, b_spec],
        out_specs=(y_spec, st_spec),
        compiler_params=cparams,
    )(slabs, w9, b2d)

    # --- 4. per-sample GroupNorm(1 group, no affine) statistics (tiny XLA
    #        reduction over the per-tile partial sums).
    # TODO(synk): E[x^2]-E[x]^2 in f32 can cancel if |mean| >> std; a centered
    # second stats pass would be more robust but costs an extra read of y1.
    cnt = float(Hu * Wu * C)
    s1 = jnp.sum(stats[:, :, 0, :], axis=(1, 2))            # (N,)
    s2 = jnp.sum(stats[:, :, 1, :], axis=(1, 2))            # (N,)
    mean = s1 / cnt
    var = s2 / cnt - mean * mean                            # biased, as nn.GroupNorm
    rstd = lax.rsqrt(var + EPS)
    mr = jnp.stack([mean, rstd], axis=-1).reshape(-1).astype(jnp.float32)  # (2N,)

    # --- 5. pass 2: pointwise normalize + LeakyReLU, in place on y1 (aliased),
    #        already NCHW-flat and lane-dense.  Independent (larger) row tile.
    Th2 = (row_tile if row_tile is not None
           else _choose_row_tile(N, Hu, Wu, C, budget, pointwise=True))
    assert Hu % Th2 == 0
    n_tiles2 = Hu // Th2
    y2_spec = pl.BlockSpec((1, C, Th2 * Wu), lambda n, t: (n, 0, t))
    out = pl.pallas_call(
        _norm_kernel,
        out_shape=jax.ShapeDtypeStruct((N, C, Hu * Wu), jnp.float32),
        grid=(N, n_tiles2),
        in_specs=[y2_spec,
                  pl.BlockSpec(memory_space=pltpu.MemorySpace.SMEM)],
        out_specs=y2_spec,
        input_output_aliases={0: 0},
        compiler_params=cparams,
    )(y1, mr)

    return out.reshape(N, C, Hu, Wu)        # free metadata reshape -> NCHW


# ---------------------------------------------------------------------------
# Exact ports of the index calculation helpers (host-side, numpy) -- used only
# by the reference check to prove the static depth-to-space == index_select.
# ---------------------------------------------------------------------------
def pixel_index_downsampling(length, width, lds, wds):
    length, width = length // lds, width // wds
    ds_indices = np.zeros((lds * wds, width * length), dtype=np.int64)
    for x in range(lds):
        for y in range(wds):
            k = x * width * wds + y
            for z in range(length):
                i, j = z * width, x * wds + y
                st = k + z * width * wds * lds
                ds_indices[j, i:i + width] = np.arange(st, st + width * wds, wds)
    return ds_indices.reshape(-1)


def pixel_index_upsampling(ds_index):
    return np.argsort(ds_index)              # inverse permutation (== torch sort)


# ---------------------------------------------------------------------------
if __name__ == "__main__":
    planes = 8
    N, H, W = 2, 16, 16      # input (2, 32, 16, 16) -> output (2, 8, 32, 32)

    key = jax.random.PRNGKey(0)
    kx, kw, kb = jax.random.split(key, 3)
    x = jax.random.normal(kx, (N, 4 * planes, H, W), jnp.float32)
    w = 0.1 * jax.random.normal(kw, (3, 3, planes, planes), jnp.float32)  # HWIO
    b = 0.1 * jax.random.normal(kb, (planes,), jnp.float32)

    out = jax.jit(upsampling_block)(x, w, b)
    out = jax.block_until_ready(out)
    assert out.shape == (N, planes, 2 * H, 2 * W), out.shape
    assert bool(jnp.all(jnp.isfinite(out)))

    # Reference: literal module semantics (index_select upsampling + XLA conv
    # + GroupNorm(1 group, no affine) + LeakyReLU(0.2)), all in f32.
    ds_index = pixel_index_downsampling(2 * H, 2 * W, 2, 2)
    ups_index = jnp.asarray(pixel_index_upsampling(ds_index), dtype=jnp.int32)
    flat = x.reshape(N, planes, 4 * H * W)
    up = jnp.take(flat, ups_index, axis=2).reshape(N, planes, 2 * H, 2 * W)
    up_nhwc = jnp.transpose(up, (0, 2, 3, 1))
    conv = lax.conv_general_dilated(
        up_nhwc, w, (1, 1), "SAME",
        dimension_numbers=("NHWC", "HWIO", "NHWC"),
        precision=lax.Precision.HIGHEST) + b
    mean = jnp.mean(conv, axis=(1, 2, 3), keepdims=True)
    var = jnp.mean(jnp.square(conv - mean), axis=(1, 2, 3), keepdims=True)
    gn = (conv - mean) * lax.rsqrt(var + EPS)
    ref = jnp.where(gn >= 0, gn, SLOPE * gn)
    ref = jnp.transpose(ref, (0, 3, 1, 2))

    err = float(jnp.max(jnp.abs(out - ref)))
    assert err < 5e-2, err    # bf16 MXU inputs vs f32 XLA conv, f32 accumulation
    print("KERNEL_OK")
</pallas_src>

<mosaic_0001>
module attributes {stable_mosaic.version = 11 : i64} {
  func.func @_conv_stats_kernel(%arg0: i32, %arg1: i32, %arg2: memref<1x1x10x34x8xbf16, #tpu.memory_space<vmem>>, %arg3: memref<9x8x8xbf16, #tpu.memory_space<vmem>>, %arg4: memref<1x8xf32, #tpu.memory_space<vmem>>, %arg5: memref<1x8x256xf32, #tpu.memory_space<vmem>>, %arg6: memref<1x1x2x8xf32, #tpu.memory_space<vmem>>) attributes {dimension_semantics = [#tpu.dimension_semantics<parallel>, #tpu.dimension_semantics<parallel>], iteration_bounds = array<i64: 2, 4>, scalar_prefetch = 0 : i64, scratch_operands = 0 : i64, tpu.core_type = #tpu.core_type<tc>, window_params = [{transform_indices = @transform_0, window_bounds = array<i64: 1, 1, 10, 34, 8>}, {pipeline_mode = #tpu.pipeline_mode<synchronous>, transform_indices = @transform_1, window_bounds = array<i64: 9, 8, 8>}, {pipeline_mode = #tpu.pipeline_mode<synchronous>, transform_indices = @transform_2, window_bounds = array<i64: 1, 8>}, {transform_indices = @transform_3, window_bounds = array<i64: 1, 8, 256>}, {transform_indices = @transform_4, window_bounds = array<i64: 1, 1, 2, 8>}]} {
    %cst = arith.constant 0.000000e+00 : f32
    %0 = vector.broadcast %cst : f32 to vector<256x8xf32>
    %c0 = arith.constant 0 : index
    %c0_0 = arith.constant 0 : index
    %c0_1 = arith.constant 0 : index
    %c0_2 = arith.constant 0 : index
    %c0_3 = arith.constant 0 : index
    %1 = vector.load %arg2[%c0, %c0_0, %c0_1, %c0_2, %c0_3] : memref<1x1x10x34x8xbf16, #tpu.memory_space<vmem>>, vector<1x1x8x32x8xbf16>
    %2 = vector.shape_cast %1 : vector<1x1x8x32x8xbf16> to vector<8x32x8xbf16>
    %3 = vector.shape_cast %2 : vector<8x32x8xbf16> to vector<256x8xbf16>
    %c0_4 = arith.constant 0 : index
    %c0_5 = arith.constant 0 : index
    %c0_6 = arith.constant 0 : index
    %4 = vector.load %arg3[%c0_4, %c0_5, %c0_6] : memref<9x8x8xbf16, #tpu.memory_space<vmem>>, vector<1x8x8xbf16>
    %5 = vector.shape_cast %4 : vector<1x8x8xbf16> to vector<8x8xbf16>
    %cst_7 = arith.constant dense<0.000000e+00> : vector<256x8xf32>
    %6 = tpu.matmul %3, %5, %cst_7 {dimension_numbers = #tpu.dot_dimension_numbers<[1], [0], [0], [1], [0, 0, 1, 1], [], []>} : vector<256x8xbf16>, vector<8x8xbf16>, vector<256x8xf32> -> vector<256x8xf32>
    %7 = arith.addf %0, %6 : vector<256x8xf32>
    %c0_8 = arith.constant 0 : index
    %c0_9 = arith.constant 0 : index
    %c0_10 = arith.constant 0 : index
    %c1 = arith.constant 1 : index
    %c0_11 = arith.constant 0 : index
    %8 = vector.load %arg2[%c0_8, %c0_9, %c0_10, %c1, %c0_11] : memref<1x1x10x34x8xbf16, #tpu.memory_space<vmem>>, vector<1x1x8x32x8xbf16>
    %9 = vector.shape_cast %8 : vector<1x1x8x32x8xbf16> to vector<8x32x8xbf16>
    %10 = vector.shape_cast %9 : vector<8x32x8xbf16> to vector<256x8xbf16>
    %c1_12 = arith.constant 1 : index
    %c0_13 = arith.constant 0 : index
    %c0_14 = arith.constant 0 : index
    %11 = vector.load %arg3[%c1_12, %c0_13, %c0_14] : memref<9x8x8xbf16, #tpu.memory_space<vmem>>, vector<1x8x8xbf16>
    %12 = vector.shape_cast %11 : vector<1x8x8xbf16> to vector<8x8xbf16>
    %cst_15 = arith.constant dense<0.000000e+00> : vector<256x8xf32>
    %13 = tpu.matmul %10, %12, %cst_15 {dimension_numbers = #tpu.dot_dimension_numbers<[1], [0], [0], [1], [0, 0, 1, 1], [], []>} : vector<256x8xbf16>, vector<8x8xbf16>, vector<256x8xf32> -> vector<256x8xf32>
    %14 = arith.addf %7, %13 : vector<256x8xf32>
    %c0_16 = arith.constant 0 : index
    %c0_17 = arith.constant 0 : index
    %c0_18 = arith.constant 0 : index
    %c2 = arith.constant 2 : index
    %c0_19 = arith.constant 0 : index
    %15 = vector.load %arg2[%c0_16, %c0_17, %c0_18, %c2, %c0_19] : memref<1x1x10x34x8xbf16, #tpu.memory_space<vmem>>, vector<1x1x8x32x8xbf16>
    %16 = vector.shape_cast %15 : vector<1x1x8x32x8xbf16> to vector<8x32x8xbf16>
    %17 = vector.shape_cast %16 : vector<8x32x8xbf16> to vector<256x8xbf16>
    %c2_20 = arith.constant 2 : index
    %c0_21 = arith.constant 0 : index
    %c0_22 = arith.constant 0 : index
    %18 = vector.load %arg3[%c2_20, %c0_21, %c0_22] : memref<9x8x8xbf16, #tpu.memory_space<vmem>>, vector<1x8x8xbf16>
    %19 = vector.shape_cast %18 : vector<1x8x8xbf16> to vector<8x8xbf16>
    %cst_23 = arith.constant dense<0.000000e+00> : vector<256x8xf32>
    %20 = tpu.matmul %17, %19, %cst_23 {dimension_numbers = #tpu.dot_dimension_numbers<[1], [0], [0], [1], [0, 0, 1, 1], [], []>} : vector<256x8xbf16>, vector<8x8xbf16>, vector<256x8xf32> -> vector<256x8xf32>
    %21 = arith.addf %14, %20 : vector<256x8xf32>
    %c0_24 = arith.constant 0 : index
    %c0_25 = arith.constant 0 : index
    %c1_26 = arith.constant 1 : index
    %c0_27 = arith.constant 0 : index
    %c0_28 = arith.constant 0 : index
    %22 = vector.load %arg2[%c0_24, %c0_25, %c1_26, %c0_27, %c0_28] : memref<1x1x10x34x8xbf16, #tpu.memory_space<vmem>>, vector<1x1x8x32x8xbf16>
    %23 = vector.shape_cast %22 : vector<1x1x8x32x8xbf16> to vector<8x32x8xbf16>
    %24 = vector.shape_cast %23 : vector<8x32x8xbf16> to vector<256x8xbf16>
    %c3 = arith.constant 3 : index
    %c0_29 = arith.constant 0 : index
    %c0_30 = arith.constant 0 : index
    %25 = vector.load %arg3[%c3, %c0_29, %c0_30] : memref<9x8x8xbf16, #tpu.memory_space<vmem>>, vector<1x8x8xbf16>
    %26 = vector.shape_cast %25 : vector<1x8x8xbf16> to vector<8x8xbf16>
    %cst_31 = arith.constant dense<0.000000e+00> : vector<256x8xf32>
    %27 = tpu.matmul %24, %26, %cst_31 {dimension_numbers = #tpu.dot_dimension_numbers<[1], [0], [0], [1], [0, 0, 1, 1], [], []>} : vector<256x8xbf16>, vector<8x8xbf16>, vector<256x8xf32> -> vector<256x8xf32>
    %28 = arith.addf %21, %27 : vector<256x8xf32>
    %c0_32 = arith.constant 0 : index
    %c0_33 = arith.constant 0 : index
    %c1_34 = arith.constant 1 : index
    %c1_35 = arith.constant 1 : index
    %c0_36 = arith.constant 0 : index
    %29 = vector.load %arg2[%c0_32, %c0_33, %c1_34, %c1_35, %c0_36] : memref<1x1x10x34x8xbf16, #tpu.memory_space<vmem>>, vector<1x1x8x32x8xbf16>
    %30 = vector.shape_cast %29 : vector<1x1x8x32x8xbf16> to vector<8x32x8xbf16>
    %31 = vector.shape_cast %30 : vector<8x32x8xbf16> to vector<256x8xbf16>
    %c4 = arith.constant 4 : index
    %c0_37 = arith.constant 0 : index
    %c0_38 = arith.constant 0 : index
    %32 = vector.load %arg3[%c4, %c0_37, %c0_38] : memref<9x8x8xbf16, #tpu.memory_space<vmem>>, vector<1x8x8xbf16>
    %33 = vector.shape_cast %32 : vector<1x8x8xbf16> to vector<8x8xbf16>
    %cst_39 = arith.constant dense<0.000000e+00> : vector<256x8xf32>
    %34 = tpu.matmul %31, %33, %cst_39 {dimension_numbers = #tpu.dot_dimension_numbers<[1], [0], [0], [1], [0, 0, 1, 1], [], []>} : vector<256x8xbf16>, vector<8x8xbf16>, vector<256x8xf32> -> vector<256x8xf32>
    %35 = arith.addf %28, %34 : vector<256x8xf32>
    %c0_40 = arith.constant 0 : index
    %c0_41 = arith.constant 0 : index
    %c1_42 = arith.constant 1 : index
    %c2_43 = arith.constant 2 : index
    %c0_44 = arith.constant 0 : index
    %36 = vector.load %arg2[%c0_40, %c0_41, %c1_42, %c2_43, %c0_44] : memref<1x1x10x34x8xbf16, #tpu.memory_space<vmem>>, vector<1x1x8x32x8xbf16>
    %37 = vector.shape_cast %36 : vector<1x1x8x32x8xbf16> to vector<8x32x8xbf16>
    %38 = vector.shape_cast %37 : vector<8x32x8xbf16> to vector<256x8xbf16>
    %c5 = arith.constant 5 : index
    %c0_45 = arith.constant 0 : index
    %c0_46 = arith.constant 0 : index
    %39 = vector.load %arg3[%c5, %c0_45, %c0_46] : memref<9x8x8xbf16, #tpu.memory_space<vmem>>, vector<1x8x8xbf16>
    %40 = vector.shape_cast %39 : vector<1x8x8xbf16> to vector<8x8xbf16>
    %cst_47 = arith.constant dense<0.000000e+00> : vector<256x8xf32>
    %41 = tpu.matmul %38, %40, %cst_47 {dimension_numbers = #tpu.dot_dimension_numbers<[1], [0], [0], [1], [0, 0, 1, 1], [], []>} : vector<256x8xbf16>, vector<8x8xbf16>, vector<256x8xf32> -> vector<256x8xf32>
    %42 = arith.addf %35, %41 : vector<256x8xf32>
    %c0_48 = arith.constant 0 : index
    %c0_49 = arith.constant 0 : index
    %c2_50 = arith.constant 2 : index
    %c0_51 = arith.constant 0 : index
    %c0_52 = arith.constant 0 : index
    %43 = vector.load %arg2[%c0_48, %c0_49, %c2_50, %c0_51, %c0_52] : memref<1x1x10x34x8xbf16, #tpu.memory_space<vmem>>, vector<1x1x8x32x8xbf16>
    %44 = vector.shape_cast %43 : vector<1x1x8x32x8xbf16> to vector<8x32x8xbf16>
    %45 = vector.shape_cast %44 : vector<8x32x8xbf16> to vector<256x8xbf16>
    %c6 = arith.constant 6 : index
    %c0_53 = arith.constant 0 : index
    %c0_54 = arith.constant 0 : index
    %46 = vector.load %arg3[%c6, %c0_53, %c0_54] : memref<9x8x8xbf16, #tpu.memory_space<vmem>>, vector<1x8x8xbf16>
    %47 = vector.shape_cast %46 : vector<1x8x8xbf16> to vector<8x8xbf16>
    %cst_55 = arith.constant dense<0.000000e+00> : vector<256x8xf32>
    %48 = tpu.matmul %45, %47, %cst_55 {dimension_numbers = #tpu.dot_dimension_numbers<[1], [0], [0], [1], [0, 0, 1, 1], [], []>} : vector<256x8xbf16>, vector<8x8xbf16>, vector<256x8xf32> -> vector<256x8xf32>
    %49 = arith.addf %42, %48 : vector<256x8xf32>
    %c0_56 = arith.constant 0 : index
    %c0_57 = arith.constant 0 : index
    %c2_58 = arith.constant 2 : index
    %c1_59 = arith.constant 1 : index
    %c0_60 = arith.constant 0 : index
    %50 = vector.load %arg2[%c0_56, %c0_57, %c2_58, %c1_59, %c0_60] : memref<1x1x10x34x8xbf16, #tpu.memory_space<vmem>>, vector<1x1x8x32x8xbf16>
    %51 = vector.shape_cast %50 : vector<1x1x8x32x8xbf16> to vector<8x32x8xbf16>
    %52 = vector.shape_cast %51 : vector<8x32x8xbf16> to vector<256x8xbf16>
    %c7 = arith.constant 7 : index
    %c0_61 = arith.constant 0 : index
    %c0_62 = arith.constant 0 : index
    %53 = vector.load %arg3[%c7, %c0_61, %c0_62] : memref<9x8x8xbf16, #tpu.memory_space<vmem>>, vector<1x8x8xbf16>
    %54 = vector.shape_cast %53 : vector<1x8x8xbf16> to vector<8x8xbf16>
    %cst_63 = arith.constant dense<0.000000e+00> : vector<256x8xf32>
    %55 = tpu.matmul %52, %54, %cst_63 {dimension_numbers = #tpu.dot_dimension_numbers<[1], [0], [0], [1], [0, 0, 1, 1], [], []>} : vector<256x8xbf16>, vector<8x8xbf16>, vector<256x8xf32> -> vector<256x8xf32>
    %56 = arith.addf %49, %55 : vector<256x8xf32>
    %c0_64 = arith.constant 0 : index
    %c0_65 = arith.constant 0 : index
    %c2_66 = arith.constant 2 : index
    %c2_67 = arith.constant 2 : index
    %c0_68 = arith.constant 0 : index
    %57 = vector.load %arg2[%c0_64, %c0_65, %c2_66, %c2_67, %c0_68] : memref<1x1x10x34x8xbf16, #tpu.memory_space<vmem>>, vector<1x1x8x32x8xbf16>
    %58 = vector.shape_cast %57 : vector<1x1x8x32x8xbf16> to vector<8x32x8xbf16>
    %59 = vector.shape_cast %58 : vector<8x32x8xbf16> to vector<256x8xbf16>
    %c8 = arith.constant 8 : index
    %c0_69 = arith.constant 0 : index
    %c0_70 = arith.constant 0 : index
    %60 = vector.load %arg3[%c8, %c0_69, %c0_70] : memref<9x8x8xbf16, #tpu.memory_space<vmem>>, vector<1x8x8xbf16>
    %61 = vector.shape_cast %60 : vector<1x8x8xbf16> to vector<8x8xbf16>
    %cst_71 = arith.constant dense<0.000000e+00> : vector<256x8xf32>
    %62 = tpu.matmul %59, %61, %cst_71 {dimension_numbers = #tpu.dot_dimension_numbers<[1], [0], [0], [1], [0, 0, 1, 1], [], []>} : vector<256x8xbf16>, vector<8x8xbf16>, vector<256x8xf32> -> vector<256x8xf32>
    %63 = arith.addf %56, %62 : vector<256x8xf32>
    %c0_72 = arith.constant 0 : index
    %c0_73 = arith.constant 0 : index
    %64 = vector.load %arg4[%c0_72, %c0_73] : memref<1x8xf32, #tpu.memory_space<vmem>>, vector<1x8xf32>
    %65 = vector.broadcast %64 : vector<1x8xf32> to vector<256x8xf32>
    %66 = arith.addf %63, %65 : vector<256x8xf32>
    %cst_74 = arith.constant dense<0.000000e+00> : vector<8xf32>
    %67 = vector.multi_reduction <add>, %66, %cst_74 [0] : vector<256x8xf32> to vector<8xf32>
    %68 = vector.shape_cast %67 : vector<8xf32> to vector<1x8xf32>
    %69 = arith.mulf %66, %66 : vector<256x8xf32>
    %cst_75 = arith.constant dense<0.000000e+00> : vector<8xf32>
    %70 = vector.multi_reduction <add>, %69, %cst_75 [0] : vector<256x8xf32> to vector<8xf32>
    %71 = vector.shape_cast %70 : vector<8xf32> to vector<1x8xf32>
    %72 = tpu.concatenate %68, %71 in 0 : vector<1x8xf32>, vector<1x8xf32> -> vector<2x8xf32>
    %c0_76 = arith.constant 0 : index
    %c0_77 = arith.constant 0 : index
    %c0_78 = arith.constant 0 : index
    %c0_79 = arith.constant 0 : index
    %73 = vector.load %arg6[%c0_76, %c0_77, %c0_78, %c0_79] : memref<1x1x2x8xf32, #tpu.memory_space<vmem>>, vector<1x1x2x8xf32>
    %74 = vector.shape_cast %73 : vector<1x1x2x8xf32> to vector<2x8xf32>
    %75 = vector.shape_cast %72 : vector<2x8xf32> to vector<1x1x2x8xf32>
    tpu.vector_store %arg6[%c0_76, %c0_77, %c0_78, %c0_79], %75 {strides = array<i32>} : memref<1x1x2x8xf32, #tpu.memory_space<vmem>>, vector<1x1x2x8xf32>,
    %cst_80 = arith.constant 0.000000e+00 : f32
    %76 = vector.broadcast %cst_80 : f32 to vector<256x120xf32>
    %77 = tpu.concatenate %66, %76 in 1 : vector<256x8xf32>, vector<256x120xf32> -> vector<256x128xf32>
    %78 = tpu.transpose %77, [1, 0] : vector<256x128xf32> -> vector<128x256xf32>
    %79 = vector.extract_strided_slice %78 {offsets = [0, 0], sizes = [8, 256], strides = [1, 1]} : vector<128x256xf32> to vector<8x256xf32>
    %c0_81 = arith.constant 0 : index
    %c0_82 = arith.constant 0 : index
    %c0_83 = arith.constant 0 : index
    %80 = vector.load %arg5[%c0_81, %c0_82, %c0_83] : memref<1x8x256xf32, #tpu.memory_space<vmem>>, vector<1x8x256xf32>
    %81 = vector.shape_cast %80 : vector<1x8x256xf32> to vector<8x256xf32>
    %82 = vector.shape_cast %79 : vector<8x256xf32> to vector<1x8x256xf32>
    tpu.vector_store %arg5[%c0_81, %c0_82, %c0_83], %82 {strides = array<i32>} : memref<1x8x256xf32, #tpu.memory_space<vmem>>, vector<1x8x256xf32>,
    return
  }
  func.func @transform_0(%arg0: i32, %arg1: i32) -> (i32, i32, i32, i32, i32) {
    %c0_i32 = arith.constant 0 : i32
    %c0_i32_0 = arith.constant 0 : i32
    %c0_i32_1 = arith.constant 0 : i32
    %c0_i32_2 = arith.constant 0 : i32
    return %arg0, %arg1, %c0_i32, %c0_i32_0, %c0_i32_1 : i32, i32, i32, i32, i32
  }
  func.func @transform_1(%arg0: i32, %arg1: i32) -> (i32, i32, i32) {
    %c0_i32 = arith.constant 0 : i32
    %c0_i32_0 = arith.constant 0 : i32
    %c0_i32_1 = arith.constant 0 : i32
    %c0_i32_2 = arith.constant 0 : i32
    return %c0_i32, %c0_i32_0, %c0_i32_1 : i32, i32, i32
  }
  func.func @transform_2(%arg0: i32, %arg1: i32) -> (i32, i32) {
    %c0_i32 = arith.constant 0 : i32
    %c0_i32_0 = arith.constant 0 : i32
    %c0_i32_1 = arith.constant 0 : i32
    return %c0_i32, %c0_i32_0 : i32, i32
  }
  func.func @transform_3(%arg0: i32, %arg1: i32) -> (i32, i32, i32) {
    %c0_i32 = arith.constant 0 : i32
    %c0_i32_0 = arith.constant 0 : i32
    return %arg0, %c0_i32, %arg1 : i32, i32, i32
  }
  func.func @transform_4(%arg0: i32, %arg1: i32) -> (i32, i32, i32, i32) {
    %c0_i32 = arith.constant 0 : i32
    %c0_i32_0 = arith.constant 0 : i32
    %c0_i32_1 = arith.constant 0 : i32
    return %arg0, %arg1, %c0_i32, %c0_i32_0 : i32, i32, i32, i32
  }
}

module attributes {stable_mosaic.version = 11 : i64} {
  func.func @_norm_kernel(%arg0: i32, %arg1: i32, %arg2: memref<1x8x256xf32, #tpu.memory_space<vmem>>, %arg3: memref<4xf32, #tpu.memory_space<smem>>, %arg4: memref<1x8x256xf32, #tpu.memory_space<vmem>>) attributes {dimension_semantics = [#tpu.dimension_semantics<parallel>, #tpu.dimension_semantics<parallel>], iteration_bounds = array<i64: 2, 4>, scalar_prefetch = 0 : i64, scratch_operands = 0 : i64, tpu.core_type = #tpu.core_type<tc>, window_params = [{transform_indices = @transform_0, window_bounds = array<i64: 1, 8, 256>}, {transform_indices = @transform_1, window_bounds = array<i64: 4>}, {transform_indices = @transform_2, window_bounds = array<i64: 1, 8, 256>}]} {
    %c2_i32 = arith.constant 2 : i32
    %0 = arith.muli %c2_i32, %arg0 : i32
    %1 = arith.index_cast %0 : i32 to index
    %2 = memref.load %arg3[%1] : memref<4xf32, #tpu.memory_space<smem>>
    %c2_i32_0 = arith.constant 2 : i32
    %3 = arith.muli %c2_i32_0, %arg0 : i32
    %c1_i32 = arith.constant 1 : i32
    %4 = arith.addi %3, %c1_i32 : i32
    %5 = arith.index_cast %4 : i32 to index
    %6 = memref.load %arg3[%5] : memref<4xf32, #tpu.memory_space<smem>>
    %c0 = arith.constant 0 : index
    %c0_1 = arith.constant 0 : index
    %c0_2 = arith.constant 0 : index
    %7 = vector.load %arg2[%c0, %c0_1, %c0_2] : memref<1x8x256xf32, #tpu.memory_space<vmem>>, vector<1x8x256xf32>
    %8 = vector.shape_cast %7 : vector<1x8x256xf32> to vector<8x256xf32>
    %9 = vector.broadcast %2 : f32 to vector<8x256xf32>
    %10 = arith.subf %8, %9 : vector<8x256xf32>
    %11 = vector.broadcast %6 : f32 to vector<8x256xf32>
    %12 = arith.mulf %10, %11 : vector<8x256xf32>
    %cst = arith.constant 0.000000e+00 : f32
    %13 = vector.broadcast %cst : f32 to vector<8x256xf32>
    %14 = arith.cmpf oge, %12, %13 : vector<8x256xf32>
    %cst_3 = arith.constant 2.000000e-01 : f32
    %15 = vector.broadcast %cst_3 : f32 to vector<8x256xf32>
    %16 = arith.mulf %15, %12 : vector<8x256xf32>
    %17 = arith.select %14, %12, %16 : vector<8x256xi1>, vector<8x256xf32>
    %c0_4 = arith.constant 0 : index
    %c0_5 = arith.constant 0 : index
    %c0_6 = arith.constant 0 : index
    %18 = vector.load %arg4[%c0_4, %c0_5, %c0_6] : memref<1x8x256xf32, #tpu.memory_space<vmem>>, vector<1x8x256xf32>
    %19 = vector.shape_cast %18 : vector<1x8x256xf32> to vector<8x256xf32>
    %20 = vector.shape_cast %17 : vector<8x256xf32> to vector<1x8x256xf32>
    tpu.vector_store %arg4[%c0_4, %c0_5, %c0_6], %20 {strides = array<i32>} : memref<1x8x256xf32, #tpu.memory_space<vmem>>, vector<1x8x256xf32>,
    return
  }
  func.func @transform_0(%arg0: i32, %arg1: i32) -> (i32, i32, i32) {
    %c0_i32 = arith.constant 0 : i32
    %c0_i32_0 = arith.constant 0 : i32
    return %arg0, %c0_i32, %arg1 : i32, i32, i32
  }
  func.func @transform_1(%arg0: i32, %arg1: i32) -> i32 {
    %c0_i32 = arith.constant 0 : i32
    %c0_i32_0 = arith.constant 0 : i32
    return %c0_i32 : i32
  }
  func.func @transform_2(%arg0: i32, %arg1: i32) -> (i32, i32, i32) {
    %c0_i32 = arith.constant 0 : i32
    %c0_i32_0 = arith.constant 0 : i32
    return %arg0, %c0_i32, %arg1 : i32, i32, i32
  }
}

</mosaic_0001>

<llo_original>
// kernel: upsampling_block.3
$region0: #{upsampling_block.3}
  #allocation0 [shape = 'u32[]', space=smem, size = 0x4, offset = 0x4, fixed_abs, tag = 'smem constant byte address 0x4 - core index']
  #allocation1 [shape = 'u32[72,128]{1,0:T(1,128)}', space=vmem, size = 0x9000, scoped, tag = 'internal scratch']
  %s0 = inlined_call_operand.vmem [shape: f32[2,8,1024], index: 0, kind: input, shape index: {}, may-alias: {0,2}]
  %s1 = inlined_call_operand.vmem [shape: f32[4], index: 1, kind: input, shape index: {}]
  %s2 = inlined_call_operand.vmem [shape: f32[2,8,1024], index: 2, kind: output, shape index: {}, may-alias: {0,2}]
  %s3 = sld [smem:[#allocation0]]
  $region45: #{upsampling_block.3} parent=0
    _
  %s5 = ssub.s32 1, %s3
  %s6 = scalar_select 0, %s5, %s3
  $region1: #{upsampling_block.3} parent=0
    #allocation2 [shape = 'u8[512]{0}', space=smem, size = 0x200, scoped, tag = 'input window, operand 1, single buffered']
    #allocation3 [shape = 's32[2]{0}', space=sflag, size = 0x8, scoped, tag = 'scoped memory for upsampling_block.3']
    %7 = vsyncpa [#allocation3], 0
    loop: start=0, step=1, limit=10
    $region2: #{upsampling_block.3} parent=1 // loop_pre_header
      _
    $region3: #{upsampling_block.3} parent=1 // loop_header
      %s9 = sphi 0, %s13
      %p10 = scmp.ge.s32.totalorder %s9, 10
      %s16 = sphi 0, %s28
      %s17 = sphi 0, %s24
      %s18 = sphi 0, %s16
      %s19 = sphi 0, %s17
      %s20 = sphi 0, %s18
      %s21 = sphi 0, %s19
      %s33 = sphi 0, %s35
      %s36 = sphi 0, %s33
      %s37 = sphi 0, %s36
      %s53 = sphi 0, %s37
      %s57 = sphi 0, %s57
      %s59 = sphi 0, %s57
      %s60 = sphi 0, %s59
      %s74 = sphi 0, %s60
      %s82 = sphi 0, %s84
      %s85 = sphi 0, %s82
      %s86 = sphi 0, %s85
      %s102 = sphi 0, %s86
    $region4: #{upsampling_block.3} parent=1 // loop_header_branch
      %12 = sbr.rel (%p10) target = $region8
    $region5: #{upsampling_block.3} parent=1 // loop_body
      %s14 = ssub.s32 %s9, 1
      %s15 = ssub.s32 %s9, 2
      %s22 = sadd.s32 1, %s17
      %p23 = scmp.ge.s32.totalorder %s22, 4
      %s24 = scalar_select %p23, 0, %s22
      %s25 = sadd.s32 1, %s16
      %s26 = scalar_select %p23, %s25, %s16
      %p27 = scmp.ge.s32.totalorder %s26, 2
      %s28 = scalar_select %p27, 0, %s26
      %s29 = ssub.s32 %s16, %s28
      %s30 = ssub.s32 %s17, %s24
      %s31 = sor.u32 %s29, %s30
      %p32 = scmp.eq.s32.totalorder %s31, 0
      %s34 = sadd.s32 %s33, 1
      %s35 = scalar_select %p32, %s33, %s34
      %p38 = pneg %p32
      %p39 = scmp.eq.s32.totalorder %s9, 7
      %p40 = por %p38, %p39
      %p41 = scmp.ne.s32.totalorder %s33, %s36
      %p42 = scmp.eq.s32.totalorder %s9, 0
      %p43 = por %p41, %p42
      %p44 = scmp.ne.s32.totalorder %s33, %s36
      %p45 = scmp.eq.s32.totalorder %s14, 7
      %p46 = por %p44, %p45
      %p47 = scmp.ne.s32.totalorder %s36, %s37
      %p48 = scmp.eq.s32.totalorder %s14, 0
      %p49 = por %p47, %p48
      %p50 = scmp.ne.s32.totalorder %s36, %s37
      %p51 = scmp.eq.s32.totalorder %s15, 7
      %p52 = por %p50, %p51
      %p54 = scmp.ne.s32.totalorder %s37, %s53
      %p55 = scmp.eq.s32.totalorder %s15, 0
      %p56 = por %p54, %p55
      %s58 = sadd.s32 %s57, 1
      %p61 = scmp.eq.s32.totalorder %s9, 7
      %p62 = scmp.ne.s32.totalorder %s57, %s59
      %p63 = scmp.eq.s32.totalorder %s9, 0
      %p64 = por %p62, %p63
      %p65 = scmp.ne.s32.totalorder %s57, %s59
      %p66 = scmp.eq.s32.totalorder %s14, 7
      %p67 = por %p65, %p66
      %p68 = scmp.ne.s32.totalorder %s59, %s60
      %p69 = scmp.eq.s32.totalorder %s14, 0
      %p70 = por %p68, %p69
      %p71 = scmp.ne.s32.totalorder %s59, %s60
      %p72 = scmp.eq.s32.totalorder %s15, 7
      %p73 = por %p71, %p72
      %p75 = scmp.ne.s32.totalorder %s60, %s74
      %p76 = scmp.eq.s32.totalorder %s15, 0
      %p77 = por %p75, %p76
      %s78 = ssub.s32 %s16, %s28
      %s79 = ssub.s32 %s17, %s24
      %s80 = sor.u32 %s78, %s79
      %p81 = scmp.eq.s32.totalorder %s80, 0
      %s83 = sadd.s32 %s82, 1
      %s84 = scalar_select %p81, %s82, %s83
      %p87 = pneg %p81
      %p88 = scmp.eq.s32.totalorder %s9, 7
      %p89 = por %p87, %p88
      %p90 = scmp.ne.s32.totalorder %s82, %s85
      %p91 = scmp.eq.s32.totalorder %s9, 0
      %p92 = por %p90, %p91
      %p93 = scmp.ne.s32.totalorder %s82, %s85
      %p94 = scmp.eq.s32.totalorder %s14, 7
      %p95 = por %p93, %p94
      %p96 = scmp.ne.s32.totalorder %s85, %s86
      %p97 = scmp.eq.s32.totalorder %s14, 0
      %p98 = por %p96, %p97
      %p99 = scmp.ne.s32.totalorder %s85, %s86
      %p100 = scmp.eq.s32.totalorder %s15, 7
      %p101 = por %p99, %p100
      %p103 = scmp.ne.s32.totalorder %s86, %s102
      %p104 = scmp.eq.s32.totalorder %s15, 0
      %p105 = por %p103, %p104
      %p106 = scmp.le.s32.totalorder 1, %s9
      %p107 = scmp.lt.s32.totalorder %s9, 9
      %p108 = pnand %p106, %p107
      %p109 = pneg %p108
      // Predicated region
      $region9: #{upsampling_block.3} parent=5 // pred_check
        _
      $region10: #{upsampling_block.3} parent=5 // pred_check_branch
        %111 = sbr.rel (%p108) target = $region12
      $region11: #{upsampling_block.3} parent=5 // pred_region
        %s112 = ssub.s32 %s9, 1
        // Predicated region
        $region13: #{upsampling_block.3} parent=11 // pred_check
          %p113 = pneg %p70
        $region14: #{upsampling_block.3} parent=11 // pred_check_branch
          %115 = sbr.rel (%p113) target = $region16
        $region15: #{upsampling_block.3} parent=11 // pred_region
          %117 = vsyncadd [#allocation3], 0
          %s119 = sshll.u32 %s1, 4
          %s120 = int_to_ptr.vmem [resolvable:$true] %s119
          %122 = dma.vmem_to_smem %s120, 16, [#allocation2], [#allocation3]
        $region16: #{upsampling_block.3} parent=11 // pred_fallthru
          _
      $region12: #{upsampling_block.3} parent=5 // pred_fallthru
        _
      %p123 = scmp.lt.s32.totalorder %s9, 8
      // Predicated region
      $region17: #{upsampling_block.3} parent=5 // pred_check
        %p124 = pneg %p123
      $region18: #{upsampling_block.3} parent=5 // pred_check_branch
        %126 = sbr.rel (%p124) target = $region20
      $region19: #{upsampling_block.3} parent=5 // pred_region
        // Predicated region
        $region21: #{upsampling_block.3} parent=19 // pred_check
          %p127 = pneg %p43
        $region22: #{upsampling_block.3} parent=19 // pred_check_branch
          %129 = sbr.rel (%p127) target = $region24
        $region23: #{upsampling_block.3} parent=19 // pred_region
          %s130 = smul.u32 2, %s17
          %p131 = scmp.lt.s32.totalorder %s16, 1
          %s132 = scalar_select %p131, %s16, 1
          %p133 = scmp.lt.s32.totalorder %s130, 7
          %s134 = scalar_select %p133, %s130, 7
          %s135 = smul.addr %s132, 8
          %s136 = sadd.s32 %s134, %s135
          %s137 = smul.addr %s136, 8
          %s138 = scalar_lea.vmem %s0, %s137
          %s139 = smul.u32 2, %s17
        $region24: #{upsampling_block.3} parent=19 // pred_fallthru
          _
      $region20: #{upsampling_block.3} parent=5 // pred_fallthru
        _
      %p140 = scmp.le.s32.totalorder 1, %s9
      %p141 = scmp.lt.s32.totalorder %s9, 9
      %p142 = pnand %p140, %p141
      %p143 = pneg %p142
      // Predicated region
      $region25: #{upsampling_block.3} parent=5 // pred_check
        _
      $region26: #{upsampling_block.3} parent=5 // pred_check_branch
        %145 = sbr.rel (%p142) target = $region28
      $region27: #{upsampling_block.3} parent=5 // pred_region
        %s146 = ssub.s32 %s9, 1
        // Predicated region
        $region29: #{upsampling_block.3} parent=27 // pred_check
          %p147 = pneg %p70
        $region30: #{upsampling_block.3} parent=27 // pred_check_branch
          %149 = sbr.rel (%p147) target = $region32
        $region31: #{upsampling_block.3} parent=27 // pred_region
          %151 = dma.done [#allocation3], 16
        $region32: #{upsampling_block.3} parent=27 // pred_fallthru
          _
        %152 = sfence
        %s153 = smul.u32 2, %s19
        %p154 = scmp.lt.s32.totalorder %s18, 1
        %s155 = scalar_select %p154, %s18, 1
        %p156 = scmp.lt.s32.totalorder %s153, 7
        %s157 = scalar_select %p156, %s153, 7
        %s158 = smul.addr %s155, 8
        %s159 = sadd.s32 %s157, %s158
        %s160 = smul.addr %s159, 8
        %s161 = scalar_lea.vmem %s0, %s160
        %p162 = pneg %p49
        %p163 = pneg %p46
        %p164 = pneg %p70
        %p165 = pneg %p67
        %p166 = pneg %p98
        %p167 = pneg %p95
        %s168 = smul.u32 2, %s19
        %p169 = scmp.lt.s32.totalorder %s18, 1
        %s170 = scalar_select %p169, %s18, 1
        %p171 = scmp.lt.s32.totalorder %s168, 7
        %s172 = scalar_select %p171, %s168, 7
        %s173 = smul.addr %s170, 8
        %s174 = sadd.s32 %s172, %s173
        %s175 = smul.addr %s174, 8
        %s176 = scalar_lea.vmem %s2, %s175
        %s177 = smul.u32 2, %s19
        %p178 = scmp.lt.s32.totalorder %s18, 1
        %s179 = scalar_select %p178, %s18, 1
        %p180 = scmp.lt.s32.totalorder %s177, 7
        %s181 = scalar_select %p180, %s177, 7
        %s182 = smul.addr %s179, 8
        %s183 = sadd.s32 %s181, %s182
        %s184 = smul.addr %s183, 8
        %s185 = scalar_lea.vmem %s0, %s184
        %s186 = smul.u32 2, %s19
        %s187 = smul.u32 2, %s19
        %p188 = scmp.lt.s32.totalorder %s18, 1
        %s189 = scalar_select %p188, %s18, 1
        %p190 = scmp.lt.s32.totalorder %s187, 7
        %s191 = scalar_select %p190, %s187, 7
        %s192 = smul.addr %s189, 8
        %s193 = sadd.s32 %s191, %s192
        %s194 = smul.addr %s193, 8
        %s195 = scalar_lea.vmem %s2, %s194
        %s196 = smul.u32 2, %s19
        %s197 = smul.u32 %s18, 2
        %s198 = sld [smem:[#allocation2 + %s197]]
        %s199 = sadd.s32 %s197, 1
        %s200 = sld [smem:[#allocation2 + %s199]]
        %v201 = vld [vmem:[%s185] sm:$0xff]
        %v202 = vld [vmem:[%s185 + $0x8] sm:$0xff]
        %v203 = vstv %s198
        %v204 = vsub.f32 %v201, %v203
        %v205 = vsub.f32 %v202, %v203
        %v206 = vstv %s200
        %v207 = vmul.f32 %v204, %v206
        %v208 = vmul.f32 %v205, %v206
        %vm209 = vcmp.ge.f32.partialorder %v207, 0.0
        %vm210 = vcmp.ge.f32.partialorder %v208, 0.0
        %v211 = vmul.f32 %v207, 0.2
        %v212 = vmul.f32 %v208, 0.2
        %v213 = vsel %vm209, %v207, %v211
        %v214 = vsel %vm210, %v208, %v212
        %215 = vst [vmem:[%s195] sm:$0xff] %v213
        %216 = vst [vmem:[%s195 + $0x8] sm:$0xff] %v214
        %s217 = smul.u32 2, %s19
        %p218 = scmp.lt.s32.totalorder %s18, 1
        %s219 = scalar_select %p218, %s18, 1
        %p220 = scmp.lt.s32.totalorder %s217, 7
        %s221 = scalar_select %p220, %s217, 7
        %s222 = smul.addr %s219, 8
        %s223 = sadd.s32 %s221, %s222
        %s224 = smul.addr %s223, 8
        %s225 = scalar_lea.vmem %s2, %s224
        // Predicated region
        $region33: #{upsampling_block.3} parent=27 // pred_check
          %p226 = pneg %p95
        $region34: #{upsampling_block.3} parent=27 // pred_check_branch
          %228 = sbr.rel (%p226) target = $region36
        $region35: #{upsampling_block.3} parent=27 // pred_region
          %s229 = smul.u32 2, %s19
        $region36: #{upsampling_block.3} parent=27 // pred_fallthru
          _
      $region28: #{upsampling_block.3} parent=5 // pred_fallthru
        _
      %p230 = scmp.le.s32.totalorder 2, %s9
      // Predicated region
      $region37: #{upsampling_block.3} parent=5 // pred_check
        %p231 = pneg %p230
      $region38: #{upsampling_block.3} parent=5 // pred_check_branch
        %233 = sbr.rel (%p231) target = $region40
      $region39: #{upsampling_block.3} parent=5 // pred_region
        %s234 = ssub.s32 %s9, 2
        // Predicated region
        $region41: #{upsampling_block.3} parent=39 // pred_check
          %p235 = pneg %p101
        $region42: #{upsampling_block.3} parent=39 // pred_check_branch
          %237 = sbr.rel (%p235) target = $region44
        $region43: #{upsampling_block.3} parent=39 // pred_region
          %s238 = smul.u32 2, %s21
          %p239 = scmp.lt.s32.totalorder %s20, 1
          %s240 = scalar_select %p239, %s20, 1
          %p241 = scmp.lt.s32.totalorder %s238, 7
          %s242 = scalar_select %p241, %s238, 7
          %s243 = smul.addr %s240, 8
          %s244 = sadd.s32 %s242, %s243
          %s245 = smul.addr %s244, 8
          %s246 = scalar_lea.vmem %s2, %s245
        $region44: #{upsampling_block.3} parent=39 // pred_fallthru
          _
      $region40: #{upsampling_block.3} parent=5 // pred_fallthru
        _
    $region6: #{upsampling_block.3} parent=1 // loop_footer
      %s13 = sadd.s32 1, %s9
    $region7: #{upsampling_block.3} parent=1 // loop_footer_branch
      %8 = sbr.rel target = $region3
    $region8: #{upsampling_block.3} parent=1 // loop_exit
      _
    %247 = vsyncpa [#allocation3], 1
    %s248 = scalar_lea.sflag [#allocation3], 1
    %249 = vsyncpa %s248, 1

// kernel: upsampling_block.2
$region0: #{upsampling_block.2}
  #allocation0 [shape = 'u32[]', space=smem, size = 0x4, offset = 0x4, fixed_abs, tag = 'smem constant byte address 0x4 - core index']
  #allocation1 [shape = 'u32[72,128]{1,0:T(1,128)}', space=vmem, size = 0x9000, scoped, tag = 'internal scratch']
  %s0 = inlined_call_operand.vmem [shape: bf16[2,4,10,34,8], index: 0, kind: input, shape index: {}]
  %s1 = inlined_call_operand.vmem [shape: bf16[9,8,8], index: 1, kind: input, shape index: {}]
  %s2 = inlined_call_operand.vmem [shape: f32[1,8], index: 2, kind: input, shape index: {}]
  %s3 = inlined_call_operand.vmem [shape: f32[2,8,1024], index: 3, kind: output, shape index: {0}]
  %s4 = inlined_call_operand.vmem [shape: f32[2,4,2,8], index: 4, kind: output, shape index: {1}]
  %5 = xla_tuple %s3, %s4
  %s6 = sld [smem:[#allocation0]]
  $region53: #{upsampling_block.2} parent=0
    _
  %s8 = ssub.s32 1, %s6
  %s9 = scalar_select 0, %s8, %s6
  loop: start=0, step=1, limit=10
  $region2: #{upsampling_block.2} parent=0 // loop_pre_header
    _
  $region3: #{upsampling_block.2} parent=0 // loop_header
    %s11 = sphi 0, %s15
    %p12 = scmp.ge.s32.totalorder %s11, 10
    %s18 = sphi 0, %s30
    %s19 = sphi 0, %s26
    %s20 = sphi 0, %s18
    %s21 = sphi 0, %s19
    %s22 = sphi 0, %s20
    %s23 = sphi 0, %s21
    %s35 = sphi 0, %s37
    %s38 = sphi 0, %s35
    %s39 = sphi 0, %s38
    %s55 = sphi 0, %s39
    %s59 = sphi 0, %s59
    %s61 = sphi 0, %s59
    %s62 = sphi 0, %s61
    %s76 = sphi 0, %s62
    %s80 = sphi 0, %s80
    %s82 = sphi 0, %s80
    %s83 = sphi 0, %s82
    %s97 = sphi 0, %s83
    %s105 = sphi 0, %s107
    %s108 = sphi 0, %s105
    %s109 = sphi 0, %s108
    %s125 = sphi 0, %s109
    %s133 = sphi 0, %s135
    %s136 = sphi 0, %s133
    %s137 = sphi 0, %s136
    %s153 = sphi 0, %s137
  $region4: #{upsampling_block.2} parent=0 // loop_header_branch
    %14 = sbr.rel (%p12) target = $region8
  $region5: #{upsampling_block.2} parent=0 // loop_body
    %s16 = ssub.s32 %s11, 1
    %s17 = ssub.s32 %s11, 2
    %s24 = sadd.s32 1, %s19
    %p25 = scmp.ge.s32.totalorder %s24, 4
    %s26 = scalar_select %p25, 0, %s24
    %s27 = sadd.s32 1, %s18
    %s28 = scalar_select %p25, %s27, %s18
    %p29 = scmp.ge.s32.totalorder %s28, 2
    %s30 = scalar_select %p29, 0, %s28
    %s31 = ssub.s32 %s18, %s30
    %s32 = ssub.s32 %s19, %s26
    %s33 = sor.u32 %s31, %s32
    %p34 = scmp.eq.s32.totalorder %s33, 0
    %s36 = sadd.s32 %s35, 1
    %s37 = scalar_select %p34, %s35, %s36
    %p40 = pneg %p34
    %p41 = scmp.eq.s32.totalorder %s11, 7
    %p42 = por %p40, %p41
    %p43 = scmp.ne.s32.totalorder %s35, %s38
    %p44 = scmp.eq.s32.totalorder %s11, 0
    %p45 = por %p43, %p44
    %p46 = scmp.ne.s32.totalorder %s35, %s38
    %p47 = scmp.eq.s32.totalorder %s16, 7
    %p48 = por %p46, %p47
    %p49 = scmp.ne.s32.totalorder %s38, %s39
    %p50 = scmp.eq.s32.totalorder %s16, 0
    %p51 = por %p49, %p50
    %p52 = scmp.ne.s32.totalorder %s38, %s39
    %p53 = scmp.eq.s32.totalorder %s17, 7
    %p54 = por %p52, %p53
    %p56 = scmp.ne.s32.totalorder %s39, %s55
    %p57 = scmp.eq.s32.totalorder %s17, 0
    %p58 = por %p56, %p57
    %s60 = sadd.s32 %s59, 1
    %p63 = scmp.eq.s32.totalorder %s11, 7
    %p64 = scmp.ne.s32.totalorder %s59, %s61
    %p65 = scmp.eq.s32.totalorder %s11, 0
    %p66 = por %p64, %p65
    %p67 = scmp.ne.s32.totalorder %s59, %s61
    %p68 = scmp.eq.s32.totalorder %s16, 7
    %p69 = por %p67, %p68
    %p70 = scmp.ne.s32.totalorder %s61, %s62
    %p71 = scmp.eq.s32.totalorder %s16, 0
    %p72 = por %p70, %p71
    %p73 = scmp.ne.s32.totalorder %s61, %s62
    %p74 = scmp.eq.s32.totalorder %s17, 7
    %p75 = por %p73, %p74
    %p77 = scmp.ne.s32.totalorder %s62, %s76
    %p78 = scmp.eq.s32.totalorder %s17, 0
    %p79 = por %p77, %p78
    %s81 = sadd.s32 %s80, 1
    %p84 = scmp.eq.s32.totalorder %s11, 7
    %p85 = scmp.ne.s32.totalorder %s80, %s82
    %p86 = scmp.eq.s32.totalorder %s11, 0
    %p87 = por %p85, %p86
    %p88 = scmp.ne.s32.totalorder %s80, %s82
    %p89 = scmp.eq.s32.totalorder %s16, 7
    %p90 = por %p88, %p89
    %p91 = scmp.ne.s32.totalorder %s82, %s83
    %p92 = scmp.eq.s32.totalorder %s16, 0
    %p93 = por %p91, %p92
    %p94 = scmp.ne.s32.totalorder %s82, %s83
    %p95 = scmp.eq.s32.totalorder %s17, 7
    %p96 = por %p94, %p95
    %p98 = scmp.ne.s32.totalorder %s83, %s97
    %p99 = scmp.eq.s32.totalorder %s17, 0
    %p100 = por %p98, %p99
    %s101 = ssub.s32 %s18, %s30
    %s102 = ssub.s32 %s19, %s26
    %s103 = sor.u32 %s101, %s102
    %p104 = scmp.eq.s32.totalorder %s103, 0
    %s106 = sadd.s32 %s105, 1
    %s107 = scalar_select %p104, %s105, %s106
    %p110 = pneg %p104
    %p111 = scmp.eq.s32.totalorder %s11, 7
    %p112 = por %p110, %p111
    %p113 = scmp.ne.s32.totalorder %s105, %s108
    %p114 = scmp.eq.s32.totalorder %s11, 0
    %p115 = por %p113, %p114
    %p116 = scmp.ne.s32.totalorder %s105, %s108
    %p117 = scmp.eq.s32.totalorder %s16, 7
    %p118 = por %p116, %p117
    %p119 = scmp.ne.s32.totalorder %s108, %s109
    %p120 = scmp.eq.s32.totalorder %s16, 0
    %p121 = por %p119, %p120
    %p122 = scmp.ne.s32.totalorder %s108, %s109
    %p123 = scmp.eq.s32.totalorder %s17, 7
    %p124 = por %p122, %p123
    %p126 = scmp.ne.s32.totalorder %s109, %s125
    %p127 = scmp.eq.s32.totalorder %s17, 0
    %p128 = por %p126, %p127
    %s129 = ssub.s32 %s18, %s30
    %s130 = ssub.s32 %s19, %s26
    %s131 = sor.u32 %s129, %s130
    %p132 = scmp.eq.s32.totalorder %s131, 0
    %s134 = sadd.s32 %s133, 1
    %s135 = scalar_select %p132, %s133, %s134
    %p138 = pneg %p132
    %p139 = scmp.eq.s32.totalorder %s11, 7
    %p140 = por %p138, %p139
    %p141 = scmp.ne.s32.totalorder %s133, %s136
    %p142 = scmp.eq.s32.totalorder %s11, 0
    %p143 = por %p141, %p142
    %p144 = scmp.ne.s32.totalorder %s133, %s136
    %p145 = scmp.eq.s32.totalorder %s16, 7
    %p146 = por %p144, %p145
    %p147 = scmp.ne.s32.totalorder %s136, %s137
    %p148 = scmp.eq.s32.totalorder %s16, 0
    %p149 = por %p147, %p148
    %p150 = scmp.ne.s32.totalorder %s136, %s137
    %p151 = scmp.eq.s32.totalorder %s17, 7
    %p152 = por %p150, %p151
    %p154 = scmp.ne.s32.totalorder %s137, %s153
    %p155 = scmp.eq.s32.totalorder %s17, 0
    %p156 = por %p154, %p155
    %p157 = scmp.le.s32.totalorder 1, %s11
    %p158 = scmp.lt.s32.totalorder %s11, 9
    %p159 = pnand %p157, %p158
    %p160 = pneg %p159
    // Predicated region
    $region9: #{upsampling_block.2} parent=5 // pred_check
      _
    $region10: #{upsampling_block.2} parent=5 // pred_check_branch
      %162 = sbr.rel (%p159) target = $region12
    $region11: #{upsampling_block.2} parent=5 // pred_region
      %s163 = ssub.s32 %s11, 1
      // Predicated region
      $region13: #{upsampling_block.2} parent=11 // pred_check
        %p164 = pneg %p72
      $region14: #{upsampling_block.2} parent=11 // pred_check_branch
        %166 = sbr.rel (%p164) target = $region16
      $region15: #{upsampling_block.2} parent=11 // pred_region
        _
      $region16: #{upsampling_block.2} parent=11 // pred_fallthru
        _
      // Predicated region
      $region17: #{upsampling_block.2} parent=11 // pred_check
        %p167 = pneg %p93
      $region18: #{upsampling_block.2} parent=11 // pred_check_branch
        %169 = sbr.rel (%p167) target = $region20
      $region19: #{upsampling_block.2} parent=11 // pred_region
        _
      $region20: #{upsampling_block.2} parent=11 // pred_fallthru
        _
    $region12: #{upsampling_block.2} parent=5 // pred_fallthru
      _
    %p170 = scmp.lt.s32.totalorder %s11, 8
    // Predicated region
    $region21: #{upsampling_block.2} parent=5 // pred_check
      %p171 = pneg %p170
    $region22: #{upsampling_block.2} parent=5 // pred_check_branch
      %173 = sbr.rel (%p171) target = $region24
    $region23: #{upsampling_block.2} parent=5 // pred_region
      // Predicated region
      $region25: #{upsampling_block.2} parent=23 // pred_check
        %p174 = pneg %p45
      $region26: #{upsampling_block.2} parent=23 // pred_check_branch
        %176 = sbr.rel (%p174) target = $region28
      $region27: #{upsampling_block.2} parent=23 // pred_region
        %p177 = scmp.lt.s32.totalorder %s18, 1
        %s178 = scalar_select %p177, %s18, 1
        %p179 = scmp.lt.s32.totalorder %s19, 3
        %s180 = scalar_select %p179, %s19, 3
        %s181 = smul.addr %s180, 50
        %s182 = smul.addr %s178, 200
        %s183 = sadd.s32 %s181, %s182
        %s184 = smul.addr %s183, 4
        %s185 = scalar_lea.vmem %s0, %s184
      $region28: #{upsampling_block.2} parent=23 // pred_fallthru
        _
    $region24: #{upsampling_block.2} parent=5 // pred_fallthru
      _
    %p186 = scmp.le.s32.totalorder 1, %s11
    %p187 = scmp.lt.s32.totalorder %s11, 9
    %p188 = pnand %p186, %p187
    %p189 = pneg %p188
    // Predicated region
    $region29: #{upsampling_block.2} parent=5 // pred_check
      _
    $region30: #{upsampling_block.2} parent=5 // pred_check_branch
      %191 = sbr.rel (%p188) target = $region32
    $region31: #{upsampling_block.2} parent=5 // pred_region
      %s192 = ssub.s32 %s11, 1
      %p193 = scmp.lt.s32.totalorder %s20, 1
      %s194 = scalar_select %p193, %s20, 1
      %p195 = scmp.lt.s32.totalorder %s21, 3
      %s196 = scalar_select %p195, %s21, 3
      %s197 = smul.addr %s196, 50
      %s198 = smul.addr %s194, 200
      %s199 = sadd.s32 %s197, %s198
      %s200 = smul.addr %s199, 4
      %s201 = scalar_lea.vmem %s0, %s200
      %p202 = pneg %p51
      %p203 = pneg %p48
      %p204 = pneg %p72
      %p205 = pneg %p69
      %p206 = pneg %p93
      %p207 = pneg %p90
      %p208 = pneg %p121
      %p209 = pneg %p118
      %s210 = smul.u32 2, %s21
      %p211 = scmp.lt.s32.totalorder %s20, 1
      %s212 = scalar_select %p211, %s20, 1
      %p213 = scmp.lt.s32.totalorder %s210, 7
      %s214 = scalar_select %p213, %s210, 7
      %s215 = smul.addr %s212, 8
      %s216 = sadd.s32 %s214, %s215
      %s217 = smul.addr %s216, 8
      %s218 = scalar_lea.vmem %s3, %s217
      %p219 = pneg %p149
      %p220 = pneg %p146
      %p221 = scmp.lt.s32.totalorder %s20, 1
      %s222 = scalar_select %p221, %s20, 1
      %p223 = scmp.lt.s32.totalorder %s21, 3
      %s224 = scalar_select %p223, %s21, 3
      %s225 = smul.addr %s222, 4
      %s226 = sadd.s32 %s224, %s225
      %s227 = smul.addr %s226, 2
      %s228 = scalar_lea.vmem %s4, %s227
      %p229 = scmp.lt.s32.totalorder %s20, 1
      %s230 = scalar_select %p229, %s20, 1
      %p231 = scmp.lt.s32.totalorder %s21, 3
      %s232 = scalar_select %p231, %s21, 3
      %s233 = smul.addr %s232, 50
      %s234 = smul.addr %s230, 200
      %s235 = sadd.s32 %s233, %s234
      %s236 = smul.addr %s235, 4
      %s237 = scalar_lea.vmem %s0, %s236
      %s238 = smul.u32 2, %s21
      %p239 = scmp.lt.s32.totalorder %s20, 1
      %s240 = scalar_select %p239, %s20, 1
      %p241 = scmp.lt.s32.totalorder %s238, 7
      %s242 = scalar_select %p241, %s238, 7
      %s243 = smul.addr %s240, 8
      %s244 = sadd.s32 %s242, %s243
      %s245 = smul.addr %s244, 8
      %s246 = scalar_lea.vmem %s3, %s245
      %s247 = smul.u32 2, %s21
      %p248 = scmp.lt.s32.totalorder %s20, 1
      %s249 = scalar_select %p248, %s20, 1
      %p250 = scmp.lt.s32.totalorder %s21, 3
      %s251 = scalar_select %p250, %s21, 3
      %s252 = smul.addr %s249, 4
      %s253 = sadd.s32 %s251, %s252
      %s254 = smul.addr %s253, 2
      %s255 = scalar_lea.vmem %s4, %s254
      %v257 = vld [vmem:[%s237] sm:$0xf]
      %v258 = vld [vmem:[%s237 + $0x4] sm:$0xf]
      %v259 = vld [vmem:[%s237 + $0x8] sm:$0xf]
      %v260 = vld [vmem:[%s237 + $0xc] sm:$0xf]
      %v261 = vld [vmem:[%s237 + $0x14] sm:$0xf]
      %v262 = vld [vmem:[%s237 + $0x18] sm:$0xf]
      %v263 = vld [vmem:[%s237 + $0x1c] sm:$0xf]
      %v264 = vld [vmem:[%s237 + $0x20] sm:$0xf]
      %v265 = vld [vmem:[%s237 + $0x28] sm:$0xf]
      %v266 = vld [vmem:[%s237 + $0x2c] sm:$0xf]
      %v267 = vld [vmem:[%s237 + $0x30] sm:$0xf]
      %v268 = vld [vmem:[%s237 + $0x34] sm:$0xf]
      %v269 = vld [vmem:[%s237 + $0x3c] sm:$0xf]
      %v270 = vld [vmem:[%s237 + $0x40] sm:$0xf]
      %v271 = vld [vmem:[%s237 + $0x44] sm:$0xf]
      %v272 = vld [vmem:[%s237 + $0x48] sm:$0xf]
      %v273 = vld [vmem:[%s237 + $0x50] sm:$0xf]
      %v274 = vld [vmem:[%s237 + $0x54] sm:$0xf]
      %v275 = vld [vmem:[%s237 + $0x58] sm:$0xf]
      %v276 = vld [vmem:[%s237 + $0x5c] sm:$0xf]
      %v277 = vld [vmem:[%s237 + $0x64] sm:$0xf]
      %v278 = vld [vmem:[%s237 + $0x68] sm:$0xf]
      %v279 = vld [vmem:[%s237 + $0x6c] sm:$0xf]
      %v280 = vld [vmem:[%s237 + $0x70] sm:$0xf]
      %v281 = vld [vmem:[%s237 + $0x78] sm:$0xf]
      %v282 = vld [vmem:[%s237 + $0x7c] sm:$0xf]
      %v283 = vld [vmem:[%s237 + $0x80] sm:$0xf]
      %v284 = vld [vmem:[%s237 + $0x84] sm:$0xf]
      %v285 = vld [vmem:[%s237 + $0x8c] sm:$0xf]
      %v286 = vld [vmem:[%s237 + $0x90] sm:$0xf]
      %v287 = vld [vmem:[%s237 + $0x94] sm:$0xf]
      %v288 = vld [vmem:[%s237 + $0x98] sm:$0xf]
      %v289 = vld [vmem:[%s1] sm:$0xf]
      %v290 = vld [vmem:[%s237 + $0x10] sm:$0x1]
      %v291 = vld [vmem:[%s237 + $0x24] sm:$0x1]
      %v292 = vld [vmem:[%s237 + $0x38] sm:$0x1]
      %v293 = vld [vmem:[%s237 + $0x4c] sm:$0x1]
      %v294 = vld [vmem:[%s237 + $0x60] sm:$0x1]
      %v295 = vld [vmem:[%s237 + $0x74] sm:$0x1]
      %v296 = vld [vmem:[%s237 + $0x88] sm:$0x1]
      %v297 = vld [vmem:[%s237 + $0x9c] sm:$0x1]
      %vm298 = vsmask.f32 3328
      %vm299 = vsmask.f32 7440
      %vm300 = vmor %vm298, %vm299
      %v302 = vshrl.u32 %v257, 16
      %v304 = vrot.slane %v302, 4
      %v305 = vshll.u32 %v257, 16
      %v307 = vrot.slane %v305, 5
      %v308 = vor.u32 %v304, %v307
      %v309 = vrot.slane %v308, 4
      %v311 = vshll.u32 %v258, 16
      %v313 = vrot.slane %v311, 5
      %v314 = vsel %vm300, %v309, %v313
      %v315 = vshrl.u32 %v258, 16
      %v317 = vrot.slane %v315, 4
      %v318 = vor.u32 %v317, %v313
      %v319 = vrot.slane %v318, 4
      %v321 = vshll.u32 %v259, 16
      %v323 = vrot.slane %v321, 5
      %v324 = vsel %vm300, %v319, %v323
      %v325 = vshrl.u32 %v259, 16
      %v327 = vrot.slane %v325, 4
      %v328 = vor.u32 %v327, %v323
      %v329 = vrot.slane %v328, 4
      %v331 = vshll.u32 %v260, 16
      %v333 = vrot.slane %v331, 5
      %v334 = vsel %vm300, %v329, %v333
      %v335 = vshrl.u32 %v260, 16
      %v337 = vrot.slane %v335, 4
      %v338 = vor.u32 %v337, %v333
      %v339 = vrot.slane %v338, 4
      %v341 = vshll.u32 %v290, 16
      %v343 = vrot.slane %v341, 5
      %v344 = vsel %vm300, %v339, %v343
      %v346 = vshrl.u32 %v261, 16
      %v348 = vrot.slane %v346, 4
      %v349 = vshll.u32 %v261, 16
      %v351 = vrot.slane %v349, 5
      %v352 = vor.u32 %v348, %v351
      %v353 = vrot.slane %v352, 4
      %v355 = vshll.u32 %v262, 16
      %v357 = vrot.slane %v355, 5
      %v358 = vsel %vm300, %v353, %v357
      %v359 = vshrl.u32 %v262, 16
      %v361 = vrot.slane %v359, 4
      %v362 = vor.u32 %v361, %v357
      %v363 = vrot.slane %v362, 4
      %v365 = vshll.u32 %v263, 16
      %v367 = vrot.slane %v365, 5
      %v368 = vsel %vm300, %v363, %v367
      %v369 = vshrl.u32 %v263, 16
      %v371 = vrot.slane %v369, 4
      %v372 = vor.u32 %v371, %v367
      %v373 = vrot.slane %v372, 4
      %v375 = vshll.u32 %v264, 16
      %v377 = vrot.slane %v375, 5
      %v378 = vsel %vm300, %v373, %v377
      %v379 = vshrl.u32 %v264, 16
      %v381 = vrot.slane %v379, 4
      %v382 = vor.u32 %v381, %v377
      %v383 = vrot.slane %v382, 4
      %v385 = vshll.u32 %v291, 16
      %v387 = vrot.slane %v385, 5
      %v388 = vsel %vm300, %v383, %v387
      %v390 = vshrl.u32 %v265, 16
      %v392 = vrot.slane %v390, 4
      %v393 = vshll.u32 %v265, 16
      %v395 = vrot.slane %v393, 5
      %v396 = vor.u32 %v392, %v395
      %v397 = vrot.slane %v396, 4
      %v399 = vshll.u32 %v266, 16
      %v401 = vrot.slane %v399, 5
      %v402 = vsel %vm300, %v397, %v401
      %v403 = vshrl.u32 %v266, 16
      %v405 = vrot.slane %v403, 4
      %v406 = vor.u32 %v405, %v401
      %v407 = vrot.slane %v406, 4
      %v409 = vshll.u32 %v267, 16
      %v411 = vrot.slane %v409, 5
      %v412 = vsel %vm300, %v407, %v411
      %v413 = vshrl.u32 %v267, 16
      %v415 = vrot.slane %v413, 4
      %v416 = vor.u32 %v415, %v411
      %v417 = vrot.slane %v416, 4
      %v419 = vshll.u32 %v268, 16
      %v421 = vrot.slane %v419, 5
      %v422 = vsel %vm300, %v417, %v421
      %v423 = vshrl.u32 %v268, 16
      %v425 = vrot.slane %v423, 4
      %v426 = vor.u32 %v425, %v421
      %v427 = vrot.slane %v426, 4
      %v429 = vshll.u32 %v292, 16
      %v431 = vrot.slane %v429, 5
      %v432 = vsel %vm300, %v427, %v431
      %v434 = vshrl.u32 %v269, 16
      %v436 = vrot.slane %v434, 4
      %v437 = vshll.u32 %v269, 16
      %v439 = vrot.slane %v437, 5
      %v440 = vor.u32 %v436, %v439
      %v441 = vrot.slane %v440, 4
      %v443 = vshll.u32 %v270, 16
      %v445 = vrot.slane %v443, 5
      %v446 = vsel %vm300, %v441, %v445
      %v447 = vshrl.u32 %v270, 16
      %v449 = vrot.slane %v447, 4
      %v450 = vor.u32 %v449, %v445
      %v451 = vrot.slane %v450, 4
      %v453 = vshll.u32 %v271, 16
      %v455 = vrot.slane %v453, 5
      %v456 = vsel %vm300, %v451, %v455
      %v457 = vshrl.u32 %v271, 16
      %v459 = vrot.slane %v457, 4
      %v460 = vor.u32 %v459, %v455
      %v461 = vrot.slane %v460, 4
      %v463 = vshll.u32 %v272, 16
      %v465 = vrot.slane %v463, 5
      %v466 = vsel %vm300, %v461, %v465
      %v467 = vshrl.u32 %v272, 16
      %v469 = vrot.slane %v467, 4
      %v470 = vor.u32 %v469, %v465
      %v471 = vrot.slane %v470, 4
      %v473 = vshll.u32 %v293, 16
      %v475 = vrot.slane %v473, 5
      %v476 = vsel %vm300, %v471, %v475
      %v478 = vshrl.u32 %v273, 16
      %v480 = vrot.slane %v478, 4
      %v481 = vshll.u32 %v273, 16
      %v483 = vrot.slane %v481, 5
      %v484 = vor.u32 %v480, %v483
      %v485 = vrot.slane %v484, 4
      %v487 = vshll.u32 %v274, 16
      %v489 = vrot.slane %v487, 5
      %v490 = vsel %vm300, %v485, %v489
      %v491 = vshrl.u32 %v274, 16
      %v493 = vrot.slane %v491, 4
      %v494 = vor.u32 %v493, %v489
      %v495 = vrot.slane %v494, 4
      %v497 = vshll.u32 %v275, 16
      %v499 = vrot.slane %v497, 5
      %v500 = vsel %vm300, %v495, %v499
      %v501 = vshrl.u32 %v275, 16
      %v503 = vrot.slane %v501, 4
      %v504 = vor.u32 %v503, %v499
      %v505 = vrot.slane %v504, 4
      %v507 = vshll.u32 %v276, 16
      %v509 = vrot.slane %v507, 5
      %v510 = vsel %vm300, %v505, %v509
      %v511 = vshrl.u32 %v276, 16
      %v513 = vrot.slane %v511, 4
      %v514 = vor.u32 %v513, %v509
      %v515 = vrot.slane %v514, 4
      %v517 = vshll.u32 %v294, 16
      %v519 = vrot.slane %v517, 5
      %v520 = vsel %vm300, %v515, %v519
      %v522 = vshrl.u32 %v277, 16
      %v524 = vrot.slane %v522, 4
      %v525 = vshll.u32 %v277, 16
      %v527 = vrot.slane %v525, 5
      %v528 = vor.u32 %v524, %v527
      %v529 = vrot.slane %v528, 4
      %v531 = vshll.u32 %v278, 16
      %v533 = vrot.slane %v531, 5
      %v534 = vsel %vm300, %v529, %v533
      %v535 = vshrl.u32 %v278, 16
      %v537 = vrot.slane %v535, 4
      %v538 = vor.u32 %v537, %v533
      %v539 = vrot.slane %v538, 4
      %v541 = vshll.u32 %v279, 16
      %v543 = vrot.slane %v541, 5
      %v544 = vsel %vm300, %v539, %v543
      %v545 = vshrl.u32 %v279, 16
      %v547 = vrot.slane %v545, 4
      %v548 = vor.u32 %v547, %v543
      %v549 = vrot.slane %v548, 4
      %v551 = vshll.u32 %v280, 16
      %v553 = vrot.slane %v551, 5
      %v554 = vsel %vm300, %v549, %v553
      %v555 = vshrl.u32 %v280, 16
      %v557 = vrot.slane %v555, 4
      %v558 = vor.u32 %v557, %v553
      %v559 = vrot.slane %v558, 4
      %v561 = vshll.u32 %v295, 16
      %v563 = vrot.slane %v561, 5
      %v564 = vsel %vm300, %v559, %v563
      %v566 = vshrl.u32 %v281, 16
      %v568 = vrot.slane %v566, 4
      %v569 = vshll.u32 %v281, 16
      %v571 = vrot.slane %v569, 5
      %v572 = vor.u32 %v568, %v571
      %v573 = vrot.slane %v572, 4
      %v575 = vshll.u32 %v282, 16
      %v577 = vrot.slane %v575, 5
      %v578 = vsel %vm300, %v573, %v577
      %v579 = vshrl.u32 %v282, 16
      %v581 = vrot.slane %v579, 4
      %v582 = vor.u32 %v581, %v577
      %v583 = vrot.slane %v582, 4
      %v585 = vshll.u32 %v283, 16
      %v587 = vrot.slane %v585, 5
      %v588 = vsel %vm300, %v583, %v587
      %v589 = vshrl.u32 %v283, 16
      %v591 = vrot.slane %v589, 4
      %v592 = vor.u32 %v591, %v587
      %v593 = vrot.slane %v592, 4
      %v595 = vshll.u32 %v284, 16
      %v597 = vrot.slane %v595, 5
      %v598 = vsel %vm300, %v593, %v597
      %v599 = vshrl.u32 %v284, 16
      %v601 = vrot.slane %v599, 4
      %v602 = vor.u32 %v601, %v597
      %v603 = vrot.slane %v602, 4
      %v605 = vshll.u32 %v296, 16
      %v607 = vrot.slane %v605, 5
      %v608 = vsel %vm300, %v603, %v607
      %v610 = vshrl.u32 %v285, 16
      %v612 = vrot.slane %v610, 4
      %v613 = vshll.u32 %v285, 16
      %v615 = vrot.slane %v613, 5
      %v616 = vor.u32 %v612, %v615
      %v617 = vrot.slane %v616, 4
      %v619 = vshll.u32 %v286, 16
      %v621 = vrot.slane %v619, 5
      %v622 = vsel %vm300, %v617, %v621
      %v623 = vshrl.u32 %v286, 16
      %v625 = vrot.slane %v623, 4
      %v626 = vor.u32 %v625, %v621
      %v627 = vrot.slane %v626, 4
      %v629 = vshll.u32 %v287, 16
      %v631 = vrot.slane %v629, 5
      %v632 = vsel %vm300, %v627, %v631
      %v633 = vshrl.u32 %v287, 16
      %v635 = vrot.slane %v633, 4
      %v636 = vor.u32 %v635, %v631
      %v637 = vrot.slane %v636, 4
      %v639 = vshll.u32 %v288, 16
      %v641 = vrot.slane %v639, 5
      %v642 = vsel %vm300, %v637, %v641
      %v643 = vshrl.u32 %v288, 16
      %v645 = vrot.slane %v643, 4
      %v646 = vor.u32 %v645, %v641
      %v647 = vrot.slane %v646, 4
      %v649 = vshll.u32 %v297, 16
      %v651 = vrot.slane %v649, 5
      %v652 = vsel %vm300, %v647, %v651
      %s653 = scalar_lea.vmem %s1, 4
      %v654 = vld [vmem:[%s653] sm:$0xf]
      %v655 = vunpack.c.l.b16 %v314
      %v656 = vunpack.c.l.b16 %v324
      %v657 = vunpack.c.l.b16 %v334
      %v658 = vunpack.c.l.b16 %v344
      %v659 = vunpack.c.l.b16 %v358
      %v660 = vunpack.c.l.b16 %v368
      %v661 = vunpack.c.l.b16 %v378
      %v662 = vunpack.c.l.b16 %v388
      %v663 = vunpack.c.l.b16 %v402
      %v664 = vunpack.c.l.b16 %v412
      %v665 = vunpack.c.l.b16 %v422
      %v666 = vunpack.c.l.b16 %v432
      %v667 = vunpack.c.l.b16 %v446
      %v668 = vunpack.c.l.b16 %v456
      %v669 = vunpack.c.l.b16 %v466
      %v670 = vunpack.c.l.b16 %v476
      %v671 = vunpack.c.l.b16 %v490
      %v672 = vunpack.c.l.b16 %v500
      %v673 = vunpack.c.l.b16 %v510
      %v674 = vunpack.c.l.b16 %v520
      %v675 = vunpack.c.l.b16 %v534
      %v676 = vunpack.c.l.b16 %v544
      %v677 = vunpack.c.l.b16 %v554
      %v678 = vunpack.c.l.b16 %v564
      %v679 = vunpack.c.l.b16 %v578
      %v680 = vunpack.c.l.b16 %v588
      %v681 = vunpack.c.l.b16 %v598
      %v682 = vunpack.c.l.b16 %v608
      %v683 = vunpack.c.l.b16 %v622
      %v684 = vunpack.c.l.b16 %v632
      %v685 = vunpack.c.l.b16 %v642
      %v686 = vunpack.c.l.b16 %v652
      %v687 = vpack.c.b16 %v656, %v655
      %v688 = vpack.c.b16 %v658, %v657
      %v689 = vpack.c.b16 %v660, %v659
      %v690 = vpack.c.b16 %v662, %v661
      %v691 = vpack.c.b16 %v664, %v663
      %v692 = vpack.c.b16 %v666, %v665
      %v693 = vpack.c.b16 %v668, %v667
      %v694 = vpack.c.b16 %v670, %v669
      %v695 = vpack.c.b16 %v672, %v671
      %v696 = vpack.c.b16 %v674, %v673
      %v697 = vpack.c.b16 %v676, %v675
      %v698 = vpack.c.b16 %v678, %v677
      %v699 = vpack.c.b16 %v680, %v679
      %v700 = vpack.c.b16 %v682, %v681
      %v701 = vpack.c.b16 %v684, %v683
      %v702 = vpack.c.b16 %v686, %v685
      %vm703 = vcmask 64512
      %v705 = vsel %vm703, %v687, 0
      %v708 = vsel %vm703, %v688, 0
      %v711 = vsel %vm703, %v689, 0
      %v714 = vsel %vm703, %v690, 0
      %v717 = vsel %vm703, %v691, 0
      %v720 = vsel %vm703, %v692, 0
      %v723 = vsel %vm703, %v693, 0
      %v726 = vsel %vm703, %v694, 0
      %v729 = vsel %vm703, %v695, 0
      %v732 = vsel %vm703, %v696, 0
      %v735 = vsel %vm703, %v697, 0
      %v738 = vsel %vm703, %v698, 0
      %v741 = vsel %vm703, %v699, 0
      %v744 = vsel %vm703, %v700, 0
      %v747 = vsel %vm703, %v701, 0
      %v750 = vsel %vm703, %v702, 0
      %vm752 = vcmask 1043456
      %v754 = vsel %vm752, %v654, 0
      %756 = vmatpush.bf16.msra.mxu0 0
      %757 = vmatpush.bf16.msra.mxu0 0
      %758 = vmatpush.bf16.msra.mxu0 0
      %759 = vmatpush.bf16.msra.mxu0 0
      %760 = vmatpush.bf16.msra.mxu0 0
      %761 = vmatpush.bf16.msra.mxu0 0
      %762 = vmatpush.bf16.msra.mxu0 0
      %763 = vmatpush.bf16.msra.mxu0 %v754
      %764 = vmatmul.bf16.gmra.mxu0 %v705
      %v765 = vpop.f32.mrf.mxu0
      %v766 = vadd.f32 0.0, %v765
      %v767 = vpop.f32.mrf.mxu0
      %v768 = vadd.f32 0.0, %v767
      %769 = vmatmul.bf16.gmra.mxu0 %v708
      %v770 = vpop.f32.mrf.mxu0
      %v771 = vadd.f32 0.0, %v770
      %v772 = vpop.f32.mrf.mxu0
      %v773 = vadd.f32 0.0, %v772
      %774 = vmatmul.bf16.gmra.mxu0 %v711
      %v775 = vpop.f32.mrf.mxu0
      %v776 = vadd.f32 0.0, %v775
      %v777 = vpop.f32.mrf.mxu0
      %v778 = vadd.f32 0.0, %v777
      %779 = vmatmul.bf16.gmra.mxu0 %v714
      %v780 = vpop.f32.mrf.mxu0
      %v781 = vadd.f32 0.0, %v780
      %v782 = vpop.f32.mrf.mxu0
      %v783 = vadd.f32 0.0, %v782
      %784 = vmatmul.bf16.gmra.mxu0 %v717
      %v785 = vpop.f32.mrf.mxu0
      %v786 = vadd.f32 0.0, %v785
      %v787 = vpop.f32.mrf.mxu0
      %v788 = vadd.f32 0.0, %v787
      %789 = vmatmul.bf16.gmra.mxu0 %v720
      %v790 = vpop.f32.mrf.mxu0
      %v791 = vadd.f32 0.0, %v790
      %v792 = vpop.f32.mrf.mxu0
      %v793 = vadd.f32 0.0, %v792
      %794 = vmatmul.bf16.gmra.mxu0 %v723
      %v795 = vpop.f32.mrf.mxu0
      %v796 = vadd.f32 0.0, %v795
      %v797 = vpop.f32.mrf.mxu0
      %v798 = vadd.f32 0.0, %v797
      %799 = vmatmul.bf16.gmra.mxu0 %v726
      %v800 = vpop.f32.mrf.mxu0
      %v801 = vadd.f32 0.0, %v800
      %v802 = vpop.f32.mrf.mxu0
      %v803 = vadd.f32 0.0, %v802
      %804 = vmatmul.bf16.gmra.mxu0 %v729
      %v805 = vpop.f32.mrf.mxu0
      %v806 = vadd.f32 0.0, %v805
      %v807 = vpop.f32.mrf.mxu0
      %v808 = vadd.f32 0.0, %v807
      %809 = vmatmul.bf16.gmra.mxu0 %v732
      %v810 = vpop.f32.mrf.mxu0
      %v811 = vadd.f32 0.0, %v810
      %v812 = vpop.f32.mrf.mxu0
      %v813 = vadd.f32 0.0, %v812
      %814 = vmatmul.bf16.gmra.mxu0 %v735
      %v815 = vpop.f32.mrf.mxu0
      %v816 = vadd.f32 0.0, %v815
      %v817 = vpop.f32.mrf.mxu0
      %v818 = vadd.f32 0.0, %v817
      %819 = vmatmul.bf16.gmra.mxu0 %v738
      %v820 = vpop.f32.mrf.mxu0
      %v821 = vadd.f32 0.0, %v820
      %v822 = vpop.f32.mrf.mxu0
      %v823 = vadd.f32 0.0, %v822
      %824 = vmatmul.bf16.gmra.mxu0 %v741
      %v825 = vpop.f32.mrf.mxu0
      %v826 = vadd.f32 0.0, %v825
      %v827 = vpop.f32.mrf.mxu0
      %v828 = vadd.f32 0.0, %v827
      %829 = vmatmul.bf16.gmra.mxu0 %v744
      %v830 = vpop.f32.mrf.mxu0
      %v831 = vadd.f32 0.0, %v830
      %v832 = vpop.f32.mrf.mxu0
      %v833 = vadd.f32 0.0, %v832
      %834 = vmatmul.bf16.gmra.mxu0 %v747
      %v835 = vpop.f32.mrf.mxu0
      %v836 = vadd.f32 0.0, %v835
      %v837 = vpop.f32.mrf.mxu0
      %v838 = vadd.f32 0.0, %v837
      %839 = vmatmul.bf16.gmra.mxu0 %v750
      %v840 = vpop.f32.mrf.mxu0
      %v841 = vadd.f32 0.0, %v840
      %v842 = vpop.f32.mrf.mxu0
      %v843 = vadd.f32 0.0, %v842
      %844 = vdwg.mxu0
      %v877 = vunpack.c.l.b16 %v257
      %v878 = vunpack.c.l.b16 %v258
      %v879 = vunpack.c.l.b16 %v259
      %v880 = vunpack.c.l.b16 %v260
      %v881 = vunpack.c.l.b16 %v261
      %v882 = vunpack.c.l.b16 %v262
      %v883 = vunpack.c.l.b16 %v263
      %v884 = vunpack.c.l.b16 %v264
      %v885 = vunpack.c.l.b16 %v265
      %v886 = vunpack.c.l.b16 %v266
      %v887 = vunpack.c.l.b16 %v267
      %v888 = vunpack.c.l.b16 %v268
      %v889 = vunpack.c.l.b16 %v269
      %v890 = vunpack.c.l.b16 %v270
      %v891 = vunpack.c.l.b16 %v271
      %v892 = vunpack.c.l.b16 %v272
      %v893 = vunpack.c.l.b16 %v273
      %v894 = vunpack.c.l.b16 %v274
      %v895 = vunpack.c.l.b16 %v275
      %v896 = vunpack.c.l.b16 %v276
      %v897 = vunpack.c.l.b16 %v277
      %v898 = vunpack.c.l.b16 %v278
      %v899 = vunpack.c.l.b16 %v279
      %v900 = vunpack.c.l.b16 %v280
      %v901 = vunpack.c.l.b16 %v281
      %v902 = vunpack.c.l.b16 %v282
      %v903 = vunpack.c.l.b16 %v283
      %v904 = vunpack.c.l.b16 %v284
      %v905 = vunpack.c.l.b16 %v285
      %v906 = vunpack.c.l.b16 %v286
      %v907 = vunpack.c.l.b16 %v287
      %v908 = vunpack.c.l.b16 %v288
      %v909 = vpack.c.b16 %v878, %v877
      %v910 = vpack.c.b16 %v880, %v879
      %v911 = vpack.c.b16 %v882, %v881
      %v912 = vpack.c.b16 %v884, %v883
      %v913 = vpack.c.b16 %v886, %v885
      %v914 = vpack.c.b16 %v888, %v887
      %v915 = vpack.c.b16 %v890, %v889
      %v916 = vpack.c.b16 %v892, %v891
      %v917 = vpack.c.b16 %v894, %v893
      %v918 = vpack.c.b16 %v896, %v895
      %v919 = vpack.c.b16 %v898, %v897
      %v920 = vpack.c.b16 %v900, %v899
      %v921 = vpack.c.b16 %v902, %v901
      %v922 = vpack.c.b16 %v904, %v903
      %v923 = vpack.c.b16 %v906, %v905
      %v924 = vpack.c.b16 %v908, %v907
      %v926 = vsel %vm703, %v909, 0
      %v929 = vsel %vm703, %v910, 0
      %v932 = vsel %vm703, %v911, 0
      %v935 = vsel %vm703, %v912, 0
      %v938 = vsel %vm703, %v913, 0
      %v941 = vsel %vm703, %v914, 0
      %v944 = vsel %vm703, %v915, 0
      %v947 = vsel %vm703, %v916, 0
      %v950 = vsel %vm703, %v917, 0
      %v953 = vsel %vm703, %v918, 0
      %v956 = vsel %vm703, %v919, 0
      %v959 = vsel %vm703, %v920, 0
      %v962 = vsel %vm703, %v921, 0
      %v965 = vsel %vm703, %v922, 0
      %v968 = vsel %vm703, %v923, 0
      %v971 = vsel %vm703, %v924, 0
      %v974 = vsel %vm752, %v289, 0
      %976 = vmatpush.bf16.msra.mxu0 0
      %977 = vmatpush.bf16.msra.mxu0 0
      %978 = vmatpush.bf16.msra.mxu0 0
      %979 = vmatpush.bf16.msra.mxu0 0
      %980 = vmatpush.bf16.msra.mxu0 0
      %981 = vmatpush.bf16.msra.mxu0 0
      %982 = vmatpush.bf16.msra.mxu0 0
      %983 = vmatpush.bf16.msra.mxu0 %v974
      %984 = vmatmul.bf16.gmra.mxu0 %v926
      %v985 = vpop.f32.mrf.mxu0
      %v986 = vadd.f32 %v766, %v985
      %v987 = vpop.f32.mrf.mxu0
      %v988 = vadd.f32 %v768, %v987
      %989 = vmatmul.bf16.gmra.mxu0 %v929
      %v990 = vpop.f32.mrf.mxu0
      %v991 = vadd.f32 %v771, %v990
      %v992 = vpop.f32.mrf.mxu0
      %v993 = vadd.f32 %v773, %v992
      %994 = vmatmul.bf16.gmra.mxu0 %v932
      %v995 = vpop.f32.mrf.mxu0
      %v996 = vadd.f32 %v776, %v995
      %v997 = vpop.f32.mrf.mxu0
      %v998 = vadd.f32 %v778, %v997
      %999 = vmatmul.bf16.gmra.mxu0 %v935
      %v1000 = vpop.f32.mrf.mxu0
      %v1001 = vadd.f32 %v781, %v1000
      %v1002 = vpop.f32.mrf.mxu0
      %v1003 = vadd.f32 %v783, %v1002
      %1004 = vmatmul.bf16.gmra.mxu0 %v938
      %v1005 = vpop.f32.mrf.mxu0
      %v1006 = vadd.f32 %v786, %v1005
      %v1007 = vpop.f32.mrf.mxu0
      %v1008 = vadd.f32 %v788, %v1007
      %1009 = vmatmul.bf16.gmra.mxu0 %v941
      %v1010 = vpop.f32.mrf.mxu0
      %v1011 = vadd.f32 %v791, %v1010
      %v1012 = vpop.f32.mrf.mxu0
      %v1013 = vadd.f32 %v793, %v1012
      %1014 = vmatmul.bf16.gmra.mxu0 %v944
      %v1015 = vpop.f32.mrf.mxu0
      %v1016 = vadd.f32 %v796, %v1015
      %v1017 = vpop.f32.mrf.mxu0
      %v1018 = vadd.f32 %v798, %v1017
      %1019 = vmatmul.bf16.gmra.mxu0 %v947
      %v1020 = vpop.f32.mrf.mxu0
      %v1021 = vadd.f32 %v801, %v1020
      %v1022 = vpop.f32.mrf.mxu0
      %v1023 = vadd.f32 %v803, %v1022
      %1024 = vmatmul.bf16.gmra.mxu0 %v950
      %v1025 = vpop.f32.mrf.mxu0
      %v1026 = vadd.f32 %v806, %v1025
      %v1027 = vpop.f32.mrf.mxu0
      %v1028 = vadd.f32 %v808, %v1027
      %1029 = vmatmul.bf16.gmra.mxu0 %v953
      %v1030 = vpop.f32.mrf.mxu0
      %v1031 = vadd.f32 %v811, %v1030
      %v1032 = vpop.f32.mrf.mxu0
      %v1033 = vadd.f32 %v813, %v1032
      %1034 = vmatmul.bf16.gmra.mxu0 %v956
      %v1035 = vpop.f32.mrf.mxu0
      %v1036 = vadd.f32 %v816, %v1035
      %v1037 = vpop.f32.mrf.mxu0
      %v1038 = vadd.f32 %v818, %v1037
      %1039 = vmatmul.bf16.gmra.mxu0 %v959
      %v1040 = vpop.f32.mrf.mxu0
      %v1041 = vadd.f32 %v821, %v1040
      %v1042 = vpop.f32.mrf.mxu0
      %v1043 = vadd.f32 %v823, %v1042
      %1044 = vmatmul.bf16.gmra.mxu0 %v962
      %v1045 = vpop.f32.mrf.mxu0
      %v1046 = vadd.f32 %v826, %v1045
      %v1047 = vpop.f32.mrf.mxu0
      %v1048 = vadd.f32 %v828, %v1047
      %1049 = vmatmul.bf16.gmra.mxu0 %v965
      %v1050 = vpop.f32.mrf.mxu0
      %v1051 = vadd.f32 %v831, %v1050
      %v1052 = vpop.f32.mrf.mxu0
      %v1053 = vadd.f32 %v833, %v1052
      %1054 = vmatmul.bf16.gmra.mxu0 %v968
      %v1055 = vpop.f32.mrf.mxu0
      %v1056 = vadd.f32 %v836, %v1055
      %v1057 = vpop.f32.mrf.mxu0
      %v1058 = vadd.f32 %v838, %v1057
      %1059 = vmatmul.bf16.gmra.mxu0 %v971
      %v1060 = vpop.f32.mrf.mxu0
      %v1061 = vadd.f32 %v841, %v1060
      %v1062 = vpop.f32.mrf.mxu0
      %v1063 = vadd.f32 %v843, %v1062
      %1064 = vdwg.mxu0
      %v1065 = vld [vmem:[%s237] sm:$0xe]
      %v1066 = vld [vmem:[%s237 + $0x14] sm:$0xe]
      %v1067 = vld [vmem:[%s237 + $0x28] sm:$0xe]
      %v1068 = vld [vmem:[%s237 + $0x3c] sm:$0xe]
      %v1069 = vld [vmem:[%s237 + $0x50] sm:$0xe]
      %v1070 = vld [vmem:[%s237 + $0x64] sm:$0xe]
      %v1071 = vld [vmem:[%s237 + $0x78] sm:$0xe]
      %v1072 = vld [vmem:[%s237 + $0x8c] sm:$0xe]
      %vm1089 = vcmask 1042432
      %vm1090 = vcmask 1046532
      %vm1091 = vmor %vm1089, %vm1090
      %v1092 = vrot.slane %v1065, 5
      %v1093 = vrot.slane %v1092, 4
      %v1094 = vrot.slane %v258, 5
      %v1095 = vsel %vm1091, %v1093, %v1094
      %v1096 = vrot.slane %v1094, 4
      %v1097 = vrot.slane %v259, 5
      %v1098 = vsel %vm1091, %v1096, %v1097
      %v1099 = vrot.slane %v1097, 4
      %v1100 = vrot.slane %v260, 5
      %v1101 = vsel %vm1091, %v1099, %v1100
      %v1102 = vrot.slane %v1100, 4
      %v1103 = vrot.slane %v290, 5
      %v1104 = vsel %vm1091, %v1102, %v1103
      %v1105 = vrot.slane %v1066, 5
      %v1106 = vrot.slane %v1105, 4
      %v1107 = vrot.slane %v262, 5
      %v1108 = vsel %vm1091, %v1106, %v1107
      %v1109 = vrot.slane %v1107, 4
      %v1110 = vrot.slane %v263, 5
      %v1111 = vsel %vm1091, %v1109, %v1110
      %v1112 = vrot.slane %v1110, 4
      %v1113 = vrot.slane %v264, 5
      %v1114 = vsel %vm1091, %v1112, %v1113
      %v1115 = vrot.slane %v1113, 4
      %v1116 = vrot.slane %v291, 5
      %v1117 = vsel %vm1091, %v1115, %v1116
      %v1118 = vrot.slane %v1067, 5
      %v1119 = vrot.slane %v1118, 4
      %v1120 = vrot.slane %v266, 5
      %v1121 = vsel %vm1091, %v1119, %v1120
      %v1122 = vrot.slane %v1120, 4
      %v1123 = vrot.slane %v267, 5
      %v1124 = vsel %vm1091, %v1122, %v1123
      %v1125 = vrot.slane %v1123, 4
      %v1126 = vrot.slane %v268, 5
      %v1127 = vsel %vm1091, %v1125, %v1126
      %v1128 = vrot.slane %v1126, 4
      %v1129 = vrot.slane %v292, 5
      %v1130 = vsel %vm1091, %v1128, %v1129
      %v1131 = vrot.slane %v1068, 5
      %v1132 = vrot.slane %v1131, 4
      %v1133 = vrot.slane %v270, 5
      %v1134 = vsel %vm1091, %v1132, %v1133
      %v1135 = vrot.slane %v1133, 4
      %v1136 = vrot.slane %v271, 5
      %v1137 = vsel %vm1091, %v1135, %v1136
      %v1138 = vrot.slane %v1136, 4
      %v1139 = vrot.slane %v272, 5
      %v1140 = vsel %vm1091, %v1138, %v1139
      %v1141 = vrot.slane %v1139, 4
      %v1142 = vrot.slane %v293, 5
      %v1143 = vsel %vm1091, %v1141, %v1142
      %v1144 = vrot.slane %v1069, 5
      %v1145 = vrot.slane %v1144, 4
      %v1146 = vrot.slane %v274, 5
      %v1147 = vsel %vm1091, %v1145, %v1146
      %v1148 = vrot.slane %v1146, 4
      %v1149 = vrot.slane %v275, 5
      %v1150 = vsel %vm1091, %v1148, %v1149
      %v1151 = vrot.slane %v1149, 4
      %v1152 = vrot.slane %v276, 5
      %v1153 = vsel %vm1091, %v1151, %v1152
      %v1154 = vrot.slane %v1152, 4
      %v1155 = vrot.slane %v294, 5
      %v1156 = vsel %vm1091, %v1154, %v1155
      %v1157 = vrot.slane %v1070, 5
      %v1158 = vrot.slane %v1157, 4
      %v1159 = vrot.slane %v278, 5
      %v1160 = vsel %vm1091, %v1158, %v1159
      %v1161 = vrot.slane %v1159, 4
      %v1162 = vrot.slane %v279, 5
      %v1163 = vsel %vm1091, %v1161, %v1162
      %v1164 = vrot.slane %v1162, 4
      %v1165 = vrot.slane %v280, 5
      %v1166 = vsel %vm1091, %v1164, %v1165
      %v1167 = vrot.slane %v1165, 4
      %v1168 = vrot.slane %v295, 5
      %v1169 = vsel %vm1091, %v1167, %v1168
      %v1170 = vrot.slane %v1071, 5
      %v1171 = vrot.slane %v1170, 4
      %v1172 = vrot.slane %v282, 5
      %v1173 = vsel %vm1091, %v1171, %v1172
      %v1174 = vrot.slane %v1172, 4
      %v1175 = vrot.slane %v283, 5
      %v1176 = vsel %vm1091, %v1174, %v1175
      %v1177 = vrot.slane %v1175, 4
      %v1178 = vrot.slane %v284, 5
      %v1179 = vsel %vm1091, %v1177, %v1178
      %v1180 = vrot.slane %v1178, 4
      %v1181 = vrot.slane %v296, 5
      %v1182 = vsel %vm1091, %v1180, %v1181
      %v1183 = vrot.slane %v1072, 5
      %v1184 = vrot.slane %v1183, 4
      %v1185 = vrot.slane %v286, 5
      %v1186 = vsel %vm1091, %v1184, %v1185
      %v1187 = vrot.slane %v1185, 4
      %v1188 = vrot.slane %v287, 5
      %v1189 = vsel %vm1091, %v1187, %v1188
      %v1190 = vrot.slane %v1188, 4
      %v1191 = vrot.slane %v288, 5
      %v1192 = vsel %vm1091, %v1190, %v1191
      %v1193 = vrot.slane %v1191, 4
      %v1194 = vrot.slane %v297, 5
      %v1195 = vsel %vm1091, %v1193, %v1194
      %s1196 = scalar_lea.vmem %s1, 8
      %v1197 = vld [vmem:[%s1196] sm:$0xf]
      %v1198 = vunpack.c.l.b16 %v1095
      %v1199 = vunpack.c.l.b16 %v1098
      %v1200 = vunpack.c.l.b16 %v1101
      %v1201 = vunpack.c.l.b16 %v1104
      %v1202 = vunpack.c.l.b16 %v1108
      %v1203 = vunpack.c.l.b16 %v1111
      %v1204 = vunpack.c.l.b16 %v1114
      %v1205 = vunpack.c.l.b16 %v1117
      %v1206 = vunpack.c.l.b16 %v1121
      %v1207 = vunpack.c.l.b16 %v1124
      %v1208 = vunpack.c.l.b16 %v1127
      %v1209 = vunpack.c.l.b16 %v1130
      %v1210 = vunpack.c.l.b16 %v1134
      %v1211 = vunpack.c.l.b16 %v1137
      %v1212 = vunpack.c.l.b16 %v1140
      %v1213 = vunpack.c.l.b16 %v1143
      %v1214 = vunpack.c.l.b16 %v1147
      %v1215 = vunpack.c.l.b16 %v1150
      %v1216 = vunpack.c.l.b16 %v1153
      %v1217 = vunpack.c.l.b16 %v1156
      %v1218 = vunpack.c.l.b16 %v1160
      %v1219 = vunpack.c.l.b16 %v1163
      %v1220 = vunpack.c.l.b16 %v1166
      %v1221 = vunpack.c.l.b16 %v1169
      %v1222 = vunpack.c.l.b16 %v1173
      %v1223 = vunpack.c.l.b16 %v1176
      %v1224 = vunpack.c.l.b16 %v1179
      %v1225 = vunpack.c.l.b16 %v1182
      %v1226 = vunpack.c.l.b16 %v1186
      %v1227 = vunpack.c.l.b16 %v1189
      %v1228 = vunpack.c.l.b16 %v1192
      %v1229 = vunpack.c.l.b16 %v1195
      %v1230 = vpack.c.b16 %v1199, %v1198
      %v1231 = vpack.c.b16 %v1201, %v1200
      %v1232 = vpack.c.b16 %v1203, %v1202
      %v1233 = vpack.c.b16 %v1205, %v1204
      %v1234 = vpack.c.b16 %v1207, %v1206
      %v1235 = vpack.c.b16 %v1209, %v1208
      %v1236 = vpack.c.b16 %v1211, %v1210
      %v1237 = vpack.c.b16 %v1213, %v1212
      %v1238 = vpack.c.b16 %v1215, %v1214
      %v1239 = vpack.c.b16 %v1217, %v1216
      %v1240 = vpack.c.b16 %v1219, %v1218
      %v1241 = vpack.c.b16 %v1221, %v1220
      %v1242 = vpack.c.b16 %v1223, %v1222
      %v1243 = vpack.c.b16 %v1225, %v1224
      %v1244 = vpack.c.b16 %v1227, %v1226
      %v1245 = vpack.c.b16 %v1229, %v1228
      %v1247 = vsel %vm703, %v1230, 0
      %v1250 = vsel %vm703, %v1231, 0
      %v1253 = vsel %vm703, %v1232, 0
      %v1256 = vsel %vm703, %v1233, 0
      %v1259 = vsel %vm703, %v1234, 0
      %v1262 = vsel %vm703, %v1235, 0
      %v1265 = vsel %vm703, %v1236, 0
      %v1268 = vsel %vm703, %v1237, 0
      %v1271 = vsel %vm703, %v1238, 0
      %v1274 = vsel %vm703, %v1239, 0
      %v1277 = vsel %vm703, %v1240, 0
      %v1280 = vsel %vm703, %v1241, 0
      %v1283 = vsel %vm703, %v1242, 0
      %v1286 = vsel %vm703, %v1243, 0
      %v1289 = vsel %vm703, %v1244, 0
      %v1292 = vsel %vm703, %v1245, 0
      %v1295 = vsel %vm752, %v1197, 0
      %1297 = vmatpush.bf16.msra.mxu0 0
      %1298 = vmatpush.bf16.msra.mxu0 0
      %1299 = vmatpush.bf16.msra.mxu0 0
      %1300 = vmatpush.bf16.msra.mxu0 0
      %1301 = vmatpush.bf16.msra.mxu0 0
      %1302 = vmatpush.bf16.msra.mxu0 0
      %1303 = vmatpush.bf16.msra.mxu0 0
      %1304 = vmatpush.bf16.msra.mxu0 %v1295
      %1305 = vmatmul.bf16.gmra.mxu0 %v1247
      %v1306 = vpop.f32.mrf.mxu0
      %v1307 = vadd.f32 0.0, %v1306
      %v1308 = vpop.f32.mrf.mxu0
      %v1309 = vadd.f32 0.0, %v1308
      %1310 = vmatmul.bf16.gmra.mxu0 %v1250
      %v1311 = vpop.f32.mrf.mxu0
      %v1312 = vadd.f32 0.0, %v1311
      %v1313 = vpop.f32.mrf.mxu0
      %v1314 = vadd.f32 0.0, %v1313
      %1315 = vmatmul.bf16.gmra.mxu0 %v1253
      %v1316 = vpop.f32.mrf.mxu0
      %v1317 = vadd.f32 0.0, %v1316
      %v1318 = vpop.f32.mrf.mxu0
      %v1319 = vadd.f32 0.0, %v1318
      %1320 = vmatmul.bf16.gmra.mxu0 %v1256
      %v1321 = vpop.f32.mrf.mxu0
      %v1322 = vadd.f32 0.0, %v1321
      %v1323 = vpop.f32.mrf.mxu0
      %v1324 = vadd.f32 0.0, %v1323
      %1325 = vmatmul.bf16.gmra.mxu0 %v1259
      %v1326 = vpop.f32.mrf.mxu0
      %v1327 = vadd.f32 0.0, %v1326
      %v1328 = vpop.f32.mrf.mxu0
      %v1329 = vadd.f32 0.0, %v1328
      %1330 = vmatmul.bf16.gmra.mxu0 %v1262
      %v1331 = vpop.f32.mrf.mxu0
      %v1332 = vadd.f32 0.0, %v1331
      %v1333 = vpop.f32.mrf.mxu0
      %v1334 = vadd.f32 0.0, %v1333
      %1335 = vmatmul.bf16.gmra.mxu0 %v1265
      %v1336 = vpop.f32.mrf.mxu0
      %v1337 = vadd.f32 0.0, %v1336
      %v1338 = vpop.f32.mrf.mxu0
      %v1339 = vadd.f32 0.0, %v1338
      %1340 = vmatmul.bf16.gmra.mxu0 %v1268
      %v1341 = vpop.f32.mrf.mxu0
      %v1342 = vadd.f32 0.0, %v1341
      %v1343 = vpop.f32.mrf.mxu0
      %v1344 = vadd.f32 0.0, %v1343
      %1345 = vmatmul.bf16.gmra.mxu0 %v1271
      %v1346 = vpop.f32.mrf.mxu0
      %v1347 = vadd.f32 0.0, %v1346
      %v1348 = vpop.f32.mrf.mxu0
      %v1349 = vadd.f32 0.0, %v1348
      %1350 = vmatmul.bf16.gmra.mxu0 %v1274
      %v1351 = vpop.f32.mrf.mxu0
      %v1352 = vadd.f32 0.0, %v1351
      %v1353 = vpop.f32.mrf.mxu0
      %v1354 = vadd.f32 0.0, %v1353
      %1355 = vmatmul.bf16.gmra.mxu0 %v1277
      %v1356 = vpop.f32.mrf.mxu0
      %v1357 = vadd.f32 0.0, %v1356
      %v1358 = vpop.f32.mrf.mxu0
      %v1359 = vadd.f32 0.0, %v1358
      %1360 = vmatmul.bf16.gmra.mxu0 %v1280
      %v1361 = vpop.f32.mrf.mxu0
      %v1362 = vadd.f32 0.0, %v1361
      %v1363 = vpop.f32.mrf.mxu0
      %v1364 = vadd.f32 0.0, %v1363
      %1365 = vmatmul.bf16.gmra.mxu0 %v1283
      %v1366 = vpop.f32.mrf.mxu0
      %v1367 = vadd.f32 0.0, %v1366
      %v1368 = vpop.f32.mrf.mxu0
      %v1369 = vadd.f32 0.0, %v1368
      %1370 = vmatmul.bf16.gmra.mxu0 %v1286
      %v1371 = vpop.f32.mrf.mxu0
      %v1372 = vadd.f32 0.0, %v1371
      %v1373 = vpop.f32.mrf.mxu0
      %v1374 = vadd.f32 0.0, %v1373
      %1375 = vmatmul.bf16.gmra.mxu0 %v1289
      %v1376 = vpop.f32.mrf.mxu0
      %v1377 = vadd.f32 0.0, %v1376
      %v1378 = vpop.f32.mrf.mxu0
      %v1379 = vadd.f32 0.0, %v1378
      %1380 = vmatmul.bf16.gmra.mxu0 %v1292
      %v1381 = vpop.f32.mrf.mxu0
      %v1382 = vadd.f32 0.0, %v1381
      %v1383 = vpop.f32.mrf.mxu0
      %v1384 = vadd.f32 0.0, %v1383
      %1385 = vdwg.mxu0
      %v1386 = vadd.f32 %v986, %v1307
      %v1387 = vadd.f32 %v988, %v1309
      %v1388 = vadd.f32 %v991, %v1312
      %v1389 = vadd.f32 %v993, %v1314
      %v1390 = vadd.f32 %v996, %v1317
      %v1391 = vadd.f32 %v998, %v1319
      %v1392 = vadd.f32 %v1001, %v1322
      %v1393 = vadd.f32 %v1003, %v1324
      %v1394 = vadd.f32 %v1006, %v1327
      %v1395 = vadd.f32 %v1008, %v1329
      %v1396 = vadd.f32 %v1011, %v1332
      %v1397 = vadd.f32 %v1013, %v1334
      %v1398 = vadd.f32 %v1016, %v1337
      %v1399 = vadd.f32 %v1018, %v1339
      %v1400 = vadd.f32 %v1021, %v1342
      %v1401 = vadd.f32 %v1023, %v1344
      %v1402 = vadd.f32 %v1026, %v1347
      %v1403 = vadd.f32 %v1028, %v1349
      %v1404 = vadd.f32 %v1031, %v1352
      %v1405 = vadd.f32 %v1033, %v1354
      %v1406 = vadd.f32 %v1036, %v1357
      %v1407 = vadd.f32 %v1038, %v1359
      %v1408 = vadd.f32 %v1041, %v1362
      %v1409 = vadd.f32 %v1043, %v1364
      %v1410 = vadd.f32 %v1046, %v1367
      %v1411 = vadd.f32 %v1048, %v1369
      %v1412 = vadd.f32 %v1051, %v1372
      %v1413 = vadd.f32 %v1053, %v1374
      %v1414 = vadd.f32 %v1056, %v1377
      %v1415 = vadd.f32 %v1058, %v1379
      %v1416 = vadd.f32 %v1061, %v1382
      %v1417 = vadd.f32 %v1063, %v1384
      %s1418 = scalar_lea.vmem %s237, 20
      %v1419 = vld [vmem:[%s1418] sm:$0xf]
      %v1420 = vld [vmem:[%s1418 + $0x4] sm:$0xf]
      %v1421 = vld [vmem:[%s1418 + $0x8] sm:$0xf]
      %v1422 = vld [vmem:[%s1418 + $0xc] sm:$0xf]
      %v1423 = vld [vmem:[%s1418 + $0x14] sm:$0xf]
      %v1424 = vld [vmem:[%s1418 + $0x18] sm:$0xf]
      %v1425 = vld [vmem:[%s1418 + $0x1c] sm:$0xf]
      %v1426 = vld [vmem:[%s1418 + $0x20] sm:$0xf]
      %v1427 = vld [vmem:[%s1418 + $0x28] sm:$0xf]
      %v1428 = vld [vmem:[%s1418 + $0x2c] sm:$0xf]
      %v1429 = vld [vmem:[%s1418 + $0x30] sm:$0xf]
      %v1430 = vld [vmem:[%s1418 + $0x34] sm:$0xf]
      %v1431 = vld [vmem:[%s1418 + $0x3c] sm:$0xf]
      %v1432 = vld [vmem:[%s1418 + $0x40] sm:$0xf]
      %v1433 = vld [vmem:[%s1418 + $0x44] sm:$0xf]
      %v1434 = vld [vmem:[%s1418 + $0x48] sm:$0xf]
      %v1435 = vld [vmem:[%s1418 + $0x50] sm:$0xf]
      %v1436 = vld [vmem:[%s1418 + $0x54] sm:$0xf]
      %v1437 = vld [vmem:[%s1418 + $0x58] sm:$0xf]
      %v1438 = vld [vmem:[%s1418 + $0x5c] sm:$0xf]
      %v1439 = vld [vmem:[%s1418 + $0x64] sm:$0xf]
      %v1440 = vld [vmem:[%s1418 + $0x68] sm:$0xf]
      %v1441 = vld [vmem:[%s1418 + $0x6c] sm:$0xf]
      %v1442 = vld [vmem:[%s1418 + $0x70] sm:$0xf]
      %v1443 = vld [vmem:[%s1418 + $0x78] sm:$0xf]
      %v1444 = vld [vmem:[%s1418 + $0x7c] sm:$0xf]
      %v1445 = vld [vmem:[%s1418 + $0x80] sm:$0xf]
      %v1446 = vld [vmem:[%s1418 + $0x84] sm:$0xf]
      %v1447 = vld [vmem:[%s1418 + $0x8c] sm:$0xf]
      %v1448 = vld [vmem:[%s1418 + $0x90] sm:$0xf]
      %v1449 = vld [vmem:[%s1418 + $0x94] sm:$0xf]
      %v1450 = vld [vmem:[%s1418 + $0x98] sm:$0xf]
      %s1451 = scalar_lea.vmem %s1, 12
      %v1452 = vld [vmem:[%s1451] sm:$0xf]
      %v1485 = vunpack.c.l.b16 %v1419
      %v1486 = vunpack.c.l.b16 %v1420
      %v1487 = vunpack.c.l.b16 %v1421
      %v1488 = vunpack.c.l.b16 %v1422
      %v1489 = vunpack.c.l.b16 %v1423
      %v1490 = vunpack.c.l.b16 %v1424
      %v1491 = vunpack.c.l.b16 %v1425
      %v1492 = vunpack.c.l.b16 %v1426
      %v1493 = vunpack.c.l.b16 %v1427
      %v1494 = vunpack.c.l.b16 %v1428
      %v1495 = vunpack.c.l.b16 %v1429
      %v1496 = vunpack.c.l.b16 %v1430
      %v1497 = vunpack.c.l.b16 %v1431
      %v1498 = vunpack.c.l.b16 %v1432
      %v1499 = vunpack.c.l.b16 %v1433
      %v1500 = vunpack.c.l.b16 %v1434
      %v1501 = vunpack.c.l.b16 %v1435
      %v1502 = vunpack.c.l.b16 %v1436
      %v1503 = vunpack.c.l.b16 %v1437
      %v1504 = vunpack.c.l.b16 %v1438
      %v1505 = vunpack.c.l.b16 %v1439
      %v1506 = vunpack.c.l.b16 %v1440
      %v1507 = vunpack.c.l.b16 %v1441
      %v1508 = vunpack.c.l.b16 %v1442
      %v1509 = vunpack.c.l.b16 %v1443
      %v1510 = vunpack.c.l.b16 %v1444
      %v1511 = vunpack.c.l.b16 %v1445
      %v1512 = vunpack.c.l.b16 %v1446
      %v1513 = vunpack.c.l.b16 %v1447
      %v1514 = vunpack.c.l.b16 %v1448
      %v1515 = vunpack.c.l.b16 %v1449
      %v1516 = vunpack.c.l.b16 %v1450
      %v1517 = vpack.c.b16 %v1486, %v1485
      %v1518 = vpack.c.b16 %v1488, %v1487
      %v1519 = vpack.c.b16 %v1490, %v1489
      %v1520 = vpack.c.b16 %v1492, %v1491
      %v1521 = vpack.c.b16 %v1494, %v1493
      %v1522 = vpack.c.b16 %v1496, %v1495
      %v1523 = vpack.c.b16 %v1498, %v1497
      %v1524 = vpack.c.b16 %v1500, %v1499
      %v1525 = vpack.c.b16 %v1502, %v1501
      %v1526 = vpack.c.b16 %v1504, %v1503
      %v1527 = vpack.c.b16 %v1506, %v1505
      %v1528 = vpack.c.b16 %v1508, %v1507
      %v1529 = vpack.c.b16 %v1510, %v1509
      %v1530 = vpack.c.b16 %v1512, %v1511
      %v1531 = vpack.c.b16 %v1514, %v1513
      %v1532 = vpack.c.b16 %v1516, %v1515
      %v1534 = vsel %vm703, %v1517, 0
      %v1537 = vsel %vm703, %v1518, 0
      %v1540 = vsel %vm703, %v1519, 0
      %v1543 = vsel %vm703, %v1520, 0
      %v1546 = vsel %vm703, %v1521, 0
      %v1549 = vsel %vm703, %v1522, 0
      %v1552 = vsel %vm703, %v1523, 0
      %v1555 = vsel %vm703, %v1524, 0
      %v1558 = vsel %vm703, %v1525, 0
      %v1561 = vsel %vm703, %v1526, 0
      %v1564 = vsel %vm703, %v1527, 0
      %v1567 = vsel %vm703, %v1528, 0
      %v1570 = vsel %vm703, %v1529, 0
      %v1573 = vsel %vm703, %v1530, 0
      %v1576 = vsel %vm703, %v1531, 0
      %v1579 = vsel %vm703, %v1532, 0
      %v1582 = vsel %vm752, %v1452, 0
      %1584 = vmatpush.bf16.msra.mxu0 0
      %1585 = vmatpush.bf16.msra.mxu0 0
      %1586 = vmatpush.bf16.msra.mxu0 0
      %1587 = vmatpush.bf16.msra.mxu0 0
      %1588 = vmatpush.bf16.msra.mxu0 0
      %1589 = vmatpush.bf16.msra.mxu0 0
      %1590 = vmatpush.bf16.msra.mxu0 0
      %1591 = vmatpush.bf16.msra.mxu0 %v1582
      %1592 = vmatmul.bf16.gmra.mxu0 %v1534
      %v1593 = vpop.f32.mrf.mxu0
      %v1594 = vadd.f32 0.0, %v1593
      %v1595 = vpop.f32.mrf.mxu0
      %v1596 = vadd.f32 0.0, %v1595
      %1597 = vmatmul.bf16.gmra.mxu0 %v1537
      %v1598 = vpop.f32.mrf.mxu0
      %v1599 = vadd.f32 0.0, %v1598
      %v1600 = vpop.f32.mrf.mxu0
      %v1601 = vadd.f32 0.0, %v1600
      %1602 = vmatmul.bf16.gmra.mxu0 %v1540
      %v1603 = vpop.f32.mrf.mxu0
      %v1604 = vadd.f32 0.0, %v1603
      %v1605 = vpop.f32.mrf.mxu0
      %v1606 = vadd.f32 0.0, %v1605
      %1607 = vmatmul.bf16.gmra.mxu0 %v1543
      %v1608 = vpop.f32.mrf.mxu0
      %v1609 = vadd.f32 0.0, %v1608
      %v1610 = vpop.f32.mrf.mxu0
      %v1611 = vadd.f32 0.0, %v1610
      %1612 = vmatmul.bf16.gmra.mxu0 %v1546
      %v1613 = vpop.f32.mrf.mxu0
      %v1614 = vadd.f32 0.0, %v1613
      %v1615 = vpop.f32.mrf.mxu0
      %v1616 = vadd.f32 0.0, %v1615
      %1617 = vmatmul.bf16.gmra.mxu0 %v1549
      %v1618 = vpop.f32.mrf.mxu0
      %v1619 = vadd.f32 0.0, %v1618
      %v1620 = vpop.f32.mrf.mxu0
      %v1621 = vadd.f32 0.0, %v1620
      %1622 = vmatmul.bf16.gmra.mxu0 %v1552
      %v1623 = vpop.f32.mrf.mxu0
      %v1624 = vadd.f32 0.0, %v1623
      %v1625 = vpop.f32.mrf.mxu0
      %v1626 = vadd.f32 0.0, %v1625
      %1627 = vmatmul.bf16.gmra.mxu0 %v1555
      %v1628 = vpop.f32.mrf.mxu0
      %v1629 = vadd.f32 0.0, %v1628
      %v1630 = vpop.f32.mrf.mxu0
      %v1631 = vadd.f32 0.0, %v1630
      %1632 = vmatmul.bf16.gmra.mxu0 %v1558
      %v1633 = vpop.f32.mrf.mxu0
      %v1634 = vadd.f32 0.0, %v1633
      %v1635 = vpop.f32.mrf.mxu0
      %v1636 = vadd.f32 0.0, %v1635
      %1637 = vmatmul.bf16.gmra.mxu0 %v1561
      %v1638 = vpop.f32.mrf.mxu0
      %v1639 = vadd.f32 0.0, %v1638
      %v1640 = vpop.f32.mrf.mxu0
      %v1641 = vadd.f32 0.0, %v1640
      %1642 = vmatmul.bf16.gmra.mxu0 %v1564
      %v1643 = vpop.f32.mrf.mxu0
      %v1644 = vadd.f32 0.0, %v1643
      %v1645 = vpop.f32.mrf.mxu0
      %v1646 = vadd.f32 0.0, %v1645
      %1647 = vmatmul.bf16.gmra.mxu0 %v1567
      %v1648 = vpop.f32.mrf.mxu0
      %v1649 = vadd.f32 0.0, %v1648
      %v1650 = vpop.f32.mrf.mxu0
      %v1651 = vadd.f32 0.0, %v1650
      %1652 = vmatmul.bf16.gmra.mxu0 %v1570
      %v1653 = vpop.f32.mrf.mxu0
      %v1654 = vadd.f32 0.0, %v1653
      %v1655 = vpop.f32.mrf.mxu0
      %v1656 = vadd.f32 0.0, %v1655
      %1657 = vmatmul.bf16.gmra.mxu0 %v1573
      %v1658 = vpop.f32.mrf.mxu0
      %v1659 = vadd.f32 0.0, %v1658
      %v1660 = vpop.f32.mrf.mxu0
      %v1661 = vadd.f32 0.0, %v1660
      %1662 = vmatmul.bf16.gmra.mxu0 %v1576
      %v1663 = vpop.f32.mrf.mxu0
      %v1664 = vadd.f32 0.0, %v1663
      %v1665 = vpop.f32.mrf.mxu0
      %v1666 = vadd.f32 0.0, %v1665
      %1667 = vmatmul.bf16.gmra.mxu0 %v1579
      %v1668 = vpop.f32.mrf.mxu0
      %v1669 = vadd.f32 0.0, %v1668
      %v1670 = vpop.f32.mrf.mxu0
      %v1671 = vadd.f32 0.0, %v1670
      %1672 = vdwg.mxu0
      %v1673 = vadd.f32 %v1386, %v1594
      %v1674 = vadd.f32 %v1387, %v1596
      %v1675 = vadd.f32 %v1388, %v1599
      %v1676 = vadd.f32 %v1389, %v1601
      %v1677 = vadd.f32 %v1390, %v1604
      %v1678 = vadd.f32 %v1391, %v1606
      %v1679 = vadd.f32 %v1392, %v1609
      %v1680 = vadd.f32 %v1393, %v1611
      %v1681 = vadd.f32 %v1394, %v1614
      %v1682 = vadd.f32 %v1395, %v1616
      %v1683 = vadd.f32 %v1396, %v1619
      %v1684 = vadd.f32 %v1397, %v1621
      %v1685 = vadd.f32 %v1398, %v1624
      %v1686 = vadd.f32 %v1399, %v1626
      %v1687 = vadd.f32 %v1400, %v1629
      %v1688 = vadd.f32 %v1401, %v1631
      %v1689 = vadd.f32 %v1402, %v1634
      %v1690 = vadd.f32 %v1403, %v1636
      %v1691 = vadd.f32 %v1404, %v1639
      %v1692 = vadd.f32 %v1405, %v1641
      %v1693 = vadd.f32 %v1406, %v1644
      %v1694 = vadd.f32 %v1407, %v1646
      %v1695 = vadd.f32 %v1408, %v1649
      %v1696 = vadd.f32 %v1409, %v1651
      %v1697 = vadd.f32 %v1410, %v1654
      %v1698 = vadd.f32 %v1411, %v1656
      %v1699 = vadd.f32 %v1412, %v1659
      %v1700 = vadd.f32 %v1413, %v1661
      %v1701 = vadd.f32 %v1414, %v1664
      %v1702 = vadd.f32 %v1415, %v1666
      %v1703 = vadd.f32 %v1416, %v1669
      %v1704 = vadd.f32 %v1417, %v1671
      %v1705 = vld [vmem:[%s1418] sm:$0xf]
      %v1706 = vld [vmem:[%s1418 + $0x4] sm:$0xf]
      %v1707 = vld [vmem:[%s1418 + $0x8] sm:$0xf]
      %v1708 = vld [vmem:[%s1418 + $0xc] sm:$0xf]
      %v1709 = vld [vmem:[%s1418 + $0x10] sm:$0x1]
      %v1710 = vld [vmem:[%s1418 + $0x14] sm:$0xf]
      %v1711 = vld [vmem:[%s1418 + $0x18] sm:$0xf]
      %v1712 = vld [vmem:[%s1418 + $0x1c] sm:$0xf]
      %v1713 = vld [vmem:[%s1418 + $0x20] sm:$0xf]
      %v1714 = vld [vmem:[%s1418 + $0x24] sm:$0x1]
      %v1715 = vld [vmem:[%s1418 + $0x28] sm:$0xf]
      %v1716 = vld [vmem:[%s1418 + $0x2c] sm:$0xf]
      %v1717 = vld [vmem:[%s1418 + $0x30] sm:$0xf]
      %v1718 = vld [vmem:[%s1418 + $0x34] sm:$0xf]
      %v1719 = vld [vmem:[%s1418 + $0x38] sm:$0x1]
      %v1720 = vld [vmem:[%s1418 + $0x3c] sm:$0xf]
      %v1721 = vld [vmem:[%s1418 + $0x40] sm:$0xf]
      %v1722 = vld [vmem:[%s1418 + $0x44] sm:$0xf]
      %v1723 = vld [vmem:[%s1418 + $0x48] sm:$0xf]
      %v1724 = vld [vmem:[%s1418 + $0x4c] sm:$0x1]
      %v1725 = vld [vmem:[%s1418 + $0x50] sm:$0xf]
      %v1726 = vld [vmem:[%s1418 + $0x54] sm:$0xf]
      %v1727 = vld [vmem:[%s1418 + $0x58] sm:$0xf]
      %v1728 = vld [vmem:[%s1418 + $0x5c] sm:$0xf]
      %v1729 = vld [vmem:[%s1418 + $0x60] sm:$0x1]
      %v1730 = vld [vmem:[%s1418 + $0x64] sm:$0xf]
      %v1731 = vld [vmem:[%s1418 + $0x68] sm:$0xf]
      %v1732 = vld [vmem:[%s1418 + $0x6c] sm:$0xf]
      %v1733 = vld [vmem:[%s1418 + $0x70] sm:$0xf]
      %v1734 = vld [vmem:[%s1418 + $0x74] sm:$0x1]
      %v1735 = vld [vmem:[%s1418 + $0x78] sm:$0xf]
      %v1736 = vld [vmem:[%s1418 + $0x7c] sm:$0xf]
      %v1737 = vld [vmem:[%s1418 + $0x80] sm:$0xf]
      %v1738 = vld [vmem:[%s1418 + $0x84] sm:$0xf]
      %v1739 = vld [vmem:[%s1418 + $0x88] sm:$0x1]
      %v1740 = vld [vmem:[%s1418 + $0x8c] sm:$0xf]
      %v1741 = vld [vmem:[%s1418 + $0x90] sm:$0xf]
      %v1742 = vld [vmem:[%s1418 + $0x94] sm:$0xf]
      %v1743 = vld [vmem:[%s1418 + $0x98] sm:$0xf]
      %v1744 = vld [vmem:[%s1418 + $0x9c] sm:$0x1]
      %v1746 = vshrl.u32 %v1705, 16
      %v1748 = vrot.slane %v1746, 4
      %v1749 = vshll.u32 %v1705, 16
      %v1751 = vrot.slane %v1749, 5
      %v1752 = vor.u32 %v1748, %v1751
      %v1753 = vrot.slane %v1752, 4
      %v1755 = vshll.u32 %v1706, 16
      %v1757 = vrot.slane %v1755, 5
      %v1758 = vsel %vm300, %v1753, %v1757
      %v1759 = vshrl.u32 %v1706, 16
      %v1761 = vrot.slane %v1759, 4
      %v1762 = vor.u32 %v1761, %v1757
      %v1763 = vrot.slane %v1762, 4
      %v1765 = vshll.u32 %v1707, 16
      %v1767 = vrot.slane %v1765, 5
      %v1768 = vsel %vm300, %v1763, %v1767
      %v1769 = vshrl.u32 %v1707, 16
      %v1771 = vrot.slane %v1769, 4
      %v1772 = vor.u32 %v1771, %v1767
      %v1773 = vrot.slane %v1772, 4
      %v1775 = vshll.u32 %v1708, 16
      %v1777 = vrot.slane %v1775, 5
      %v1778 = vsel %vm300, %v1773, %v1777
      %v1779 = vshrl.u32 %v1708, 16
      %v1781 = vrot.slane %v1779, 4
      %v1782 = vor.u32 %v1781, %v1777
      %v1783 = vrot.slane %v1782, 4
      %v1785 = vshll.u32 %v1709, 16
      %v1787 = vrot.slane %v1785, 5
      %v1788 = vsel %vm300, %v1783, %v1787
      %v1790 = vshrl.u32 %v1710, 16
      %v1792 = vrot.slane %v1790, 4
      %v1793 = vshll.u32 %v1710, 16
      %v1795 = vrot.slane %v1793, 5
      %v1796 = vor.u32 %v1792, %v1795
      %v1797 = vrot.slane %v1796, 4
      %v1799 = vshll.u32 %v1711, 16
      %v1801 = vrot.slane %v1799, 5
      %v1802 = vsel %vm300, %v1797, %v1801
      %v1803 = vshrl.u32 %v1711, 16
      %v1805 = vrot.slane %v1803, 4
      %v1806 = vor.u32 %v1805, %v1801
      %v1807 = vrot.slane %v1806, 4
      %v1809 = vshll.u32 %v1712, 16
      %v1811 = vrot.slane %v1809, 5
      %v1812 = vsel %vm300, %v1807, %v1811
      %v1813 = vshrl.u32 %v1712, 16
      %v1815 = vrot.slane %v1813, 4
      %v1816 = vor.u32 %v1815, %v1811
      %v1817 = vrot.slane %v1816, 4
      %v1819 = vshll.u32 %v1713, 16
      %v1821 = vrot.slane %v1819, 5
      %v1822 = vsel %vm300, %v1817, %v1821
      %v1823 = vshrl.u32 %v1713, 16
      %v1825 = vrot.slane %v1823, 4
      %v1826 = vor.u32 %v1825, %v1821
      %v1827 = vrot.slane %v1826, 4
      %v1829 = vshll.u32 %v1714, 16
      %v1831 = vrot.slane %v1829, 5
      %v1832 = vsel %vm300, %v1827, %v1831
      %v1834 = vshrl.u32 %v1715, 16
      %v1836 = vrot.slane %v1834, 4
      %v1837 = vshll.u32 %v1715, 16
      %v1839 = vrot.slane %v1837, 5
      %v1840 = vor.u32 %v1836, %v1839
      %v1841 = vrot.slane %v1840, 4
      %v1843 = vshll.u32 %v1716, 16
      %v1845 = vrot.slane %v1843, 5
      %v1846 = vsel %vm300, %v1841, %v1845
      %v1847 = vshrl.u32 %v1716, 16
      %v1849 = vrot.slane %v1847, 4
      %v1850 = vor.u32 %v1849, %v1845
      %v1851 = vrot.slane %v1850, 4
      %v1853 = vshll.u32 %v1717, 16
      %v1855 = vrot.slane %v1853, 5
      %v1856 = vsel %vm300, %v1851, %v1855
      %v1857 = vshrl.u32 %v1717, 16
      %v1859 = vrot.slane %v1857, 4
      %v1860 = vor.u32 %v1859, %v1855
      %v1861 = vrot.slane %v1860, 4
      %v1863 = vshll.u32 %v1718, 16
      %v1865 = vrot.slane %v1863, 5
      %v1866 = vsel %vm300, %v1861, %v1865
      %v1867 = vshrl.u32 %v1718, 16
      %v1869 = vrot.slane %v1867, 4
      %v1870 = vor.u32 %v1869, %v1865
      %v1871 = vrot.slane %v1870, 4
      %v1873 = vshll.u32 %v1719, 16
      %v1875 = vrot.slane %v1873, 5
      %v1876 = vsel %vm300, %v1871, %v1875
      %v1878 = vshrl.u32 %v1720, 16
      %v1880 = vrot.slane %v1878, 4
      %v1881 = vshll.u32 %v1720, 16
      %v1883 = vrot.slane %v1881, 5
      %v1884 = vor.u32 %v1880, %v1883
      %v1885 = vrot.slane %v1884, 4
      %v1887 = vshll.u32 %v1721, 16
      %v1889 = vrot.slane %v1887, 5
      %v1890 = vsel %vm300, %v1885, %v1889
      %v1891 = vshrl.u32 %v1721, 16
      %v1893 = vrot.slane %v1891, 4
      %v1894 = vor.u32 %v1893, %v1889
      %v1895 = vrot.slane %v1894, 4
      %v1897 = vshll.u32 %v1722, 16
      %v1899 = vrot.slane %v1897, 5
      %v1900 = vsel %vm300, %v1895, %v1899
      %v1901 = vshrl.u32 %v1722, 16
      %v1903 = vrot.slane %v1901, 4
      %v1904 = vor.u32 %v1903, %v1899
      %v1905 = vrot.slane %v1904, 4
      %v1907 = vshll.u32 %v1723, 16
      %v1909 = vrot.slane %v1907, 5
      %v1910 = vsel %vm300, %v1905, %v1909
      %v1911 = vshrl.u32 %v1723, 16
      %v1913 = vrot.slane %v1911, 4
      %v1914 = vor.u32 %v1913, %v1909
      %v1915 = vrot.slane %v1914, 4
      %v1917 = vshll.u32 %v1724, 16
      %v1919 = vrot.slane %v1917, 5
      %v1920 = vsel %vm300, %v1915, %v1919
      %v1922 = vshrl.u32 %v1725, 16
      %v1924 = vrot.slane %v1922, 4
      %v1925 = vshll.u32 %v1725, 16
      %v1927 = vrot.slane %v1925, 5
      %v1928 = vor.u32 %v1924, %v1927
      %v1929 = vrot.slane %v1928, 4
      %v1931 = vshll.u32 %v1726, 16
      %v1933 = vrot.slane %v1931, 5
      %v1934 = vsel %vm300, %v1929, %v1933
      %v1935 = vshrl.u32 %v1726, 16
      %v1937 = vrot.slane %v1935, 4
      %v1938 = vor.u32 %v1937, %v1933
      %v1939 = vrot.slane %v1938, 4
      %v1941 = vshll.u32 %v1727, 16
      %v1943 = vrot.slane %v1941, 5
      %v1944 = vsel %vm300, %v1939, %v1943
      %v1945 = vshrl.u32 %v1727, 16
      %v1947 = vrot.slane %v1945, 4
      %v1948 = vor.u32 %v1947, %v1943
      %v1949 = vrot.slane %v1948, 4
      %v1951 = vshll.u32 %v1728, 16
      %v1953 = vrot.slane %v1951, 5
      %v1954 = vsel %vm300, %v1949, %v1953
      %v1955 = vshrl.u32 %v1728, 16
      %v1957 = vrot.slane %v1955, 4
      %v1958 = vor.u32 %v1957, %v1953
      %v1959 = vrot.slane %v1958, 4
      %v1961 = vshll.u32 %v1729, 16
      %v1963 = vrot.slane %v1961, 5
      %v1964 = vsel %vm300, %v1959, %v1963
      %v1966 = vshrl.u32 %v1730, 16
      %v1968 = vrot.slane %v1966, 4
      %v1969 = vshll.u32 %v1730, 16
      %v1971 = vrot.slane %v1969, 5
      %v1972 = vor.u32 %v1968, %v1971
      %v1973 = vrot.slane %v1972, 4
      %v1975 = vshll.u32 %v1731, 16
      %v1977 = vrot.slane %v1975, 5
      %v1978 = vsel %vm300, %v1973, %v1977
      %v1979 = vshrl.u32 %v1731, 16
      %v1981 = vrot.slane %v1979, 4
      %v1982 = vor.u32 %v1981, %v1977
      %v1983 = vrot.slane %v1982, 4
      %v1985 = vshll.u32 %v1732, 16
      %v1987 = vrot.slane %v1985, 5
      %v1988 = vsel %vm300, %v1983, %v1987
      %v1989 = vshrl.u32 %v1732, 16
      %v1991 = vrot.slane %v1989, 4
      %v1992 = vor.u32 %v1991, %v1987
      %v1993 = vrot.slane %v1992, 4
      %v1995 = vshll.u32 %v1733, 16
      %v1997 = vrot.slane %v1995, 5
      %v1998 = vsel %vm300, %v1993, %v1997
      %v1999 = vshrl.u32 %v1733, 16
      %v2001 = vrot.slane %v1999, 4
      %v2002 = vor.u32 %v2001, %v1997
      %v2003 = vrot.slane %v2002, 4
      %v2005 = vshll.u32 %v1734, 16
      %v2007 = vrot.slane %v2005, 5
      %v2008 = vsel %vm300, %v2003, %v2007
      %v2010 = vshrl.u32 %v1735, 16
      %v2012 = vrot.slane %v2010, 4
      %v2013 = vshll.u32 %v1735, 16
      %v2015 = vrot.slane %v2013, 5
      %v2016 = vor.u32 %v2012, %v2015
      %v2017 = vrot.slane %v2016, 4
      %v2019 = vshll.u32 %v1736, 16
      %v2021 = vrot.slane %v2019, 5
      %v2022 = vsel %vm300, %v2017, %v2021
      %v2023 = vshrl.u32 %v1736, 16
      %v2025 = vrot.slane %v2023, 4
      %v2026 = vor.u32 %v2025, %v2021
      %v2027 = vrot.slane %v2026, 4
      %v2029 = vshll.u32 %v1737, 16
      %v2031 = vrot.slane %v2029, 5
      %v2032 = vsel %vm300, %v2027, %v2031
      %v2033 = vshrl.u32 %v1737, 16
      %v2035 = vrot.slane %v2033, 4
      %v2036 = vor.u32 %v2035, %v2031
      %v2037 = vrot.slane %v2036, 4
      %v2039 = vshll.u32 %v1738, 16
      %v2041 = vrot.slane %v2039, 5
      %v2042 = vsel %vm300, %v2037, %v2041
      %v2043 = vshrl.u32 %v1738, 16
      %v2045 = vrot.slane %v2043, 4
      %v2046 = vor.u32 %v2045, %v2041
      %v2047 = vrot.slane %v2046, 4
      %v2049 = vshll.u32 %v1739, 16
      %v2051 = vrot.slane %v2049, 5
      %v2052 = vsel %vm300, %v2047, %v2051
      %v2054 = vshrl.u32 %v1740, 16
      %v2056 = vrot.slane %v2054, 4
      %v2057 = vshll.u32 %v1740, 16
      %v2059 = vrot.slane %v2057, 5
      %v2060 = vor.u32 %v2056, %v2059
      %v2061 = vrot.slane %v2060, 4
      %v2063 = vshll.u32 %v1741, 16
      %v2065 = vrot.slane %v2063, 5
      %v2066 = vsel %vm300, %v2061, %v2065
      %v2067 = vshrl.u32 %v1741, 16
      %v2069 = vrot.slane %v2067, 4
      %v2070 = vor.u32 %v2069, %v2065
      %v2071 = vrot.slane %v2070, 4
      %v2073 = vshll.u32 %v1742, 16
      %v2075 = vrot.slane %v2073, 5
      %v2076 = vsel %vm300, %v2071, %v2075
      %v2077 = vshrl.u32 %v1742, 16
      %v2079 = vrot.slane %v2077, 4
      %v2080 = vor.u32 %v2079, %v2075
      %v2081 = vrot.slane %v2080, 4
      %v2083 = vshll.u32 %v1743, 16
      %v2085 = vrot.slane %v2083, 5
      %v2086 = vsel %vm300, %v2081, %v2085
      %v2087 = vshrl.u32 %v1743, 16
      %v2089 = vrot.slane %v2087, 4
      %v2090 = vor.u32 %v2089, %v2085
      %v2091 = vrot.slane %v2090, 4
      %v2093 = vshll.u32 %v1744, 16
      %v2095 = vrot.slane %v2093, 5
      %v2096 = vsel %vm300, %v2091, %v2095
      %s2097 = scalar_lea.vmem %s1, 16
      %v2098 = vld [vmem:[%s2097] sm:$0xf]
      %v2099 = vunpack.c.l.b16 %v1758
      %v2100 = vunpack.c.l.b16 %v1768
      %v2101 = vunpack.c.l.b16 %v1778
      %v2102 = vunpack.c.l.b16 %v1788
      %v2103 = vunpack.c.l.b16 %v1802
      %v2104 = vunpack.c.l.b16 %v1812
      %v2105 = vunpack.c.l.b16 %v1822
      %v2106 = vunpack.c.l.b16 %v1832
      %v2107 = vunpack.c.l.b16 %v1846
      %v2108 = vunpack.c.l.b16 %v1856
      %v2109 = vunpack.c.l.b16 %v1866
      %v2110 = vunpack.c.l.b16 %v1876
      %v2111 = vunpack.c.l.b16 %v1890
      %v2112 = vunpack.c.l.b16 %v1900
      %v2113 = vunpack.c.l.b16 %v1910
      %v2114 = vunpack.c.l.b16 %v1920
      %v2115 = vunpack.c.l.b16 %v1934
      %v2116 = vunpack.c.l.b16 %v1944
      %v2117 = vunpack.c.l.b16 %v1954
      %v2118 = vunpack.c.l.b16 %v1964
      %v2119 = vunpack.c.l.b16 %v1978
      %v2120 = vunpack.c.l.b16 %v1988
      %v2121 = vunpack.c.l.b16 %v1998
      %v2122 = vunpack.c.l.b16 %v2008
      %v2123 = vunpack.c.l.b16 %v2022
      %v2124 = vunpack.c.l.b16 %v2032
      %v2125 = vunpack.c.l.b16 %v2042
      %v2126 = vunpack.c.l.b16 %v2052
      %v2127 = vunpack.c.l.b16 %v2066
      %v2128 = vunpack.c.l.b16 %v2076
      %v2129 = vunpack.c.l.b16 %v2086
      %v2130 = vunpack.c.l.b16 %v2096
      %v2131 = vpack.c.b16 %v2100, %v2099
      %v2132 = vpack.c.b16 %v2102, %v2101
      %v2133 = vpack.c.b16 %v2104, %v2103
      %v2134 = vpack.c.b16 %v2106, %v2105
      %v2135 = vpack.c.b16 %v2108, %v2107
      %v2136 = vpack.c.b16 %v2110, %v2109
      %v2137 = vpack.c.b16 %v2112, %v2111
      %v2138 = vpack.c.b16 %v2114, %v2113
      %v2139 = vpack.c.b16 %v2116, %v2115
      %v2140 = vpack.c.b16 %v2118, %v2117
      %v2141 = vpack.c.b16 %v2120, %v2119
      %v2142 = vpack.c.b16 %v2122, %v2121
      %v2143 = vpack.c.b16 %v2124, %v2123
      %v2144 = vpack.c.b16 %v2126, %v2125
      %v2145 = vpack.c.b16 %v2128, %v2127
      %v2146 = vpack.c.b16 %v2130, %v2129
      %v2148 = vsel %vm703, %v2131, 0
      %v2151 = vsel %vm703, %v2132, 0
      %v2154 = vsel %vm703, %v2133, 0
      %v2157 = vsel %vm703, %v2134, 0
      %v2160 = vsel %vm703, %v2135, 0
      %v2163 = vsel %vm703, %v2136, 0
      %v2166 = vsel %vm703, %v2137, 0
      %v2169 = vsel %vm703, %v2138, 0
      %v2172 = vsel %vm703, %v2139, 0
      %v2175 = vsel %vm703, %v2140, 0
      %v2178 = vsel %vm703, %v2141, 0
      %v2181 = vsel %vm703, %v2142, 0
      %v2184 = vsel %vm703, %v2143, 0
      %v2187 = vsel %vm703, %v2144, 0
      %v2190 = vsel %vm703, %v2145, 0
      %v2193 = vsel %vm703, %v2146, 0
      %v2196 = vsel %vm752, %v2098, 0
      %2198 = vmatpush.bf16.msra.mxu0 0
      %2199 = vmatpush.bf16.msra.mxu0 0
      %2200 = vmatpush.bf16.msra.mxu0 0
      %2201 = vmatpush.bf16.msra.mxu0 0
      %2202 = vmatpush.bf16.msra.mxu0 0
      %2203 = vmatpush.bf16.msra.mxu0 0
      %2204 = vmatpush.bf16.msra.mxu0 0
      %2205 = vmatpush.bf16.msra.mxu0 %v2196
      %2206 = vmatmul.bf16.gmra.mxu0 %v2148
      %v2207 = vpop.f32.mrf.mxu0
      %v2208 = vadd.f32 0.0, %v2207
      %v2209 = vpop.f32.mrf.mxu0
      %v2210 = vadd.f32 0.0, %v2209
      %2211 = vmatmul.bf16.gmra.mxu0 %v2151
      %v2212 = vpop.f32.mrf.mxu0
      %v2213 = vadd.f32 0.0, %v2212
      %v2214 = vpop.f32.mrf.mxu0
      %v2215 = vadd.f32 0.0, %v2214
      %2216 = vmatmul.bf16.gmra.mxu0 %v2154
      %v2217 = vpop.f32.mrf.mxu0
      %v2218 = vadd.f32 0.0, %v2217
      %v2219 = vpop.f32.mrf.mxu0
      %v2220 = vadd.f32 0.0, %v2219
      %2221 = vmatmul.bf16.gmra.mxu0 %v2157
      %v2222 = vpop.f32.mrf.mxu0
      %v2223 = vadd.f32 0.0, %v2222
      %v2224 = vpop.f32.mrf.mxu0
      %v2225 = vadd.f32 0.0, %v2224
      %2226 = vmatmul.bf16.gmra.mxu0 %v2160
      %v2227 = vpop.f32.mrf.mxu0
      %v2228 = vadd.f32 0.0, %v2227
      %v2229 = vpop.f32.mrf.mxu0
      %v2230 = vadd.f32 0.0, %v2229
      %2231 = vmatmul.bf16.gmra.mxu0 %v2163
      %v2232 = vpop.f32.mrf.mxu0
      %v2233 = vadd.f32 0.0, %v2232
      %v2234 = vpop.f32.mrf.mxu0
      %v2235 = vadd.f32 0.0, %v2234
      %2236 = vmatmul.bf16.gmra.mxu0 %v2166
      %v2237 = vpop.f32.mrf.mxu0
      %v2238 = vadd.f32 0.0, %v2237
      %v2239 = vpop.f32.mrf.mxu0
      %v2240 = vadd.f32 0.0, %v2239
      %2241 = vmatmul.bf16.gmra.mxu0 %v2169
      %v2242 = vpop.f32.mrf.mxu0
      %v2243 = vadd.f32 0.0, %v2242
      %v2244 = vpop.f32.mrf.mxu0
      %v2245 = vadd.f32 0.0, %v2244
      %2246 = vmatmul.bf16.gmra.mxu0 %v2172
      %v2247 = vpop.f32.mrf.mxu0
      %v2248 = vadd.f32 0.0, %v2247
      %v2249 = vpop.f32.mrf.mxu0
      %v2250 = vadd.f32 0.0, %v2249
      %2251 = vmatmul.bf16.gmra.mxu0 %v2175
      %v2252 = vpop.f32.mrf.mxu0
      %v2253 = vadd.f32 0.0, %v2252
      %v2254 = vpop.f32.mrf.mxu0
      %v2255 = vadd.f32 0.0, %v2254
      %2256 = vmatmul.bf16.gmra.mxu0 %v2178
      %v2257 = vpop.f32.mrf.mxu0
      %v2258 = vadd.f32 0.0, %v2257
      %v2259 = vpop.f32.mrf.mxu0
      %v2260 = vadd.f32 0.0, %v2259
      %2261 = vmatmul.bf16.gmra.mxu0 %v2181
      %v2262 = vpop.f32.mrf.mxu0
      %v2263 = vadd.f32 0.0, %v2262
      %v2264 = vpop.f32.mrf.mxu0
      %v2265 = vadd.f32 0.0, %v2264
      %2266 = vmatmul.bf16.gmra.mxu0 %v2184
      %v2267 = vpop.f32.mrf.mxu0
      %v2268 = vadd.f32 0.0, %v2267
      %v2269 = vpop.f32.mrf.mxu0
      %v2270 = vadd.f32 0.0, %v2269
      %2271 = vmatmul.bf16.gmra.mxu0 %v2187
      %v2272 = vpop.f32.mrf.mxu0
      %v2273 = vadd.f32 0.0, %v2272
      %v2274 = vpop.f32.mrf.mxu0
      %v2275 = vadd.f32 0.0, %v2274
      %2276 = vmatmul.bf16.gmra.mxu0 %v2190
      %v2277 = vpop.f32.mrf.mxu0
      %v2278 = vadd.f32 0.0, %v2277
      %v2279 = vpop.f32.mrf.mxu0
      %v2280 = vadd.f32 0.0, %v2279
      %2281 = vmatmul.bf16.gmra.mxu0 %v2193
      %v2282 = vpop.f32.mrf.mxu0
      %v2283 = vadd.f32 0.0, %v2282
      %v2284 = vpop.f32.mrf.mxu0
      %v2285 = vadd.f32 0.0, %v2284
      %2286 = vdwg.mxu0
      %v2287 = vadd.f32 %v1673, %v2208
      %v2288 = vadd.f32 %v1674, %v2210
      %v2289 = vadd.f32 %v1675, %v2213
      %v2290 = vadd.f32 %v1676, %v2215
      %v2291 = vadd.f32 %v1677, %v2218
      %v2292 = vadd.f32 %v1678, %v2220
      %v2293 = vadd.f32 %v1679, %v2223
      %v2294 = vadd.f32 %v1680, %v2225
      %v2295 = vadd.f32 %v1681, %v2228
      %v2296 = vadd.f32 %v1682, %v2230
      %v2297 = vadd.f32 %v1683, %v2233
      %v2298 = vadd.f32 %v1684, %v2235
      %v2299 = vadd.f32 %v1685, %v2238
      %v2300 = vadd.f32 %v1686, %v2240
      %v2301 = vadd.f32 %v1687, %v2243
      %v2302 = vadd.f32 %v1688, %v2245
      %v2303 = vadd.f32 %v1689, %v2248
      %v2304 = vadd.f32 %v1690, %v2250
      %v2305 = vadd.f32 %v1691, %v2253
      %v2306 = vadd.f32 %v1692, %v2255
      %v2307 = vadd.f32 %v1693, %v2258
      %v2308 = vadd.f32 %v1694, %v2260
      %v2309 = vadd.f32 %v1695, %v2263
      %v2310 = vadd.f32 %v1696, %v2265
      %v2311 = vadd.f32 %v1697, %v2268
      %v2312 = vadd.f32 %v1698, %v2270
      %v2313 = vadd.f32 %v1699, %v2273
      %v2314 = vadd.f32 %v1700, %v2275
      %v2315 = vadd.f32 %v1701, %v2278
      %v2316 = vadd.f32 %v1702, %v2280
      %v2317 = vadd.f32 %v1703, %v2283
      %v2318 = vadd.f32 %v1704, %v2285
      %v2319 = vld [vmem:[%s1418] sm:$0xe]
      %v2320 = vld [vmem:[%s1418 + $0x14] sm:$0xe]
      %v2321 = vld [vmem:[%s1418 + $0x28] sm:$0xe]
      %v2322 = vld [vmem:[%s1418 + $0x3c] sm:$0xe]
      %v2323 = vld [vmem:[%s1418 + $0x50] sm:$0xe]
      %v2324 = vld [vmem:[%s1418 + $0x64] sm:$0xe]
      %v2325 = vld [vmem:[%s1418 + $0x78] sm:$0xe]
      %v2326 = vld [vmem:[%s1418 + $0x8c] sm:$0xe]
      %v2367 = vrot.slane %v2319, 5
      %v2368 = vrot.slane %v2367, 4
      %v2369 = vrot.slane %v1706, 5
      %v2370 = vsel %vm1091, %v2368, %v2369
      %v2371 = vrot.slane %v2369, 4
      %v2372 = vrot.slane %v1707, 5
      %v2373 = vsel %vm1091, %v2371, %v2372
      %v2374 = vrot.slane %v2372, 4
      %v2375 = vrot.slane %v1708, 5
      %v2376 = vsel %vm1091, %v2374, %v2375
      %v2377 = vrot.slane %v2375, 4
      %v2378 = vrot.slane %v1709, 5
      %v2379 = vsel %vm1091, %v2377, %v2378
      %v2380 = vrot.slane %v2320, 5
      %v2381 = vrot.slane %v2380, 4
      %v2382 = vrot.slane %v1711, 5
      %v2383 = vsel %vm1091, %v2381, %v2382
      %v2384 = vrot.slane %v2382, 4
      %v2385 = vrot.slane %v1712, 5
      %v2386 = vsel %vm1091, %v2384, %v2385
      %v2387 = vrot.slane %v2385, 4
      %v2388 = vrot.slane %v1713, 5
      %v2389 = vsel %vm1091, %v2387, %v2388
      %v2390 = vrot.slane %v2388, 4
      %v2391 = vrot.slane %v1714, 5
      %v2392 = vsel %vm1091, %v2390, %v2391
      %v2393 = vrot.slane %v2321, 5
      %v2394 = vrot.slane %v2393, 4
      %v2395 = vrot.slane %v1716, 5
      %v2396 = vsel %vm1091, %v2394, %v2395
      %v2397 = vrot.slane %v2395, 4
      %v2398 = vrot.slane %v1717, 5
      %v2399 = vsel %vm1091, %v2397, %v2398
      %v2400 = vrot.slane %v2398, 4
      %v2401 = vrot.slane %v1718, 5
      %v2402 = vsel %vm1091, %v2400, %v2401
      %v2403 = vrot.slane %v2401, 4
      %v2404 = vrot.slane %v1719, 5
      %v2405 = vsel %vm1091, %v2403, %v2404
      %v2406 = vrot.slane %v2322, 5
      %v2407 = vrot.slane %v2406, 4
      %v2408 = vrot.slane %v1721, 5
      %v2409 = vsel %vm1091, %v2407, %v2408
      %v2410 = vrot.slane %v2408, 4
      %v2411 = vrot.slane %v1722, 5
      %v2412 = vsel %vm1091, %v2410, %v2411
      %v2413 = vrot.slane %v2411, 4
      %v2414 = vrot.slane %v1723, 5
      %v2415 = vsel %vm1091, %v2413, %v2414
      %v2416 = vrot.slane %v2414, 4
      %v2417 = vrot.slane %v1724, 5
      %v2418 = vsel %vm1091, %v2416, %v2417
      %v2419 = vrot.slane %v2323, 5
      %v2420 = vrot.slane %v2419, 4
      %v2421 = vrot.slane %v1726, 5
      %v2422 = vsel %vm1091, %v2420, %v2421
      %v2423 = vrot.slane %v2421, 4
      %v2424 = vrot.slane %v1727, 5
      %v2425 = vsel %vm1091, %v2423, %v2424
      %v2426 = vrot.slane %v2424, 4
      %v2427 = vrot.slane %v1728, 5
      %v2428 = vsel %vm1091, %v2426, %v2427
      %v2429 = vrot.slane %v2427, 4
      %v2430 = vrot.slane %v1729, 5
      %v2431 = vsel %vm1091, %v2429, %v2430
      %v2432 = vrot.slane %v2324, 5
      %v2433 = vrot.slane %v2432, 4
      %v2434 = vrot.slane %v1731, 5
      %v2435 = vsel %vm1091, %v2433, %v2434
      %v2436 = vrot.slane %v2434, 4
      %v2437 = vrot.slane %v1732, 5
      %v2438 = vsel %vm1091, %v2436, %v2437
      %v2439 = vrot.slane %v2437, 4
      %v2440 = vrot.slane %v1733, 5
      %v2441 = vsel %vm1091, %v2439, %v2440
      %v2442 = vrot.slane %v2440, 4
      %v2443 = vrot.slane %v1734, 5
      %v2444 = vsel %vm1091, %v2442, %v2443
      %v2445 = vrot.slane %v2325, 5
      %v2446 = vrot.slane %v2445, 4
      %v2447 = vrot.slane %v1736, 5
      %v2448 = vsel %vm1091, %v2446, %v2447
      %v2449 = vrot.slane %v2447, 4
      %v2450 = vrot.slane %v1737, 5
      %v2451 = vsel %vm1091, %v2449, %v2450
      %v2452 = vrot.slane %v2450, 4
      %v2453 = vrot.slane %v1738, 5
      %v2454 = vsel %vm1091, %v2452, %v2453
      %v2455 = vrot.slane %v2453, 4
      %v2456 = vrot.slane %v1739, 5
      %v2457 = vsel %vm1091, %v2455, %v2456
      %v2458 = vrot.slane %v2326, 5
      %v2459 = vrot.slane %v2458, 4
      %v2460 = vrot.slane %v1741, 5
      %v2461 = vsel %vm1091, %v2459, %v2460
      %v2462 = vrot.slane %v2460, 4
      %v2463 = vrot.slane %v1742, 5
      %v2464 = vsel %vm1091, %v2462, %v2463
      %v2465 = vrot.slane %v2463, 4
      %v2466 = vrot.slane %v1743, 5
      %v2467 = vsel %vm1091, %v2465, %v2466
      %v2468 = vrot.slane %v2466, 4
      %v2469 = vrot.slane %v1744, 5
      %v2470 = vsel %vm1091, %v2468, %v2469
      %s2471 = scalar_lea.vmem %s1, 20
      %v2472 = vld [vmem:[%s2471] sm:$0xf]
      %v2473 = vunpack.c.l.b16 %v2370
      %v2474 = vunpack.c.l.b16 %v2373
      %v2475 = vunpack.c.l.b16 %v2376
      %v2476 = vunpack.c.l.b16 %v2379
      %v2477 = vunpack.c.l.b16 %v2383
      %v2478 = vunpack.c.l.b16 %v2386
      %v2479 = vunpack.c.l.b16 %v2389
      %v2480 = vunpack.c.l.b16 %v2392
      %v2481 = vunpack.c.l.b16 %v2396
      %v2482 = vunpack.c.l.b16 %v2399
      %v2483 = vunpack.c.l.b16 %v2402
      %v2484 = vunpack.c.l.b16 %v2405
      %v2485 = vunpack.c.l.b16 %v2409
      %v2486 = vunpack.c.l.b16 %v2412
      %v2487 = vunpack.c.l.b16 %v2415
      %v2488 = vunpack.c.l.b16 %v2418
      %v2489 = vunpack.c.l.b16 %v2422
      %v2490 = vunpack.c.l.b16 %v2425
      %v2491 = vunpack.c.l.b16 %v2428
      %v2492 = vunpack.c.l.b16 %v2431
      %v2493 = vunpack.c.l.b16 %v2435
      %v2494 = vunpack.c.l.b16 %v2438
      %v2495 = vunpack.c.l.b16 %v2441
      %v2496 = vunpack.c.l.b16 %v2444
      %v2497 = vunpack.c.l.b16 %v2448
      %v2498 = vunpack.c.l.b16 %v2451
      %v2499 = vunpack.c.l.b16 %v2454
      %v2500 = vunpack.c.l.b16 %v2457
      %v2501 = vunpack.c.l.b16 %v2461
      %v2502 = vunpack.c.l.b16 %v2464
      %v2503 = vunpack.c.l.b16 %v2467
      %v2504 = vunpack.c.l.b16 %v2470
      %v2505 = vpack.c.b16 %v2474, %v2473
      %v2506 = vpack.c.b16 %v2476, %v2475
      %v2507 = vpack.c.b16 %v2478, %v2477
      %v2508 = vpack.c.b16 %v2480, %v2479
      %v2509 = vpack.c.b16 %v2482, %v2481
      %v2510 = vpack.c.b16 %v2484, %v2483
      %v2511 = vpack.c.b16 %v2486, %v2485
      %v2512 = vpack.c.b16 %v2488, %v2487
      %v2513 = vpack.c.b16 %v2490, %v2489
      %v2514 = vpack.c.b16 %v2492, %v2491
      %v2515 = vpack.c.b16 %v2494, %v2493
      %v2516 = vpack.c.b16 %v2496, %v2495
      %v2517 = vpack.c.b16 %v2498, %v2497
      %v2518 = vpack.c.b16 %v2500, %v2499
      %v2519 = vpack.c.b16 %v2502, %v2501
      %v2520 = vpack.c.b16 %v2504, %v2503
      %v2522 = vsel %vm703, %v2505, 0
      %v2525 = vsel %vm703, %v2506, 0
      %v2528 = vsel %vm703, %v2507, 0
      %v2531 = vsel %vm703, %v2508, 0
      %v2534 = vsel %vm703, %v2509, 0
      %v2537 = vsel %vm703, %v2510, 0
      %v2540 = vsel %vm703, %v2511, 0
      %v2543 = vsel %vm703, %v2512, 0
      %v2546 = vsel %vm703, %v2513, 0
      %v2549 = vsel %vm703, %v2514, 0
      %v2552 = vsel %vm703, %v2515, 0
      %v2555 = vsel %vm703, %v2516, 0
      %v2558 = vsel %vm703, %v2517, 0
      %v2561 = vsel %vm703, %v2518, 0
      %v2564 = vsel %vm703, %v2519, 0
      %v2567 = vsel %vm703, %v2520, 0
      %v2570 = vsel %vm752, %v2472, 0
      %2572 = vmatpush.bf16.msra.mxu0 0
      %2573 = vmatpush.bf16.msra.mxu0 0
      %2574 = vmatpush.bf16.msra.mxu0 0
      %2575 = vmatpush.bf16.msra.mxu0 0
      %2576 = vmatpush.bf16.msra.mxu0 0
      %2577 = vmatpush.bf16.msra.mxu0 0
      %2578 = vmatpush.bf16.msra.mxu0 0
      %2579 = vmatpush.bf16.msra.mxu0 %v2570
      %2580 = vmatmul.bf16.gmra.mxu0 %v2522
      %v2581 = vpop.f32.mrf.mxu0
      %v2582 = vadd.f32 0.0, %v2581
      %v2583 = vpop.f32.mrf.mxu0
      %v2584 = vadd.f32 0.0, %v2583
      %2585 = vmatmul.bf16.gmra.mxu0 %v2525
      %v2586 = vpop.f32.mrf.mxu0
      %v2587 = vadd.f32 0.0, %v2586
      %v2588 = vpop.f32.mrf.mxu0
      %v2589 = vadd.f32 0.0, %v2588
      %2590 = vmatmul.bf16.gmra.mxu0 %v2528
      %v2591 = vpop.f32.mrf.mxu0
      %v2592 = vadd.f32 0.0, %v2591
      %v2593 = vpop.f32.mrf.mxu0
      %v2594 = vadd.f32 0.0, %v2593
      %2595 = vmatmul.bf16.gmra.mxu0 %v2531
      %v2596 = vpop.f32.mrf.mxu0
      %v2597 = vadd.f32 0.0, %v2596
      %v2598 = vpop.f32.mrf.mxu0
      %v2599 = vadd.f32 0.0, %v2598
      %2600 = vmatmul.bf16.gmra.mxu0 %v2534
      %v2601 = vpop.f32.mrf.mxu0
      %v2602 = vadd.f32 0.0, %v2601
      %v2603 = vpop.f32.mrf.mxu0
      %v2604 = vadd.f32 0.0, %v2603
      %2605 = vmatmul.bf16.gmra.mxu0 %v2537
      %v2606 = vpop.f32.mrf.mxu0
      %v2607 = vadd.f32 0.0, %v2606
      %v2608 = vpop.f32.mrf.mxu0
      %v2609 = vadd.f32 0.0, %v2608
      %2610 = vmatmul.bf16.gmra.mxu0 %v2540
      %v2611 = vpop.f32.mrf.mxu0
      %v2612 = vadd.f32 0.0, %v2611
      %v2613 = vpop.f32.mrf.mxu0
      %v2614 = vadd.f32 0.0, %v2613
      %2615 = vmatmul.bf16.gmra.mxu0 %v2543
      %v2616 = vpop.f32.mrf.mxu0
      %v2617 = vadd.f32 0.0, %v2616
      %v2618 = vpop.f32.mrf.mxu0
      %v2619 = vadd.f32 0.0, %v2618
      %2620 = vmatmul.bf16.gmra.mxu0 %v2546
      %v2621 = vpop.f32.mrf.mxu0
      %v2622 = vadd.f32 0.0, %v2621
      %v2623 = vpop.f32.mrf.mxu0
      %v2624 = vadd.f32 0.0, %v2623
      %2625 = vmatmul.bf16.gmra.mxu0 %v2549
      %v2626 = vpop.f32.mrf.mxu0
      %v2627 = vadd.f32 0.0, %v2626
      %v2628 = vpop.f32.mrf.mxu0
      %v2629 = vadd.f32 0.0, %v2628
      %2630 = vmatmul.bf16.gmra.mxu0 %v2552
      %v2631 = vpop.f32.mrf.mxu0
      %v2632 = vadd.f32 0.0, %v2631
      %v2633 = vpop.f32.mrf.mxu0
      %v2634 = vadd.f32 0.0, %v2633
      %2635 = vmatmul.bf16.gmra.mxu0 %v2555
      %v2636 = vpop.f32.mrf.mxu0
      %v2637 = vadd.f32 0.0, %v2636
      %v2638 = vpop.f32.mrf.mxu0
      %v2639 = vadd.f32 0.0, %v2638
      %2640 = vmatmul.bf16.gmra.mxu0 %v2558
      %v2641 = vpop.f32.mrf.mxu0
      %v2642 = vadd.f32 0.0, %v2641
      %v2643 = vpop.f32.mrf.mxu0
      %v2644 = vadd.f32 0.0, %v2643
      %2645 = vmatmul.bf16.gmra.mxu0 %v2561
      %v2646 = vpop.f32.mrf.mxu0
      %v2647 = vadd.f32 0.0, %v2646
      %v2648 = vpop.f32.mrf.mxu0
      %v2649 = vadd.f32 0.0, %v2648
      %2650 = vmatmul.bf16.gmra.mxu0 %v2564
      %v2651 = vpop.f32.mrf.mxu0
      %v2652 = vadd.f32 0.0, %v2651
      %v2653 = vpop.f32.mrf.mxu0
      %v2654 = vadd.f32 0.0, %v2653
      %2655 = vmatmul.bf16.gmra.mxu0 %v2567
      %v2656 = vpop.f32.mrf.mxu0
      %v2657 = vadd.f32 0.0, %v2656
      %v2658 = vpop.f32.mrf.mxu0
      %v2659 = vadd.f32 0.0, %v2658
      %2660 = vdwg.mxu0
      %v2661 = vadd.f32 %v2287, %v2582
      %v2662 = vadd.f32 %v2288, %v2584
      %v2663 = vadd.f32 %v2289, %v2587
      %v2664 = vadd.f32 %v2290, %v2589
      %v2665 = vadd.f32 %v2291, %v2592
      %v2666 = vadd.f32 %v2292, %v2594
      %v2667 = vadd.f32 %v2293, %v2597
      %v2668 = vadd.f32 %v2294, %v2599
      %v2669 = vadd.f32 %v2295, %v2602
      %v2670 = vadd.f32 %v2296, %v2604
      %v2671 = vadd.f32 %v2297, %v2607
      %v2672 = vadd.f32 %v2298, %v2609
      %v2673 = vadd.f32 %v2299, %v2612
      %v2674 = vadd.f32 %v2300, %v2614
      %v2675 = vadd.f32 %v2301, %v2617
      %v2676 = vadd.f32 %v2302, %v2619
      %v2677 = vadd.f32 %v2303, %v2622
      %v2678 = vadd.f32 %v2304, %v2624
      %v2679 = vadd.f32 %v2305, %v2627
      %v2680 = vadd.f32 %v2306, %v2629
      %v2681 = vadd.f32 %v2307, %v2632
      %v2682 = vadd.f32 %v2308, %v2634
      %v2683 = vadd.f32 %v2309, %v2637
      %v2684 = vadd.f32 %v2310, %v2639
      %v2685 = vadd.f32 %v2311, %v2642
      %v2686 = vadd.f32 %v2312, %v2644
      %v2687 = vadd.f32 %v2313, %v2647
      %v2688 = vadd.f32 %v2314, %v2649
      %v2689 = vadd.f32 %v2315, %v2652
      %v2690 = vadd.f32 %v2316, %v2654
      %v2691 = vadd.f32 %v2317, %v2657
      %v2692 = vadd.f32 %v2318, %v2659
      %s2693 = scalar_lea.vmem %s237, 40
      %v2694 = vld [vmem:[%s2693] sm:$0xf]
      %v2695 = vld [vmem:[%s2693 + $0x4] sm:$0xf]
      %v2696 = vld [vmem:[%s2693 + $0x8] sm:$0xf]
      %v2697 = vld [vmem:[%s2693 + $0xc] sm:$0xf]
      %v2698 = vld [vmem:[%s2693 + $0x14] sm:$0xf]
      %v2699 = vld [vmem:[%s2693 + $0x18] sm:$0xf]
      %v2700 = vld [vmem:[%s2693 + $0x1c] sm:$0xf]
      %v2701 = vld [vmem:[%s2693 + $0x20] sm:$0xf]
      %v2702 = vld [vmem:[%s2693 + $0x28] sm:$0xf]
      %v2703 = vld [vmem:[%s2693 + $0x2c] sm:$0xf]
      %v2704 = vld [vmem:[%s2693 + $0x30] sm:$0xf]
      %v2705 = vld [vmem:[%s2693 + $0x34] sm:$0xf]
      %v2706 = vld [vmem:[%s2693 + $0x3c] sm:$0xf]
      %v2707 = vld [vmem:[%s2693 + $0x40] sm:$0xf]
      %v2708 = vld [vmem:[%s2693 + $0x44] sm:$0xf]
      %v2709 = vld [vmem:[%s2693 + $0x48] sm:$0xf]
      %v2710 = vld [vmem:[%s2693 + $0x50] sm:$0xf]
      %v2711 = vld [vmem:[%s2693 + $0x54] sm:$0xf]
      %v2712 = vld [vmem:[%s2693 + $0x58] sm:$0xf]
      %v2713 = vld [vmem:[%s2693 + $0x5c] sm:$0xf]
      %v2714 = vld [vmem:[%s2693 + $0x64] sm:$0xf]
      %v2715 = vld [vmem:[%s2693 + $0x68] sm:$0xf]
      %v2716 = vld [vmem:[%s2693 + $0x6c] sm:$0xf]
      %v2717 = vld [vmem:[%s2693 + $0x70] sm:$0xf]
      %v2718 = vld [vmem:[%s2693 + $0x78] sm:$0xf]
      %v2719 = vld [vmem:[%s2693 + $0x7c] sm:$0xf]
      %v2720 = vld [vmem:[%s2693 + $0x80] sm:$0xf]
      %v2721 = vld [vmem:[%s2693 + $0x84] sm:$0xf]
      %v2722 = vld [vmem:[%s2693 + $0x8c] sm:$0xf]
      %v2723 = vld [vmem:[%s2693 + $0x90] sm:$0xf]
      %v2724 = vld [vmem:[%s2693 + $0x94] sm:$0xf]
      %v2725 = vld [vmem:[%s2693 + $0x98] sm:$0xf]
      %s2726 = scalar_lea.vmem %s1, 24
      %v2727 = vld [vmem:[%s2726] sm:$0xf]
      %v2760 = vunpack.c.l.b16 %v2694
      %v2761 = vunpack.c.l.b16 %v2695
      %v2762 = vunpack.c.l.b16 %v2696
      %v2763 = vunpack.c.l.b16 %v2697
      %v2764 = vunpack.c.l.b16 %v2698
      %v2765 = vunpack.c.l.b16 %v2699
      %v2766 = vunpack.c.l.b16 %v2700
      %v2767 = vunpack.c.l.b16 %v2701
      %v2768 = vunpack.c.l.b16 %v2702
      %v2769 = vunpack.c.l.b16 %v2703
      %v2770 = vunpack.c.l.b16 %v2704
      %v2771 = vunpack.c.l.b16 %v2705
      %v2772 = vunpack.c.l.b16 %v2706
      %v2773 = vunpack.c.l.b16 %v2707
      %v2774 = vunpack.c.l.b16 %v2708
      %v2775 = vunpack.c.l.b16 %v2709
      %v2776 = vunpack.c.l.b16 %v2710
      %v2777 = vunpack.c.l.b16 %v2711
      %v2778 = vunpack.c.l.b16 %v2712
      %v2779 = vunpack.c.l.b16 %v2713
      %v2780 = vunpack.c.l.b16 %v2714
      %v2781 = vunpack.c.l.b16 %v2715
      %v2782 = vunpack.c.l.b16 %v2716
      %v2783 = vunpack.c.l.b16 %v2717
      %v2784 = vunpack.c.l.b16 %v2718
      %v2785 = vunpack.c.l.b16 %v2719
      %v2786 = vunpack.c.l.b16 %v2720
      %v2787 = vunpack.c.l.b16 %v2721
      %v2788 = vunpack.c.l.b16 %v2722
      %v2789 = vunpack.c.l.b16 %v2723
      %v2790 = vunpack.c.l.b16 %v2724
      %v2791 = vunpack.c.l.b16 %v2725
      %v2792 = vpack.c.b16 %v2761, %v2760
      %v2793 = vpack.c.b16 %v2763, %v2762
      %v2794 = vpack.c.b16 %v2765, %v2764
      %v2795 = vpack.c.b16 %v2767, %v2766
      %v2796 = vpack.c.b16 %v2769, %v2768
      %v2797 = vpack.c.b16 %v2771, %v2770
      %v2798 = vpack.c.b16 %v2773, %v2772
      %v2799 = vpack.c.b16 %v2775, %v2774
      %v2800 = vpack.c.b16 %v2777, %v2776
      %v2801 = vpack.c.b16 %v2779, %v2778
      %v2802 = vpack.c.b16 %v2781, %v2780
      %v2803 = vpack.c.b16 %v2783, %v2782
      %v2804 = vpack.c.b16 %v2785, %v2784
      %v2805 = vpack.c.b16 %v2787, %v2786
      %v2806 = vpack.c.b16 %v2789, %v2788
      %v2807 = vpack.c.b16 %v2791, %v2790
      %v2809 = vsel %vm703, %v2792, 0
      %v2812 = vsel %vm703, %v2793, 0
      %v2815 = vsel %vm703, %v2794, 0
      %v2818 = vsel %vm703, %v2795, 0
      %v2821 = vsel %vm703, %v2796, 0
      %v2824 = vsel %vm703, %v2797, 0
      %v2827 = vsel %vm703, %v2798, 0
      %v2830 = vsel %vm703, %v2799, 0
      %v2833 = vsel %vm703, %v2800, 0
      %v2836 = vsel %vm703, %v2801, 0
      %v2839 = vsel %vm703, %v2802, 0
      %v2842 = vsel %vm703, %v2803, 0
      %v2845 = vsel %vm703, %v2804, 0
      %v2848 = vsel %vm703, %v2805, 0
      %v2851 = vsel %vm703, %v2806, 0
      %v2854 = vsel %vm703, %v2807, 0
      %v2857 = vsel %vm752, %v2727, 0
      %2859 = vmatpush.bf16.msra.mxu0 0
      %2860 = vmatpush.bf16.msra.mxu0 0
      %2861 = vmatpush.bf16.msra.mxu0 0
      %2862 = vmatpush.bf16.msra.mxu0 0
      %2863 = vmatpush.bf16.msra.mxu0 0
      %2864 = vmatpush.bf16.msra.mxu0 0
      %2865 = vmatpush.bf16.msra.mxu0 0
      %2866 = vmatpush.bf16.msra.mxu0 %v2857
      %2867 = vmatmul.bf16.gmra.mxu0 %v2809
      %v2868 = vpop.f32.mrf.mxu0
      %v2869 = vadd.f32 0.0, %v2868
      %v2870 = vpop.f32.mrf.mxu0
      %v2871 = vadd.f32 0.0, %v2870
      %2872 = vmatmul.bf16.gmra.mxu0 %v2812
      %v2873 = vpop.f32.mrf.mxu0
      %v2874 = vadd.f32 0.0, %v2873
      %v2875 = vpop.f32.mrf.mxu0
      %v2876 = vadd.f32 0.0, %v2875
      %2877 = vmatmul.bf16.gmra.mxu0 %v2815
      %v2878 = vpop.f32.mrf.mxu0
      %v2879 = vadd.f32 0.0, %v2878
      %v2880 = vpop.f32.mrf.mxu0
      %v2881 = vadd.f32 0.0, %v2880
      %2882 = vmatmul.bf16.gmra.mxu0 %v2818
      %v2883 = vpop.f32.mrf.mxu0
      %v2884 = vadd.f32 0.0, %v2883
      %v2885 = vpop.f32.mrf.mxu0
      %v2886 = vadd.f32 0.0, %v2885
      %2887 = vmatmul.bf16.gmra.mxu0 %v2821
      %v2888 = vpop.f32.mrf.mxu0
      %v2889 = vadd.f32 0.0, %v2888
      %v2890 = vpop.f32.mrf.mxu0
      %v2891 = vadd.f32 0.0, %v2890
      %2892 = vmatmul.bf16.gmra.mxu0 %v2824
      %v2893 = vpop.f32.mrf.mxu0
      %v2894 = vadd.f32 0.0, %v2893
      %v2895 = vpop.f32.mrf.mxu0
      %v2896 = vadd.f32 0.0, %v2895
      %2897 = vmatmul.bf16.gmra.mxu0 %v2827
      %v2898 = vpop.f32.mrf.mxu0
      %v2899 = vadd.f32 0.0, %v2898
      %v2900 = vpop.f32.mrf.mxu0
      %v2901 = vadd.f32 0.0, %v2900
      %2902 = vmatmul.bf16.gmra.mxu0 %v2830
      %v2903 = vpop.f32.mrf.mxu0
      %v2904 = vadd.f32 0.0, %v2903
      %v2905 = vpop.f32.mrf.mxu0
      %v2906 = vadd.f32 0.0, %v2905
      %2907 = vmatmul.bf16.gmra.mxu0 %v2833
      %v2908 = vpop.f32.mrf.mxu0
      %v2909 = vadd.f32 0.0, %v2908
      %v2910 = vpop.f32.mrf.mxu0
      %v2911 = vadd.f32 0.0, %v2910
      %2912 = vmatmul.bf16.gmra.mxu0 %v2836
      %v2913 = vpop.f32.mrf.mxu0
      %v2914 = vadd.f32 0.0, %v2913
      %v2915 = vpop.f32.mrf.mxu0
      %v2916 = vadd.f32 0.0, %v2915
      %2917 = vmatmul.bf16.gmra.mxu0 %v2839
      %v2918 = vpop.f32.mrf.mxu0
      %v2919 = vadd.f32 0.0, %v2918
      %v2920 = vpop.f32.mrf.mxu0
      %v2921 = vadd.f32 0.0, %v2920
      %2922 = vmatmul.bf16.gmra.mxu0 %v2842
      %v2923 = vpop.f32.mrf.mxu0
      %v2924 = vadd.f32 0.0, %v2923
      %v2925 = vpop.f32.mrf.mxu0
      %v2926 = vadd.f32 0.0, %v2925
      %2927 = vmatmul.bf16.gmra.mxu0 %v2845
      %v2928 = vpop.f32.mrf.mxu0
      %v2929 = vadd.f32 0.0, %v2928
      %v2930 = vpop.f32.mrf.mxu0
      %v2931 = vadd.f32 0.0, %v2930
      %2932 = vmatmul.bf16.gmra.mxu0 %v2848
      %v2933 = vpop.f32.mrf.mxu0
      %v2934 = vadd.f32 0.0, %v2933
      %v2935 = vpop.f32.mrf.mxu0
      %v2936 = vadd.f32 0.0, %v2935
      %2937 = vmatmul.bf16.gmra.mxu0 %v2851
      %v2938 = vpop.f32.mrf.mxu0
      %v2939 = vadd.f32 0.0, %v2938
      %v2940 = vpop.f32.mrf.mxu0
      %v2941 = vadd.f32 0.0, %v2940
      %2942 = vmatmul.bf16.gmra.mxu0 %v2854
      %v2943 = vpop.f32.mrf.mxu0
      %v2944 = vadd.f32 0.0, %v2943
      %v2945 = vpop.f32.mrf.mxu0
      %v2946 = vadd.f32 0.0, %v2945
      %2947 = vdwg.mxu0
      %v2948 = vadd.f32 %v2661, %v2869
      %v2949 = vadd.f32 %v2662, %v2871
      %v2950 = vadd.f32 %v2663, %v2874
      %v2951 = vadd.f32 %v2664, %v2876
      %v2952 = vadd.f32 %v2665, %v2879
      %v2953 = vadd.f32 %v2666, %v2881
      %v2954 = vadd.f32 %v2667, %v2884
      %v2955 = vadd.f32 %v2668, %v2886
      %v2956 = vadd.f32 %v2669, %v2889
      %v2957 = vadd.f32 %v2670, %v2891
      %v2958 = vadd.f32 %v2671, %v2894
      %v2959 = vadd.f32 %v2672, %v2896
      %v2960 = vadd.f32 %v2673, %v2899
      %v2961 = vadd.f32 %v2674, %v2901
      %v2962 = vadd.f32 %v2675, %v2904
      %v2963 = vadd.f32 %v2676, %v2906
      %v2964 = vadd.f32 %v2677, %v2909
      %v2965 = vadd.f32 %v2678, %v2911
      %v2966 = vadd.f32 %v2679, %v2914
      %v2967 = vadd.f32 %v2680, %v2916
      %v2968 = vadd.f32 %v2681, %v2919
      %v2969 = vadd.f32 %v2682, %v2921
      %v2970 = vadd.f32 %v2683, %v2924
      %v2971 = vadd.f32 %v2684, %v2926
      %v2972 = vadd.f32 %v2685, %v2929
      %v2973 = vadd.f32 %v2686, %v2931
      %v2974 = vadd.f32 %v2687, %v2934
      %v2975 = vadd.f32 %v2688, %v2936
      %v2976 = vadd.f32 %v2689, %v2939
      %v2977 = vadd.f32 %v2690, %v2941
      %v2978 = vadd.f32 %v2691, %v2944
      %v2979 = vadd.f32 %v2692, %v2946
      %v2980 = vld [vmem:[%s2693] sm:$0xf]
      %v2981 = vld [vmem:[%s2693 + $0x4] sm:$0xf]
      %v2982 = vld [vmem:[%s2693 + $0x8] sm:$0xf]
      %v2983 = vld [vmem:[%s2693 + $0xc] sm:$0xf]
      %v2984 = vld [vmem:[%s2693 + $0x10] sm:$0x1]
      %v2985 = vld [vmem:[%s2693 + $0x14] sm:$0xf]
      %v2986 = vld [vmem:[%s2693 + $0x18] sm:$0xf]
      %v2987 = vld [vmem:[%s2693 + $0x1c] sm:$0xf]
      %v2988 = vld [vmem:[%s2693 + $0x20] sm:$0xf]
      %v2989 = vld [vmem:[%s2693 + $0x24] sm:$0x1]
      %v2990 = vld [vmem:[%s2693 + $0x28] sm:$0xf]
      %v2991 = vld [vmem:[%s2693 + $0x2c] sm:$0xf]
      %v2992 = vld [vmem:[%s2693 + $0x30] sm:$0xf]
      %v2993 = vld [vmem:[%s2693 + $0x34] sm:$0xf]
      %v2994 = vld [vmem:[%s2693 + $0x38] sm:$0x1]
      %v2995 = vld [vmem:[%s2693 + $0x3c] sm:$0xf]
      %v2996 = vld [vmem:[%s2693 + $0x40] sm:$0xf]
      %v2997 = vld [vmem:[%s2693 + $0x44] sm:$0xf]
      %v2998 = vld [vmem:[%s2693 + $0x48] sm:$0xf]
      %v2999 = vld [vmem:[%s2693 + $0x4c] sm:$0x1]
      %v3000 = vld [vmem:[%s2693 + $0x50] sm:$0xf]
      %v3001 = vld [vmem:[%s2693 + $0x54] sm:$0xf]
      %v3002 = vld [vmem:[%s2693 + $0x58] sm:$0xf]
      %v3003 = vld [vmem:[%s2693 + $0x5c] sm:$0xf]
      %v3004 = vld [vmem:[%s2693 + $0x60] sm:$0x1]
      %v3005 = vld [vmem:[%s2693 + $0x64] sm:$0xf]
      %v3006 = vld [vmem:[%s2693 + $0x68] sm:$0xf]
      %v3007 = vld [vmem:[%s2693 + $0x6c] sm:$0xf]
      %v3008 = vld [vmem:[%s2693 + $0x70] sm:$0xf]
      %v3009 = vld [vmem:[%s2693 + $0x74] sm:$0x1]
      %v3010 = vld [vmem:[%s2693 + $0x78] sm:$0xf]
      %v3011 = vld [vmem:[%s2693 + $0x7c] sm:$0xf]
      %v3012 = vld [vmem:[%s2693 + $0x80] sm:$0xf]
      %v3013 = vld [vmem:[%s2693 + $0x84] sm:$0xf]
      %v3014 = vld [vmem:[%s2693 + $0x88] sm:$0x1]
      %v3015 = vld [vmem:[%s2693 + $0x8c] sm:$0xf]
      %v3016 = vld [vmem:[%s2693 + $0x90] sm:$0xf]
      %v3017 = vld [vmem:[%s2693 + $0x94] sm:$0xf]
      %v3018 = vld [vmem:[%s2693 + $0x98] sm:$0xf]
      %v3019 = vld [vmem:[%s2693 + $0x9c] sm:$0x1]
      %v3021 = vshrl.u32 %v2980, 16
      %v3023 = vrot.slane %v3021, 4
      %v3024 = vshll.u32 %v2980, 16
      %v3026 = vrot.slane %v3024, 5
      %v3027 = vor.u32 %v3023, %v3026
      %v3028 = vrot.slane %v3027, 4
      %v3030 = vshll.u32 %v2981, 16
      %v3032 = vrot.slane %v3030, 5
      %v3033 = vsel %vm300, %v3028, %v3032
      %v3034 = vshrl.u32 %v2981, 16
      %v3036 = vrot.slane %v3034, 4
      %v3037 = vor.u32 %v3036, %v3032
      %v3038 = vrot.slane %v3037, 4
      %v3040 = vshll.u32 %v2982, 16
      %v3042 = vrot.slane %v3040, 5
      %v3043 = vsel %vm300, %v3038, %v3042
      %v3044 = vshrl.u32 %v2982, 16
      %v3046 = vrot.slane %v3044, 4
      %v3047 = vor.u32 %v3046, %v3042
      %v3048 = vrot.slane %v3047, 4
      %v3050 = vshll.u32 %v2983, 16
      %v3052 = vrot.slane %v3050, 5
      %v3053 = vsel %vm300, %v3048, %v3052
      %v3054 = vshrl.u32 %v2983, 16
      %v3056 = vrot.slane %v3054, 4
      %v3057 = vor.u32 %v3056, %v3052
      %v3058 = vrot.slane %v3057, 4
      %v3060 = vshll.u32 %v2984, 16
      %v3062 = vrot.slane %v3060, 5
      %v3063 = vsel %vm300, %v3058, %v3062
      %v3065 = vshrl.u32 %v2985, 16
      %v3067 = vrot.slane %v3065, 4
      %v3068 = vshll.u32 %v2985, 16
      %v3070 = vrot.slane %v3068, 5
      %v3071 = vor.u32 %v3067, %v3070
      %v3072 = vrot.slane %v3071, 4
      %v3074 = vshll.u32 %v2986, 16
      %v3076 = vrot.slane %v3074, 5
      %v3077 = vsel %vm300, %v3072, %v3076
      %v3078 = vshrl.u32 %v2986, 16
      %v3080 = vrot.slane %v3078, 4
      %v3081 = vor.u32 %v3080, %v3076
      %v3082 = vrot.slane %v3081, 4
      %v3084 = vshll.u32 %v2987, 16
      %v3086 = vrot.slane %v3084, 5
      %v3087 = vsel %vm300, %v3082, %v3086
      %v3088 = vshrl.u32 %v2987, 16
      %v3090 = vrot.slane %v3088, 4
      %v3091 = vor.u32 %v3090, %v3086
      %v3092 = vrot.slane %v3091, 4
      %v3094 = vshll.u32 %v2988, 16
      %v3096 = vrot.slane %v3094, 5
      %v3097 = vsel %vm300, %v3092, %v3096
      %v3098 = vshrl.u32 %v2988, 16
      %v3100 = vrot.slane %v3098, 4
      %v3101 = vor.u32 %v3100, %v3096
      %v3102 = vrot.slane %v3101, 4
      %v3104 = vshll.u32 %v2989, 16
      %v3106 = vrot.slane %v3104, 5
      %v3107 = vsel %vm300, %v3102, %v3106
      %v3109 = vshrl.u32 %v2990, 16
      %v3111 = vrot.slane %v3109, 4
      %v3112 = vshll.u32 %v2990, 16
      %v3114 = vrot.slane %v3112, 5
      %v3115 = vor.u32 %v3111, %v3114
      %v3116 = vrot.slane %v3115, 4
      %v3118 = vshll.u32 %v2991, 16
      %v3120 = vrot.slane %v3118, 5
      %v3121 = vsel %vm300, %v3116, %v3120
      %v3122 = vshrl.u32 %v2991, 16
      %v3124 = vrot.slane %v3122, 4
      %v3125 = vor.u32 %v3124, %v3120
      %v3126 = vrot.slane %v3125, 4
      %v3128 = vshll.u32 %v2992, 16
      %v3130 = vrot.slane %v3128, 5
      %v3131 = vsel %vm300, %v3126, %v3130
      %v3132 = vshrl.u32 %v2992, 16
      %v3134 = vrot.slane %v3132, 4
      %v3135 = vor.u32 %v3134, %v3130
      %v3136 = vrot.slane %v3135, 4
      %v3138 = vshll.u32 %v2993, 16
      %v3140 = vrot.slane %v3138, 5
      %v3141 = vsel %vm300, %v3136, %v3140
      %v3142 = vshrl.u32 %v2993, 16
      %v3144 = vrot.slane %v3142, 4
      %v3145 = vor.u32 %v3144, %v3140
      %v3146 = vrot.slane %v3145, 4
      %v3148 = vshll.u32 %v2994, 16
      %v3150 = vrot.slane %v3148, 5
      %v3151 = vsel %vm300, %v3146, %v3150
      %v3153 = vshrl.u32 %v2995, 16
      %v3155 = vrot.slane %v3153, 4
      %v3156 = vshll.u32 %v2995, 16
      %v3158 = vrot.slane %v3156, 5
      %v3159 = vor.u32 %v3155, %v3158
      %v3160 = vrot.slane %v3159, 4
      %v3162 = vshll.u32 %v2996, 16
      %v3164 = vrot.slane %v3162, 5
      %v3165 = vsel %vm300, %v3160, %v3164
      %v3166 = vshrl.u32 %v2996, 16
      %v3168 = vrot.slane %v3166, 4
      %v3169 = vor.u32 %v3168, %v3164
      %v3170 = vrot.slane %v3169, 4
      %v3172 = vshll.u32 %v2997, 16
      %v3174 = vrot.slane %v3172, 5
      %v3175 = vsel %vm300, %v3170, %v3174
      %v3176 = vshrl.u32 %v2997, 16
      %v3178 = vrot.slane %v3176, 4
      %v3179 = vor.u32 %v3178, %v3174
      %v3180 = vrot.slane %v3179, 4
      %v3182 = vshll.u32 %v2998, 16
      %v3184 = vrot.slane %v3182, 5
      %v3185 = vsel %vm300, %v3180, %v3184
      %v3186 = vshrl.u32 %v2998, 16
      %v3188 = vrot.slane %v3186, 4
      %v3189 = vor.u32 %v3188, %v3184
      %v3190 = vrot.slane %v3189, 4
      %v3192 = vshll.u32 %v2999, 16
      %v3194 = vrot.slane %v3192, 5
      %v3195 = vsel %vm300, %v3190, %v3194
      %v3197 = vshrl.u32 %v3000, 16
      %v3199 = vrot.slane %v3197, 4
      %v3200 = vshll.u32 %v3000, 16
      %v3202 = vrot.slane %v3200, 5
      %v3203 = vor.u32 %v3199, %v3202
      %v3204 = vrot.slane %v3203, 4
      %v3206 = vshll.u32 %v3001, 16
      %v3208 = vrot.slane %v3206, 5
      %v3209 = vsel %vm300, %v3204, %v3208
      %v3210 = vshrl.u32 %v3001, 16
      %v3212 = vrot.slane %v3210, 4
      %v3213 = vor.u32 %v3212, %v3208
      %v3214 = vrot.slane %v3213, 4
      %v3216 = vshll.u32 %v3002, 16
      %v3218 = vrot.slane %v3216, 5
      %v3219 = vsel %vm300, %v3214, %v3218
      %v3220 = vshrl.u32 %v3002, 16
      %v3222 = vrot.slane %v3220, 4
      %v3223 = vor.u32 %v3222, %v3218
      %v3224 = vrot.slane %v3223, 4
      %v3226 = vshll.u32 %v3003, 16
      %v3228 = vrot.slane %v3226, 5
      %v3229 = vsel %vm300, %v3224, %v3228
      %v3230 = vshrl.u32 %v3003, 16
      %v3232 = vrot.slane %v3230, 4
      %v3233 = vor.u32 %v3232, %v3228
      %v3234 = vrot.slane %v3233, 4
      %v3236 = vshll.u32 %v3004, 16
      %v3238 = vrot.slane %v3236, 5
      %v3239 = vsel %vm300, %v3234, %v3238
      %v3241 = vshrl.u32 %v3005, 16
      %v3243 = vrot.slane %v3241, 4
      %v3244 = vshll.u32 %v3005, 16
      %v3246 = vrot.slane %v3244, 5
      %v3247 = vor.u32 %v3243, %v3246
      %v3248 = vrot.slane %v3247, 4
      %v3250 = vshll.u32 %v3006, 16
      %v3252 = vrot.slane %v3250, 5
      %v3253 = vsel %vm300, %v3248, %v3252
      %v3254 = vshrl.u32 %v3006, 16
      %v3256 = vrot.slane %v3254, 4
      %v3257 = vor.u32 %v3256, %v3252
      %v3258 = vrot.slane %v3257, 4
      %v3260 = vshll.u32 %v3007, 16
      %v3262 = vrot.slane %v3260, 5
      %v3263 = vsel %vm300, %v3258, %v3262
      %v3264 = vshrl.u32 %v3007, 16
      %v3266 = vrot.slane %v3264, 4
      %v3267 = vor.u32 %v3266, %v3262
      %v3268 = vrot.slane %v3267, 4
      %v3270 = vshll.u32 %v3008, 16
      %v3272 = vrot.slane %v3270, 5
      %v3273 = vsel %vm300, %v3268, %v3272
      %v3274 = vshrl.u32 %v3008, 16
      %v3276 = vrot.slane %v3274, 4
      %v3277 = vor.u32 %v3276, %v3272
      %v3278 = vrot.slane %v3277, 4
      %v3280 = vshll.u32 %v3009, 16
      %v3282 = vrot.slane %v3280, 5
      %v3283 = vsel %vm300, %v3278, %v3282
      %v3285 = vshrl.u32 %v3010, 16
      %v3287 = vrot.slane %v3285, 4
      %v3288 = vshll.u32 %v3010, 16
      %v3290 = vrot.slane %v3288, 5
      %v3291 = vor.u32 %v3287, %v3290
      %v3292 = vrot.slane %v3291, 4
      %v3294 = vshll.u32 %v3011, 16
      %v3296 = vrot.slane %v3294, 5
      %v3297 = vsel %vm300, %v3292, %v3296
      %v3298 = vshrl.u32 %v3011, 16
      %v3300 = vrot.slane %v3298, 4
      %v3301 = vor.u32 %v3300, %v3296
      %v3302 = vrot.slane %v3301, 4
      %v3304 = vshll.u32 %v3012, 16
      %v3306 = vrot.slane %v3304, 5
      %v3307 = vsel %vm300, %v3302, %v3306
      %v3308 = vshrl.u32 %v3012, 16
      %v3310 = vrot.slane %v3308, 4
      %v3311 = vor.u32 %v3310, %v3306
      %v3312 = vrot.slane %v3311, 4
      %v3314 = vshll.u32 %v3013, 16
      %v3316 = vrot.slane %v3314, 5
      %v3317 = vsel %vm300, %v3312, %v3316
      %v3318 = vshrl.u32 %v3013, 16
      %v3320 = vrot.slane %v3318, 4
      %v3321 = vor.u32 %v3320, %v3316
      %v3322 = vrot.slane %v3321, 4
      %v3324 = vshll.u32 %v3014, 16
      %v3326 = vrot.slane %v3324, 5
      %v3327 = vsel %vm300, %v3322, %v3326
      %v3329 = vshrl.u32 %v3015, 16
      %v3331 = vrot.slane %v3329, 4
      %v3332 = vshll.u32 %v3015, 16
      %v3334 = vrot.slane %v3332, 5
      %v3335 = vor.u32 %v3331, %v3334
      %v3336 = vrot.slane %v3335, 4
      %v3338 = vshll.u32 %v3016, 16
      %v3340 = vrot.slane %v3338, 5
      %v3341 = vsel %vm300, %v3336, %v3340
      %v3342 = vshrl.u32 %v3016, 16
      %v3344 = vrot.slane %v3342, 4
      %v3345 = vor.u32 %v3344, %v3340
      %v3346 = vrot.slane %v3345, 4
      %v3348 = vshll.u32 %v3017, 16
      %v3350 = vrot.slane %v3348, 5
      %v3351 = vsel %vm300, %v3346, %v3350
      %v3352 = vshrl.u32 %v3017, 16
      %v3354 = vrot.slane %v3352, 4
      %v3355 = vor.u32 %v3354, %v3350
      %v3356 = vrot.slane %v3355, 4
      %v3358 = vshll.u32 %v3018, 16
      %v3360 = vrot.slane %v3358, 5
      %v3361 = vsel %vm300, %v3356, %v3360
      %v3362 = vshrl.u32 %v3018, 16
      %v3364 = vrot.slane %v3362, 4
      %v3365 = vor.u32 %v3364, %v3360
      %v3366 = vrot.slane %v3365, 4
      %v3368 = vshll.u32 %v3019, 16
      %v3370 = vrot.slane %v3368, 5
      %v3371 = vsel %vm300, %v3366, %v3370
      %s3372 = scalar_lea.vmem %s1, 28
      %v3373 = vld [vmem:[%s3372] sm:$0xf]
      %v3374 = vunpack.c.l.b16 %v3033
      %v3375 = vunpack.c.l.b16 %v3043
      %v3376 = vunpack.c.l.b16 %v3053
      %v3377 = vunpack.c.l.b16 %v3063
      %v3378 = vunpack.c.l.b16 %v3077
      %v3379 = vunpack.c.l.b16 %v3087
      %v3380 = vunpack.c.l.b16 %v3097
      %v3381 = vunpack.c.l.b16 %v3107
      %v3382 = vunpack.c.l.b16 %v3121
      %v3383 = vunpack.c.l.b16 %v3131
      %v3384 = vunpack.c.l.b16 %v3141
      %v3385 = vunpack.c.l.b16 %v3151
      %v3386 = vunpack.c.l.b16 %v3165
      %v3387 = vunpack.c.l.b16 %v3175
      %v3388 = vunpack.c.l.b16 %v3185
      %v3389 = vunpack.c.l.b16 %v3195
      %v3390 = vunpack.c.l.b16 %v3209
      %v3391 = vunpack.c.l.b16 %v3219
      %v3392 = vunpack.c.l.b16 %v3229
      %v3393 = vunpack.c.l.b16 %v3239
      %v3394 = vunpack.c.l.b16 %v3253
      %v3395 = vunpack.c.l.b16 %v3263
      %v3396 = vunpack.c.l.b16 %v3273
      %v3397 = vunpack.c.l.b16 %v3283
      %v3398 = vunpack.c.l.b16 %v3297
      %v3399 = vunpack.c.l.b16 %v3307
      %v3400 = vunpack.c.l.b16 %v3317
      %v3401 = vunpack.c.l.b16 %v3327
      %v3402 = vunpack.c.l.b16 %v3341
      %v3403 = vunpack.c.l.b16 %v3351
      %v3404 = vunpack.c.l.b16 %v3361
      %v3405 = vunpack.c.l.b16 %v3371
      %v3406 = vpack.c.b16 %v3375, %v3374
      %v3407 = vpack.c.b16 %v3377, %v3376
      %v3408 = vpack.c.b16 %v3379, %v3378
      %v3409 = vpack.c.b16 %v3381, %v3380
      %v3410 = vpack.c.b16 %v3383, %v3382
      %v3411 = vpack.c.b16 %v3385, %v3384
      %v3412 = vpack.c.b16 %v3387, %v3386
      %v3413 = vpack.c.b16 %v3389, %v3388
      %v3414 = vpack.c.b16 %v3391, %v3390
      %v3415 = vpack.c.b16 %v3393, %v3392
      %v3416 = vpack.c.b16 %v3395, %v3394
      %v3417 = vpack.c.b16 %v3397, %v3396
      %v3418 = vpack.c.b16 %v3399, %v3398
      %v3419 = vpack.c.b16 %v3401, %v3400
      %v3420 = vpack.c.b16 %v3403, %v3402
      %v3421 = vpack.c.b16 %v3405, %v3404
      %v3423 = vsel %vm703, %v3406, 0
      %v3426 = vsel %vm703, %v3407, 0
      %v3429 = vsel %vm703, %v3408, 0
      %v3432 = vsel %vm703, %v3409, 0
      %v3435 = vsel %vm703, %v3410, 0
      %v3438 = vsel %vm703, %v3411, 0
      %v3441 = vsel %vm703, %v3412, 0
      %v3444 = vsel %vm703, %v3413, 0
      %v3447 = vsel %vm703, %v3414, 0
      %v3450 = vsel %vm703, %v3415, 0
      %v3453 = vsel %vm703, %v3416, 0
      %v3456 = vsel %vm703, %v3417, 0
      %v3459 = vsel %vm703, %v3418, 0
      %v3462 = vsel %vm703, %v3419, 0
      %v3465 = vsel %vm703, %v3420, 0
      %v3468 = vsel %vm703, %v3421, 0
      %v3471 = vsel %vm752, %v3373, 0
      %3473 = vmatpush.bf16.msra.mxu0 0
      %3474 = vmatpush.bf16.msra.mxu0 0
      %3475 = vmatpush.bf16.msra.mxu0 0
      %3476 = vmatpush.bf16.msra.mxu0 0
      %3477 = vmatpush.bf16.msra.mxu0 0
      %3478 = vmatpush.bf16.msra.mxu0 0
      %3479 = vmatpush.bf16.msra.mxu0 0
      %3480 = vmatpush.bf16.msra.mxu0 %v3471
      %3481 = vmatmul.bf16.gmra.mxu0 %v3423
      %v3482 = vpop.f32.mrf.mxu0
      %v3483 = vadd.f32 0.0, %v3482
      %v3484 = vpop.f32.mrf.mxu0
      %v3485 = vadd.f32 0.0, %v3484
      %3486 = vmatmul.bf16.gmra.mxu0 %v3426
      %v3487 = vpop.f32.mrf.mxu0
      %v3488 = vadd.f32 0.0, %v3487
      %v3489 = vpop.f32.mrf.mxu0
      %v3490 = vadd.f32 0.0, %v3489
      %3491 = vmatmul.bf16.gmra.mxu0 %v3429
      %v3492 = vpop.f32.mrf.mxu0
      %v3493 = vadd.f32 0.0, %v3492
      %v3494 = vpop.f32.mrf.mxu0
      %v3495 = vadd.f32 0.0, %v3494
      %3496 = vmatmul.bf16.gmra.mxu0 %v3432
      %v3497 = vpop.f32.mrf.mxu0
      %v3498 = vadd.f32 0.0, %v3497
      %v3499 = vpop.f32.mrf.mxu0
      %v3500 = vadd.f32 0.0, %v3499
      %3501 = vmatmul.bf16.gmra.mxu0 %v3435
      %v3502 = vpop.f32.mrf.mxu0
      %v3503 = vadd.f32 0.0, %v3502
      %v3504 = vpop.f32.mrf.mxu0
      %v3505 = vadd.f32 0.0, %v3504
      %3506 = vmatmul.bf16.gmra.mxu0 %v3438
      %v3507 = vpop.f32.mrf.mxu0
      %v3508 = vadd.f32 0.0, %v3507
      %v3509 = vpop.f32.mrf.mxu0
      %v3510 = vadd.f32 0.0, %v3509
      %3511 = vmatmul.bf16.gmra.mxu0 %v3441
      %v3512 = vpop.f32.mrf.mxu0
      %v3513 = vadd.f32 0.0, %v3512
      %v3514 = vpop.f32.mrf.mxu0
      %v3515 = vadd.f32 0.0, %v3514
      %3516 = vmatmul.bf16.gmra.mxu0 %v3444
      %v3517 = vpop.f32.mrf.mxu0
      %v3518 = vadd.f32 0.0, %v3517
      %v3519 = vpop.f32.mrf.mxu0
      %v3520 = vadd.f32 0.0, %v3519
      %3521 = vmatmul.bf16.gmra.mxu0 %v3447
      %v3522 = vpop.f32.mrf.mxu0
      %v3523 = vadd.f32 0.0, %v3522
      %v3524 = vpop.f32.mrf.mxu0
      %v3525 = vadd.f32 0.0, %v3524
      %3526 = vmatmul.bf16.gmra.mxu0 %v3450
      %v3527 = vpop.f32.mrf.mxu0
      %v3528 = vadd.f32 0.0, %v3527
      %v3529 = vpop.f32.mrf.mxu0
      %v3530 = vadd.f32 0.0, %v3529
      %3531 = vmatmul.bf16.gmra.mxu0 %v3453
      %v3532 = vpop.f32.mrf.mxu0
      %v3533 = vadd.f32 0.0, %v3532
      %v3534 = vpop.f32.mrf.mxu0
      %v3535 = vadd.f32 0.0, %v3534
      %3536 = vmatmul.bf16.gmra.mxu0 %v3456
      %v3537 = vpop.f32.mrf.mxu0
      %v3538 = vadd.f32 0.0, %v3537
      %v3539 = vpop.f32.mrf.mxu0
      %v3540 = vadd.f32 0.0, %v3539
      %3541 = vmatmul.bf16.gmra.mxu0 %v3459
      %v3542 = vpop.f32.mrf.mxu0
      %v3543 = vadd.f32 0.0, %v3542
      %v3544 = vpop.f32.mrf.mxu0
      %v3545 = vadd.f32 0.0, %v3544
      %3546 = vmatmul.bf16.gmra.mxu0 %v3462
      %v3547 = vpop.f32.mrf.mxu0
      %v3548 = vadd.f32 0.0, %v3547
      %v3549 = vpop.f32.mrf.mxu0
      %v3550 = vadd.f32 0.0, %v3549
      %3551 = vmatmul.bf16.gmra.mxu0 %v3465
      %v3552 = vpop.f32.mrf.mxu0
      %v3553 = vadd.f32 0.0, %v3552
      %v3554 = vpop.f32.mrf.mxu0
      %v3555 = vadd.f32 0.0, %v3554
      %3556 = vmatmul.bf16.gmra.mxu0 %v3468
      %v3557 = vpop.f32.mrf.mxu0
      %v3558 = vadd.f32 0.0, %v3557
      %v3559 = vpop.f32.mrf.mxu0
      %v3560 = vadd.f32 0.0, %v3559
      %3561 = vdwg.mxu0
      %v3562 = vadd.f32 %v2948, %v3483
      %v3563 = vadd.f32 %v2949, %v3485
      %v3564 = vadd.f32 %v2950, %v3488
      %v3565 = vadd.f32 %v2951, %v3490
      %v3566 = vadd.f32 %v2952, %v3493
      %v3567 = vadd.f32 %v2953, %v3495
      %v3568 = vadd.f32 %v2954, %v3498
      %v3569 = vadd.f32 %v2955, %v3500
      %v3570 = vadd.f32 %v2956, %v3503
      %v3571 = vadd.f32 %v2957, %v3505
      %v3572 = vadd.f32 %v2958, %v3508
      %v3573 = vadd.f32 %v2959, %v3510
      %v3574 = vadd.f32 %v2960, %v3513
      %v3575 = vadd.f32 %v2961, %v3515
      %v3576 = vadd.f32 %v2962, %v3518
      %v3577 = vadd.f32 %v2963, %v3520
      %v3578 = vadd.f32 %v2964, %v3523
      %v3579 = vadd.f32 %v2965, %v3525
      %v3580 = vadd.f32 %v2966, %v3528
      %v3581 = vadd.f32 %v2967, %v3530
      %v3582 = vadd.f32 %v2968, %v3533
      %v3583 = vadd.f32 %v2969, %v3535
      %v3584 = vadd.f32 %v2970, %v3538
      %v3585 = vadd.f32 %v2971, %v3540
      %v3586 = vadd.f32 %v2972, %v3543
      %v3587 = vadd.f32 %v2973, %v3545
      %v3588 = vadd.f32 %v2974, %v3548
      %v3589 = vadd.f32 %v2975, %v3550
      %v3590 = vadd.f32 %v2976, %v3553
      %v3591 = vadd.f32 %v2977, %v3555
      %v3592 = vadd.f32 %v2978, %v3558
      %v3593 = vadd.f32 %v2979, %v3560
      %v3594 = vld [vmem:[%s2693] sm:$0xe]
      %v3595 = vld [vmem:[%s2693 + $0x14] sm:$0xe]
      %v3596 = vld [vmem:[%s2693 + $0x28] sm:$0xe]
      %v3597 = vld [vmem:[%s2693 + $0x3c] sm:$0xe]
      %v3598 = vld [vmem:[%s2693 + $0x50] sm:$0xe]
      %v3599 = vld [vmem:[%s2693 + $0x64] sm:$0xe]
      %v3600 = vld [vmem:[%s2693 + $0x78] sm:$0xe]
      %v3601 = vld [vmem:[%s2693 + $0x8c] sm:$0xe]
      %v3642 = vrot.slane %v3594, 5
      %v3643 = vrot.slane %v3642, 4
      %v3644 = vrot.slane %v2981, 5
      %v3645 = vsel %vm1091, %v3643, %v3644
      %v3646 = vrot.slane %v3644, 4
      %v3647 = vrot.slane %v2982, 5
      %v3648 = vsel %vm1091, %v3646, %v3647
      %v3649 = vrot.slane %v3647, 4
      %v3650 = vrot.slane %v2983, 5
      %v3651 = vsel %vm1091, %v3649, %v3650
      %v3652 = vrot.slane %v3650, 4
      %v3653 = vrot.slane %v2984, 5
      %v3654 = vsel %vm1091, %v3652, %v3653
      %v3655 = vrot.slane %v3595, 5
      %v3656 = vrot.slane %v3655, 4
      %v3657 = vrot.slane %v2986, 5
      %v3658 = vsel %vm1091, %v3656, %v3657
      %v3659 = vrot.slane %v3657, 4
      %v3660 = vrot.slane %v2987, 5
      %v3661 = vsel %vm1091, %v3659, %v3660
      %v3662 = vrot.slane %v3660, 4
      %v3663 = vrot.slane %v2988, 5
      %v3664 = vsel %vm1091, %v3662, %v3663
      %v3665 = vrot.slane %v3663, 4
      %v3666 = vrot.slane %v2989, 5
      %v3667 = vsel %vm1091, %v3665, %v3666
      %v3668 = vrot.slane %v3596, 5
      %v3669 = vrot.slane %v3668, 4
      %v3670 = vrot.slane %v2991, 5
      %v3671 = vsel %vm1091, %v3669, %v3670
      %v3672 = vrot.slane %v3670, 4
      %v3673 = vrot.slane %v2992, 5
      %v3674 = vsel %vm1091, %v3672, %v3673
      %v3675 = vrot.slane %v3673, 4
      %v3676 = vrot.slane %v2993, 5
      %v3677 = vsel %vm1091, %v3675, %v3676
      %v3678 = vrot.slane %v3676, 4
      %v3679 = vrot.slane %v2994, 5
      %v3680 = vsel %vm1091, %v3678, %v3679
      %v3681 = vrot.slane %v3597, 5
      %v3682 = vrot.slane %v3681, 4
      %v3683 = vrot.slane %v2996, 5
      %v3684 = vsel %vm1091, %v3682, %v3683
      %v3685 = vrot.slane %v3683, 4
      %v3686 = vrot.slane %v2997, 5
      %v3687 = vsel %vm1091, %v3685, %v3686
      %v3688 = vrot.slane %v3686, 4
      %v3689 = vrot.slane %v2998, 5
      %v3690 = vsel %vm1091, %v3688, %v3689
      %v3691 = vrot.slane %v3689, 4
      %v3692 = vrot.slane %v2999, 5
      %v3693 = vsel %vm1091, %v3691, %v3692
      %v3694 = vrot.slane %v3598, 5
      %v3695 = vrot.slane %v3694, 4
      %v3696 = vrot.slane %v3001, 5
      %v3697 = vsel %vm1091, %v3695, %v3696
      %v3698 = vrot.slane %v3696, 4
      %v3699 = vrot.slane %v3002, 5
      %v3700 = vsel %vm1091, %v3698, %v3699
      %v3701 = vrot.slane %v3699, 4
      %v3702 = vrot.slane %v3003, 5
      %v3703 = vsel %vm1091, %v3701, %v3702
      %v3704 = vrot.slane %v3702, 4
      %v3705 = vrot.slane %v3004, 5
      %v3706 = vsel %vm1091, %v3704, %v3705
      %v3707 = vrot.slane %v3599, 5
      %v3708 = vrot.slane %v3707, 4
      %v3709 = vrot.slane %v3006, 5
      %v3710 = vsel %vm1091, %v3708, %v3709
      %v3711 = vrot.slane %v3709, 4
      %v3712 = vrot.slane %v3007, 5
      %v3713 = vsel %vm1091, %v3711, %v3712
      %v3714 = vrot.slane %v3712, 4
      %v3715 = vrot.slane %v3008, 5
      %v3716 = vsel %vm1091, %v3714, %v3715
      %v3717 = vrot.slane %v3715, 4
      %v3718 = vrot.slane %v3009, 5
      %v3719 = vsel %vm1091, %v3717, %v3718
      %v3720 = vrot.slane %v3600, 5
      %v3721 = vrot.slane %v3720, 4
      %v3722 = vrot.slane %v3011, 5
      %v3723 = vsel %vm1091, %v3721, %v3722
      %v3724 = vrot.slane %v3722, 4
      %v3725 = vrot.slane %v3012, 5
      %v3726 = vsel %vm1091, %v3724, %v3725
      %v3727 = vrot.slane %v3725, 4
      %v3728 = vrot.slane %v3013, 5
      %v3729 = vsel %vm1091, %v3727, %v3728
      %v3730 = vrot.slane %v3728, 4
      %v3731 = vrot.slane %v3014, 5
      %v3732 = vsel %vm1091, %v3730, %v3731
      %v3733 = vrot.slane %v3601, 5
      %v3734 = vrot.slane %v3733, 4
      %v3735 = vrot.slane %v3016, 5
      %v3736 = vsel %vm1091, %v3734, %v3735
      %v3737 = vrot.slane %v3735, 4
      %v3738 = vrot.slane %v3017, 5
      %v3739 = vsel %vm1091, %v3737, %v3738
      %v3740 = vrot.slane %v3738, 4
      %v3741 = vrot.slane %v3018, 5
      %v3742 = vsel %vm1091, %v3740, %v3741
      %v3743 = vrot.slane %v3741, 4
      %v3744 = vrot.slane %v3019, 5
      %v3745 = vsel %vm1091, %v3743, %v3744
      %s3746 = scalar_lea.vmem %s1, 32
      %v3747 = vld [vmem:[%s3746] sm:$0xf]
      %v3748 = vunpack.c.l.b16 %v3645
      %v3749 = vunpack.c.l.b16 %v3648
      %v3750 = vunpack.c.l.b16 %v3651
      %v3751 = vunpack.c.l.b16 %v3654
      %v3752 = vunpack.c.l.b16 %v3658
      %v3753 = vunpack.c.l.b16 %v3661
      %v3754 = vunpack.c.l.b16 %v3664
      %v3755 = vunpack.c.l.b16 %v3667
      %v3756 = vunpack.c.l.b16 %v3671
      %v3757 = vunpack.c.l.b16 %v3674
      %v3758 = vunpack.c.l.b16 %v3677
      %v3759 = vunpack.c.l.b16 %v3680
      %v3760 = vunpack.c.l.b16 %v3684
      %v3761 = vunpack.c.l.b16 %v3687
      %v3762 = vunpack.c.l.b16 %v3690
      %v3763 = vunpack.c.l.b16 %v3693
      %v3764 = vunpack.c.l.b16 %v3697
      %v3765 = vunpack.c.l.b16 %v3700
      %v3766 = vunpack.c.l.b16 %v3703
      %v3767 = vunpack.c.l.b16 %v3706
      %v3768 = vunpack.c.l.b16 %v3710
      %v3769 = vunpack.c.l.b16 %v3713
      %v3770 = vunpack.c.l.b16 %v3716
      %v3771 = vunpack.c.l.b16 %v3719
      %v3772 = vunpack.c.l.b16 %v3723
      %v3773 = vunpack.c.l.b16 %v3726
      %v3774 = vunpack.c.l.b16 %v3729
      %v3775 = vunpack.c.l.b16 %v3732
      %v3776 = vunpack.c.l.b16 %v3736
      %v3777 = vunpack.c.l.b16 %v3739
      %v3778 = vunpack.c.l.b16 %v3742
      %v3779 = vunpack.c.l.b16 %v3745
      %v3780 = vpack.c.b16 %v3749, %v3748
      %v3781 = vpack.c.b16 %v3751, %v3750
      %v3782 = vpack.c.b16 %v3753, %v3752
      %v3783 = vpack.c.b16 %v3755, %v3754
      %v3784 = vpack.c.b16 %v3757, %v3756
      %v3785 = vpack.c.b16 %v3759, %v3758
      %v3786 = vpack.c.b16 %v3761, %v3760
      %v3787 = vpack.c.b16 %v3763, %v3762
      %v3788 = vpack.c.b16 %v3765, %v3764
      %v3789 = vpack.c.b16 %v3767, %v3766
      %v3790 = vpack.c.b16 %v3769, %v3768
      %v3791 = vpack.c.b16 %v3771, %v3770
      %v3792 = vpack.c.b16 %v3773, %v3772
      %v3793 = vpack.c.b16 %v3775, %v3774
      %v3794 = vpack.c.b16 %v3777, %v3776
      %v3795 = vpack.c.b16 %v3779, %v3778
      %v3797 = vsel %vm703, %v3780, 0
      %v3800 = vsel %vm703, %v3781, 0
      %v3803 = vsel %vm703, %v3782, 0
      %v3806 = vsel %vm703, %v3783, 0
      %v3809 = vsel %vm703, %v3784, 0
      %v3812 = vsel %vm703, %v3785, 0
      %v3815 = vsel %vm703, %v3786, 0
      %v3818 = vsel %vm703, %v3787, 0
      %v3821 = vsel %vm703, %v3788, 0
      %v3824 = vsel %vm703, %v3789, 0
      %v3827 = vsel %vm703, %v3790, 0
      %v3830 = vsel %vm703, %v3791, 0
      %v3833 = vsel %vm703, %v3792, 0
      %v3836 = vsel %vm703, %v3793, 0
      %v3839 = vsel %vm703, %v3794, 0
      %v3842 = vsel %vm703, %v3795, 0
      %v3845 = vsel %vm752, %v3747, 0
      %3847 = vmatpush.bf16.msra.mxu0 0
      %3848 = vmatpush.bf16.msra.mxu0 0
      %3849 = vmatpush.bf16.msra.mxu0 0
      %3850 = vmatpush.bf16.msra.mxu0 0
      %3851 = vmatpush.bf16.msra.mxu0 0
      %3852 = vmatpush.bf16.msra.mxu0 0
      %3853 = vmatpush.bf16.msra.mxu0 0
      %3854 = vmatpush.bf16.msra.mxu0 %v3845
      %3855 = vmatmul.bf16.gmra.mxu0 %v3797
      %v3856 = vpop.f32.mrf.mxu0
      %v3857 = vadd.f32 0.0, %v3856
      %v3858 = vpop.f32.mrf.mxu0
      %v3859 = vadd.f32 0.0, %v3858
      %3860 = vmatmul.bf16.gmra.mxu0 %v3800
      %v3861 = vpop.f32.mrf.mxu0
      %v3862 = vadd.f32 0.0, %v3861
      %v3863 = vpop.f32.mrf.mxu0
      %v3864 = vadd.f32 0.0, %v3863
      %3865 = vmatmul.bf16.gmra.mxu0 %v3803
      %v3866 = vpop.f32.mrf.mxu0
      %v3867 = vadd.f32 0.0, %v3866
      %v3868 = vpop.f32.mrf.mxu0
      %v3869 = vadd.f32 0.0, %v3868
      %3870 = vmatmul.bf16.gmra.mxu0 %v3806
      %v3871 = vpop.f32.mrf.mxu0
      %v3872 = vadd.f32 0.0, %v3871
      %v3873 = vpop.f32.mrf.mxu0
      %v3874 = vadd.f32 0.0, %v3873
      %3875 = vmatmul.bf16.gmra.mxu0 %v3809
      %v3876 = vpop.f32.mrf.mxu0
      %v3877 = vadd.f32 0.0, %v3876
      %v3878 = vpop.f32.mrf.mxu0
      %v3879 = vadd.f32 0.0, %v3878
      %3880 = vmatmul.bf16.gmra.mxu0 %v3812
      %v3881 = vpop.f32.mrf.mxu0
      %v3882 = vadd.f32 0.0, %v3881
      %v3883 = vpop.f32.mrf.mxu0
      %v3884 = vadd.f32 0.0, %v3883
      %3885 = vmatmul.bf16.gmra.mxu0 %v3815
      %v3886 = vpop.f32.mrf.mxu0
      %v3887 = vadd.f32 0.0, %v3886
      %v3888 = vpop.f32.mrf.mxu0
      %v3889 = vadd.f32 0.0, %v3888
      %3890 = vmatmul.bf16.gmra.mxu0 %v3818
      %v3891 = vpop.f32.mrf.mxu0
      %v3892 = vadd.f32 0.0, %v3891
      %v3893 = vpop.f32.mrf.mxu0
      %v3894 = vadd.f32 0.0, %v3893
      %3895 = vmatmul.bf16.gmra.mxu0 %v3821
      %v3896 = vpop.f32.mrf.mxu0
      %v3897 = vadd.f32 0.0, %v3896
      %v3898 = vpop.f32.mrf.mxu0
      %v3899 = vadd.f32 0.0, %v3898
      %3900 = vmatmul.bf16.gmra.mxu0 %v3824
      %v3901 = vpop.f32.mrf.mxu0
      %v3902 = vadd.f32 0.0, %v3901
      %v3903 = vpop.f32.mrf.mxu0
      %v3904 = vadd.f32 0.0, %v3903
      %3905 = vmatmul.bf16.gmra.mxu0 %v3827
      %v3906 = vpop.f32.mrf.mxu0
      %v3907 = vadd.f32 0.0, %v3906
      %v3908 = vpop.f32.mrf.mxu0
      %v3909 = vadd.f32 0.0, %v3908
      %3910 = vmatmul.bf16.gmra.mxu0 %v3830
      %v3911 = vpop.f32.mrf.mxu0
      %v3912 = vadd.f32 0.0, %v3911
      %v3913 = vpop.f32.mrf.mxu0
      %v3914 = vadd.f32 0.0, %v3913
      %3915 = vmatmul.bf16.gmra.mxu0 %v3833
      %v3916 = vpop.f32.mrf.mxu0
      %v3917 = vadd.f32 0.0, %v3916
      %v3918 = vpop.f32.mrf.mxu0
      %v3919 = vadd.f32 0.0, %v3918
      %3920 = vmatmul.bf16.gmra.mxu0 %v3836
      %v3921 = vpop.f32.mrf.mxu0
      %v3922 = vadd.f32 0.0, %v3921
      %v3923 = vpop.f32.mrf.mxu0
      %v3924 = vadd.f32 0.0, %v3923
      %3925 = vmatmul.bf16.gmra.mxu0 %v3839
      %v3926 = vpop.f32.mrf.mxu0
      %v3927 = vadd.f32 0.0, %v3926
      %v3928 = vpop.f32.mrf.mxu0
      %v3929 = vadd.f32 0.0, %v3928
      %3930 = vmatmul.bf16.gmra.mxu0 %v3842
      %v3931 = vpop.f32.mrf.mxu0
      %v3932 = vadd.f32 0.0, %v3931
      %v3933 = vpop.f32.mrf.mxu0
      %v3934 = vadd.f32 0.0, %v3933
      %3935 = vdwg.mxu0
      %v3936 = vadd.f32 %v3562, %v3857
      %v3937 = vadd.f32 %v3563, %v3859
      %v3938 = vadd.f32 %v3564, %v3862
      %v3939 = vadd.f32 %v3565, %v3864
      %v3940 = vadd.f32 %v3566, %v3867
      %v3941 = vadd.f32 %v3567, %v3869
      %v3942 = vadd.f32 %v3568, %v3872
      %v3943 = vadd.f32 %v3569, %v3874
      %v3944 = vadd.f32 %v3570, %v3877
      %v3945 = vadd.f32 %v3571, %v3879
      %v3946 = vadd.f32 %v3572, %v3882
      %v3947 = vadd.f32 %v3573, %v3884
      %v3948 = vadd.f32 %v3574, %v3887
      %v3949 = vadd.f32 %v3575, %v3889
      %v3950 = vadd.f32 %v3576, %v3892
      %v3951 = vadd.f32 %v3577, %v3894
      %v3952 = vadd.f32 %v3578, %v3897
      %v3953 = vadd.f32 %v3579, %v3899
      %v3954 = vadd.f32 %v3580, %v3902
      %v3955 = vadd.f32 %v3581, %v3904
      %v3956 = vadd.f32 %v3582, %v3907
      %v3957 = vadd.f32 %v3583, %v3909
      %v3958 = vadd.f32 %v3584, %v3912
      %v3959 = vadd.f32 %v3585, %v3914
      %v3960 = vadd.f32 %v3586, %v3917
      %v3961 = vadd.f32 %v3587, %v3919
      %v3962 = vadd.f32 %v3588, %v3922
      %v3963 = vadd.f32 %v3589, %v3924
      %v3964 = vadd.f32 %v3590, %v3927
      %v3965 = vadd.f32 %v3591, %v3929
      %v3966 = vadd.f32 %v3592, %v3932
      %v3967 = vadd.f32 %v3593, %v3934
      %v3968 = vld [vmem:[%s2] sm:$0x1]
      %v3970 = vperm.slane %v3968, 0
      %v3972 = vadd.f32 %v3936, %v3970
      %v3973 = vadd.f32 %v3937, %v3970
      %v3974 = vadd.f32 %v3938, %v3970
      %v3975 = vadd.f32 %v3939, %v3970
      %v3976 = vadd.f32 %v3940, %v3970
      %v3977 = vadd.f32 %v3941, %v3970
      %v3978 = vadd.f32 %v3942, %v3970
      %v3979 = vadd.f32 %v3943, %v3970
      %v3980 = vadd.f32 %v3944, %v3970
      %v3981 = vadd.f32 %v3945, %v3970
      %v3982 = vadd.f32 %v3946, %v3970
      %v3983 = vadd.f32 %v3947, %v3970
      %v3984 = vadd.f32 %v3948, %v3970
      %v3985 = vadd.f32 %v3949, %v3970
      %v3986 = vadd.f32 %v3950, %v3970
      %v3987 = vadd.f32 %v3951, %v3970
      %v3988 = vadd.f32 %v3952, %v3970
      %v3989 = vadd.f32 %v3953, %v3970
      %v3990 = vadd.f32 %v3954, %v3970
      %v3991 = vadd.f32 %v3955, %v3970
      %v3992 = vadd.f32 %v3956, %v3970
      %v3993 = vadd.f32 %v3957, %v3970
      %v3994 = vadd.f32 %v3958, %v3970
      %v3995 = vadd.f32 %v3959, %v3970
      %v3996 = vadd.f32 %v3960, %v3970
      %v3997 = vadd.f32 %v3961, %v3970
      %v3998 = vadd.f32 %v3962, %v3970
      %v3999 = vadd.f32 %v3963, %v3970
      %v4000 = vadd.f32 %v3964, %v3970
      %v4001 = vadd.f32 %v3965, %v3970
      %v4002 = vadd.f32 %v3966, %v3970
      %v4003 = vadd.f32 %v3967, %v3970
      %v4004 = vsel %vm703, %v3972, 0.0
      %v4005 = vsel %vm703, %v3973, 0.0
      %v4006 = vadd.f32 %v4004, %v4005
      %v4007 = vsel %vm703, %v3974, 0.0
      %v4008 = vadd.f32 %v4006, %v4007
      %v4009 = vsel %vm703, %v3975, 0.0
      %v4010 = vadd.f32 %v4008, %v4009
      %v4011 = vsel %vm703, %v3976, 0.0
      %v4012 = vadd.f32 %v4010, %v4011
      %v4013 = vsel %vm703, %v3977, 0.0
      %v4014 = vadd.f32 %v4012, %v4013
      %v4015 = vsel %vm703, %v3978, 0.0
      %v4016 = vadd.f32 %v4014, %v4015
      %v4017 = vsel %vm703, %v3979, 0.0
      %v4018 = vadd.f32 %v4016, %v4017
      %v4019 = vsel %vm703, %v3980, 0.0
      %v4020 = vadd.f32 %v4018, %v4019
      %v4021 = vsel %vm703, %v3981, 0.0
      %v4022 = vadd.f32 %v4020, %v4021
      %v4023 = vsel %vm703, %v3982, 0.0
      %v4024 = vadd.f32 %v4022, %v4023
      %v4025 = vsel %vm703, %v3983, 0.0
      %v4026 = vadd.f32 %v4024, %v4025
      %v4027 = vsel %vm703, %v3984, 0.0
      %v4028 = vadd.f32 %v4026, %v4027
      %v4029 = vsel %vm703, %v3985, 0.0
      %v4030 = vadd.f32 %v4028, %v4029
      %v4031 = vsel %vm703, %v3986, 0.0
      %v4032 = vadd.f32 %v4030, %v4031
      %v4033 = vsel %vm703, %v3987, 0.0
      %v4034 = vadd.f32 %v4032, %v4033
      %v4035 = vsel %vm703, %v3988, 0.0
      %v4036 = vadd.f32 %v4034, %v4035
      %v4037 = vsel %vm703, %v3989, 0.0
      %v4038 = vadd.f32 %v4036, %v4037
      %v4039 = vsel %vm703, %v3990, 0.0
      %v4040 = vadd.f32 %v4038, %v4039
      %v4041 = vsel %vm703, %v3991, 0.0
      %v4042 = vadd.f32 %v4040, %v4041
      %v4043 = vsel %vm703, %v3992, 0.0
      %v4044 = vadd.f32 %v4042, %v4043
      %v4045 = vsel %vm703, %v3993, 0.0
      %v4046 = vadd.f32 %v4044, %v4045
      %v4047 = vsel %vm703, %v3994, 0.0
      %v4048 = vadd.f32 %v4046, %v4047
      %v4049 = vsel %vm703, %v3995, 0.0
      %v4050 = vadd.f32 %v4048, %v4049
      %v4051 = vsel %vm703, %v3996, 0.0
      %v4052 = vadd.f32 %v4050, %v4051
      %v4053 = vsel %vm703, %v3997, 0.0
      %v4054 = vadd.f32 %v4052, %v4053
      %v4055 = vsel %vm703, %v3998, 0.0
      %v4056 = vadd.f32 %v4054, %v4055
      %v4057 = vsel %vm703, %v3999, 0.0
      %v4058 = vadd.f32 %v4056, %v4057
      %v4059 = vsel %vm703, %v4000, 0.0
      %v4060 = vadd.f32 %v4058, %v4059
      %v4061 = vsel %vm703, %v4001, 0.0
      %v4062 = vadd.f32 %v4060, %v4061
      %v4063 = vsel %vm703, %v4002, 0.0
      %v4064 = vadd.f32 %v4062, %v4063
      %v4065 = vsel %vm703, %v4003, 0.0
      %v4066 = vadd.f32 %v4064, %v4065
      %v4067 = vrot.slane %v4066, 4
      %v4068 = vadd.f32 %v4066, %v4067
      %v4069 = vrot.slane %v4068, 2
      %v4070 = vadd.f32 %v4068, %v4069
      %v4071 = vrot.slane %v4070, 1
      %v4072 = vadd.f32 %v4070, %v4071
      %v4073 = vmul.f32 %v3972, %v3972
      %v4074 = vmul.f32 %v3973, %v3973
      %v4075 = vmul.f32 %v3974, %v3974
      %v4076 = vmul.f32 %v3975, %v3975
      %v4077 = vmul.f32 %v3976, %v3976
      %v4078 = vmul.f32 %v3977, %v3977
      %v4079 = vmul.f32 %v3978, %v3978
      %v4080 = vmul.f32 %v3979, %v3979
      %v4081 = vmul.f32 %v3980, %v3980
      %v4082 = vmul.f32 %v3981, %v3981
      %v4083 = vmul.f32 %v3982, %v3982
      %v4084 = vmul.f32 %v3983, %v3983
      %v4085 = vmul.f32 %v3984, %v3984
      %v4086 = vmul.f32 %v3985, %v3985
      %v4087 = vmul.f32 %v3986, %v3986
      %v4088 = vmul.f32 %v3987, %v3987
      %v4089 = vmul.f32 %v3988, %v3988
      %v4090 = vmul.f32 %v3989, %v3989
      %v4091 = vmul.f32 %v3990, %v3990
      %v4092 = vmul.f32 %v3991, %v3991
      %v4093 = vmul.f32 %v3992, %v3992
      %v4094 = vmul.f32 %v3993, %v3993
      %v4095 = vmul.f32 %v3994, %v3994
      %v4096 = vmul.f32 %v3995, %v3995
      %v4097 = vmul.f32 %v3996, %v3996
      %v4098 = vmul.f32 %v3997, %v3997
      %v4099 = vmul.f32 %v3998, %v3998
      %v4100 = vmul.f32 %v3999, %v3999
      %v4101 = vmul.f32 %v4000, %v4000
      %v4102 = vmul.f32 %v4001, %v4001
      %v4103 = vmul.f32 %v4002, %v4002
      %v4104 = vmul.f32 %v4003, %v4003
      %v4105 = vsel %vm703, %v4073, 0.0
      %v4106 = vsel %vm703, %v4074, 0.0
      %v4107 = vadd.f32 %v4105, %v4106
      %v4108 = vsel %vm703, %v4075, 0.0
      %v4109 = vadd.f32 %v4107, %v4108
      %v4110 = vsel %vm703, %v4076, 0.0
      %v4111 = vadd.f32 %v4109, %v4110
      %v4112 = vsel %vm703, %v4077, 0.0
      %v4113 = vadd.f32 %v4111, %v4112
      %v4114 = vsel %vm703, %v4078, 0.0
      %v4115 = vadd.f32 %v4113, %v4114
      %v4116 = vsel %vm703, %v4079, 0.0
      %v4117 = vadd.f32 %v4115, %v4116
      %v4118 = vsel %vm703, %v4080, 0.0
      %v4119 = vadd.f32 %v4117, %v4118
      %v4120 = vsel %vm703, %v4081, 0.0
      %v4121 = vadd.f32 %v4119, %v4120
      %v4122 = vsel %vm703, %v4082, 0.0
      %v4123 = vadd.f32 %v4121, %v4122
      %v4124 = vsel %vm703, %v4083, 0.0
      %v4125 = vadd.f32 %v4123, %v4124
      %v4126 = vsel %vm703, %v4084, 0.0
      %v4127 = vadd.f32 %v4125, %v4126
      %v4128 = vsel %vm703, %v4085, 0.0
      %v4129 = vadd.f32 %v4127, %v4128
      %v4130 = vsel %vm703, %v4086, 0.0
      %v4131 = vadd.f32 %v4129, %v4130
      %v4132 = vsel %vm703, %v4087, 0.0
      %v4133 = vadd.f32 %v4131, %v4132
      %v4134 = vsel %vm703, %v4088, 0.0
      %v4135 = vadd.f32 %v4133, %v4134
      %v4136 = vsel %vm703, %v4089, 0.0
      %v4137 = vadd.f32 %v4135, %v4136
      %v4138 = vsel %vm703, %v4090, 0.0
      %v4139 = vadd.f32 %v4137, %v4138
      %v4140 = vsel %vm703, %v4091, 0.0
      %v4141 = vadd.f32 %v4139, %v4140
      %v4142 = vsel %vm703, %v4092, 0.0
      %v4143 = vadd.f32 %v4141, %v4142
      %v4144 = vsel %vm703, %v4093, 0.0
      %v4145 = vadd.f32 %v4143, %v4144
      %v4146 = vsel %vm703, %v4094, 0.0
      %v4147 = vadd.f32 %v4145, %v4146
      %v4148 = vsel %vm703, %v4095, 0.0
      %v4149 = vadd.f32 %v4147, %v4148
      %v4150 = vsel %vm703, %v4096, 0.0
      %v4151 = vadd.f32 %v4149, %v4150
      %v4152 = vsel %vm703, %v4097, 0.0
      %v4153 = vadd.f32 %v4151, %v4152
      %v4154 = vsel %vm703, %v4098, 0.0
      %v4155 = vadd.f32 %v4153, %v4154
      %v4156 = vsel %vm703, %v4099, 0.0
      %v4157 = vadd.f32 %v4155, %v4156
      %v4158 = vsel %vm703, %v4100, 0.0
      %v4159 = vadd.f32 %v4157, %v4158
      %v4160 = vsel %vm703, %v4101, 0.0
      %v4161 = vadd.f32 %v4159, %v4160
      %v4162 = vsel %vm703, %v4102, 0.0
      %v4163 = vadd.f32 %v4161, %v4162
      %v4164 = vsel %vm703, %v4103, 0.0
      %v4165 = vadd.f32 %v4163, %v4164
      %v4166 = vsel %vm703, %v4104, 0.0
      %v4167 = vadd.f32 %v4165, %v4166
      %v4168 = vrot.slane %v4167, 4
      %v4169 = vadd.f32 %v4167, %v4168
      %v4170 = vrot.slane %v4169, 2
      %v4171 = vadd.f32 %v4169, %v4170
      %v4172 = vrot.slane %v4171, 1
      %v4173 = vadd.f32 %v4171, %v4172
      %vm4174 = vcmask 1040384
      %v4175 = vsel %vm4174, %v4072, %v4173
      %vm4176 = vcmask 58368
      %4177 = vst.msk [vmem:[%s255] sm:$0x3] %vm4176, %v4175
      %4178 = vxpose.xlu0.b32.start [1/16] %v4004, 128
      %4179 = vxpose.xlu0.b32.cont [2/16] %v4005, 128
      %4180 = vxpose.xlu0.b32.cont [3/16] %v4007, 128
      %4181 = vxpose.xlu0.b32.cont [4/16] %v4009, 128
      %4182 = vxpose.xlu0.b32.cont [5/16] %v4011, 128
      %4183 = vxpose.xlu0.b32.cont [6/16] %v4013, 128
      %4184 = vxpose.xlu0.b32.cont [7/16] %v4015, 128
      %4185 = vxpose.xlu0.b32.cont [8/16] %v4017, 128
      %4186 = vxpose.xlu0.b32.cont [9/16] %v4019, 128
      %4187 = vxpose.xlu0.b32.cont [10/16] %v4021, 128
      %4188 = vxpose.xlu0.b32.cont [11/16] %v4023, 128
      %4189 = vxpose.xlu0.b32.cont [12/16] %v4025, 128
      %4190 = vxpose.xlu0.b32.cont [13/16] %v4027, 128
      %4191 = vxpose.xlu0.b32.cont [14/16] %v4029, 128
      %4192 = vxpose.xlu0.b32.cont [15/16] %v4031, 128
      %4193 = vxpose.xlu0.b32.end [16/16] %v4033, 128
      %v4194 = vpop.trf.xlu0
      %v4195 = vpop.trf.xlu0
      %v4196 = vpop.trf.xlu0
      %v4197 = vpop.trf.xlu0
      %v4198 = vpop.trf.xlu0
      %v4199 = vpop.trf.xlu0
      %v4200 = vpop.trf.xlu0
      %v4201 = vpop.trf.xlu0
      %v4202 = vpop.trf.xlu0
      %v4203 = vpop.trf.xlu0
      %v4204 = vpop.trf.xlu0
      %v4205 = vpop.trf.xlu0
      %v4206 = vpop.trf.xlu0
      %v4207 = vpop.trf.xlu0
      %v4208 = vpop.trf.xlu0
      %v4209 = vpop.trf.xlu0
      %4210 = vxpose.xlu0.b32.start [1/16] %v4035, 128
      %4211 = vxpose.xlu0.b32.cont [2/16] %v4037, 128
      %4212 = vxpose.xlu0.b32.cont [3/16] %v4039, 128
      %4213 = vxpose.xlu0.b32.cont [4/16] %v4041, 128
      %4214 = vxpose.xlu0.b32.cont [5/16] %v4043, 128
      %4215 = vxpose.xlu0.b32.cont [6/16] %v4045, 128
      %4216 = vxpose.xlu0.b32.cont [7/16] %v4047, 128
      %4217 = vxpose.xlu0.b32.cont [8/16] %v4049, 128
      %4218 = vxpose.xlu0.b32.cont [9/16] %v4051, 128
      %4219 = vxpose.xlu0.b32.cont [10/16] %v4053, 128
      %4220 = vxpose.xlu0.b32.cont [11/16] %v4055, 128
      %4221 = vxpose.xlu0.b32.cont [12/16] %v4057, 128
      %4222 = vxpose.xlu0.b32.cont [13/16] %v4059, 128
      %4223 = vxpose.xlu0.b32.cont [14/16] %v4061, 128
      %4224 = vxpose.xlu0.b32.cont [15/16] %v4063, 128
      %4225 = vxpose.xlu0.b32.end [16/16] %v4065, 128
      %v4226 = vpop.trf.xlu0
      %v4227 = vpop.trf.xlu0
      %v4228 = vpop.trf.xlu0
      %v4229 = vpop.trf.xlu0
      %v4230 = vpop.trf.xlu0
      %v4231 = vpop.trf.xlu0
      %v4232 = vpop.trf.xlu0
      %v4233 = vpop.trf.xlu0
      %v4234 = vpop.trf.xlu0
      %v4235 = vpop.trf.xlu0
      %v4236 = vpop.trf.xlu0
      %v4237 = vpop.trf.xlu0
      %v4238 = vpop.trf.xlu0
      %v4239 = vpop.trf.xlu0
      %v4240 = vpop.trf.xlu0
      %v4241 = vpop.trf.xlu0
      %4242 = vst [vmem:[%s246] sm:$0xff] %v4194
      %4243 = vst [vmem:[%s246 + $0x8] sm:$0xff] %v4226
      %s4244 = smul.u32 2, %s21
      %p4245 = scmp.lt.s32.totalorder %s20, 1
      %s4246 = scalar_select %p4245, %s20, 1
      %p4247 = scmp.lt.s32.totalorder %s4244, 7
      %s4248 = scalar_select %p4247, %s4244, 7
      %s4249 = smul.addr %s4246, 8
      %s4250 = sadd.s32 %s4248, %s4249
      %s4251 = smul.addr %s4250, 8
      %s4252 = scalar_lea.vmem %s3, %s4251
      %p4253 = scmp.lt.s32.totalorder %s20, 1
      %s4254 = scalar_select %p4253, %s20, 1
      %p4255 = scmp.lt.s32.totalorder %s21, 3
      %s4256 = scalar_select %p4255, %s21, 3
      %s4257 = smul.addr %s4254, 4
      %s4258 = sadd.s32 %s4256, %s4257
      %s4259 = smul.addr %s4258, 2
      %s4260 = scalar_lea.vmem %s4, %s4259
      // Predicated region
      $region33: #{upsampling_block.2} parent=31 // pred_check
        %p4261 = pneg %p118
      $region34: #{upsampling_block.2} parent=31 // pred_check_branch
        %4263 = sbr.rel (%p4261) target = $region36
      $region35: #{upsampling_block.2} parent=31 // pred_region
        %s4264 = smul.u32 2, %s21
      $region36: #{upsampling_block.2} parent=31 // pred_fallthru
        _
      // Predicated region
      $region37: #{upsampling_block.2} parent=31 // pred_check
        %p4265 = pneg %p146
      $region38: #{upsampling_block.2} parent=31 // pred_check_branch
        %4267 = sbr.rel (%p4265) target = $region40
      $region39: #{upsampling_block.2} parent=31 // pred_region
        _
      $region40: #{upsampling_block.2} parent=31 // pred_fallthru
        _
    $region32: #{upsampling_block.2} parent=5 // pred_fallthru
      _
    %p4268 = scmp.le.s32.totalorder 2, %s11
    // Predicated region
    $region41: #{upsampling_block.2} parent=5 // pred_check
      %p4269 = pneg %p4268
    $region42: #{upsampling_block.2} parent=5 // pred_check_branch
      %4271 = sbr.rel (%p4269) target = $region44
    $region43: #{upsampling_block.2} parent=5 // pred_region
      %s4272 = ssub.s32 %s11, 2
      // Predicated region
      $region45: #{upsampling_block.2} parent=43 // pred_check
        %p4273 = pneg %p124
      $region46: #{upsampling_block.2} parent=43 // pred_check_branch
        %4275 = sbr.rel (%p4273) target = $region48
      $region47: #{upsampling_block.2} parent=43 // pred_region
        %s4276 = smul.u32 2, %s23
        %p4277 = scmp.lt.s32.totalorder %s22, 1
        %s4278 = scalar_select %p4277, %s22, 1
        %p4279 = scmp.lt.s32.totalorder %s4276, 7
        %s4280 = scalar_select %p4279, %s4276, 7
        %s4281 = smul.addr %s4278, 8
        %s4282 = sadd.s32 %s4280, %s4281
        %s4283 = smul.addr %s4282, 8
        %s4284 = scalar_lea.vmem %s3, %s4283
      $region48: #{upsampling_block.2} parent=43 // pred_fallthru
        _
      // Predicated region
      $region49: #{upsampling_block.2} parent=43 // pred_check
        %p4285 = pneg %p152
      $region50: #{upsampling_block.2} parent=43 // pred_check_branch
        %4287 = sbr.rel (%p4285) target = $region52
      $region51: #{upsampling_block.2} parent=43 // pred_region
        %p4288 = scmp.lt.s32.totalorder %s22, 1
        %s4289 = scalar_select %p4288, %s22, 1
        %p4290 = scmp.lt.s32.totalorder %s23, 3
        %s4291 = scalar_select %p4290, %s23, 3
        %s4292 = smul.addr %s4289, 4
        %s4293 = sadd.s32 %s4291, %s4292
        %s4294 = smul.addr %s4293, 2
        %s4295 = scalar_lea.vmem %s4, %s4294
      $region52: #{upsampling_block.2} parent=43 // pred_fallthru
        _
    $region44: #{upsampling_block.2} parent=5 // pred_fallthru
      _
  $region6: #{upsampling_block.2} parent=0 // loop_footer
    %s15 = sadd.s32 1, %s11
  $region7: #{upsampling_block.2} parent=0 // loop_footer_branch
    %10 = sbr.rel target = $region3
  $region8: #{upsampling_block.2} parent=0 // loop_exit
    _

</llo_original>
